<compile_context>
chip_gen: v7x
topology: tpu7x:2x2x1
jax: 0.10.0
libtpu: 0.0.40
codegen_flags: <defaults>
</compile_context>

<pallas_src>
import jax
import jax.numpy as jnp
from jax import lax
from jax.experimental import pallas as pl
from jax.experimental.pallas import tpu as pltpu

EPS = 1e-5


# ----------------------------- packing helpers ------------------------------

def _pick_npack(n, s):
    """How many batch samples to pack onto the lane axis (target >=128 lanes)."""
    if s >= 128:
        return 1
    npack = min(n, max(1, -(-128 // s)))
    while n % npack:
        npack -= 1
    return npack


def _pack_lanes(p, npack):
    """(N, R, S) -> (N//npack, R, npack*S), samples contiguous on lanes."""
    if npack == 1:
        return p
    n, r, s = p.shape
    return (p.reshape(n // npack, npack, r, s)
             .transpose(0, 2, 1, 3)
             .reshape(n // npack, r, npack * s))


def _unpack_lanes(o, npack, s):
    """Inverse of _pack_lanes."""
    if npack == 1:
        return o
    g, r, _ = o.shape
    return (o.reshape(g, r, npack, s)
             .transpose(0, 2, 1, 3)
             .reshape(g * npack, r, s))


# --------------------------------- im2col -----------------------------------

def _im2col(x, k, stride, pad):
    """x [N,C,H,W] -> (P [N, k*k*C, Ho*Wo], Ho, Wo); K index = tap*C + c."""
    n, c, h, w = x.shape
    if pad:
        x = jnp.pad(x, ((0, 0), (0, 0), (pad, pad), (pad, pad)))
    ho = (h + 2 * pad - k) // stride + 1
    wo = (w + 2 * pad - k) // stride + 1
    taps = [x[:, :,
              i:i + stride * (ho - 1) + 1:stride,
              j:j + stride * (wo - 1) + 1:stride]
            for i in range(k) for j in range(k)]
    p = jnp.stack(taps, axis=1)                 # [N, k*k, C, Ho, Wo]
    return p.reshape(n, k * k * c, ho * wo), ho, wo


def _im2col_tap2(x):
    """4-tap (2x2) patches for the sub-pixel ConvTranspose: [N, 4*C, H*W]."""
    n, c, h, w = x.shape
    xp = jnp.pad(x, ((0, 0), (0, 0), (0, 1), (0, 1)))
    taps = [xp[:, :, dy:dy + h, dx:dx + w] for dy in (0, 1) for dx in (0, 1)]
    p = jnp.stack(taps, axis=1)                 # [N, 4, C, H, W]
    return p.reshape(n, 4 * c, h * w)


# ------------------------- weight matrix construction -----------------------

def _wmat_conv(w):
    """w [Cout,Cin,k,k] -> (Cout, k*k*Cin); column = (i*k+j)*Cin + ci."""
    cout, cin, k, _ = w.shape
    return w.transpose(0, 2, 3, 1).reshape(cout, k * k * cin)


def _embed_center(mat, cin, k):
    """(Cout, Cin) matrix placed at the centre-tap columns of (Cout, k*k*Cin)."""
    cout = mat.shape[0]
    z = jnp.zeros((cout, k * k, cin), mat.dtype)
    z = z.at[:, (k // 2) * k + (k // 2), :].set(mat)
    return z.reshape(cout, k * k * cin)


def _residual_unit_mats(prm, cin, k=3):
    """Stack main conv + residual branch into one (2*Cout, k*k*Cin) matrix."""
    w = prm['w']
    cout = w.shape[0]
    wm = _wmat_conv(w)
    if 'rw' in prm:
        rw = prm['rw']
        if rw.shape[-1] == k:                              # 3x3 strided residual
            rm = _wmat_conv(rw)
        else:                                              # 1x1 residual conv
            rm = _embed_center(rw.reshape(cout, cin), cin, k)
        rb = prm['rb']
    else:                                                  # identity residual
        rm = _embed_center(jnp.eye(cout, cin, dtype=w.dtype), cin, k)
        rb = jnp.zeros((cout,), w.dtype)
    wmat = jnp.concatenate([wm, rm], axis=0)               # (2*Cout, kdim)
    bcol = jnp.concatenate([prm['b'], rb]).reshape(2 * cout, 1)
    return wmat, bcol, cout


def _phase_weights(w):
    """ConvTranspose2d weight (Cin,Cout,3,3) -> stacked 4-phase (4*Cout, 4*Cin).

    Row blocks ordered by output phase (py,px) in [(0,0),(0,1),(1,0),(1,1)];
    column index = (dy*2+dx)*Cin + ci for input tap x[m+dy, n+dx]."""
    cin, cout = w.shape[0], w.shape[1]

    def kk(p, d):                      # kernel index for phase p, tap offset d
        return 1 if p == 0 else (2 if d == 0 else 0)

    blocks = []
    for py in (0, 1):
        for px in (0, 1):
            wp = jnp.zeros((cout, 4, cin), w.dtype)
            for dy in (0, 1):
                if py == 0 and dy == 1:
                    continue
                for dx in (0, 1):
                    if px == 0 and dx == 1:
                        continue
                    wp = wp.at[:, dy * 2 + dx, :].set(
                        w[:, :, kk(py, dy), kk(px, dx)].T)
            blocks.append(wp.reshape(cout, 4 * cin))
    return jnp.concatenate(blocks, axis=0)


# ------------------------------ fused kernels -------------------------------

def _inorm_prelu_segments(x, alpha, npack, s):
    """Per-lane-segment (= per sample) InstanceNorm + PReLU on (rows, npack*s)."""
    segs = []
    for t in range(npack):
        seg = x[:, t * s:(t + 1) * s]
        mu = jnp.mean(seg, axis=-1, keepdims=True)
        d = seg - mu
        var = jnp.mean(d * d, axis=-1, keepdims=True)
        y = d * lax.rsqrt(var + EPS)
        segs.append(jnp.where(y > 0.0, y, alpha * y))
    return segs[0] if npack == 1 else jnp.concatenate(segs, axis=-1)


def _make_unit_kernel(cout, npack, s, fuse_norm_act, has_residual):
    """Fused Conv (+IN+PReLU) (+residual) unit: one stacked MXU matmul."""
    def kernel(*refs):
        if fuse_norm_act:
            p_ref, w_ref, b_ref, a_ref, o_ref = refs
        else:
            p_ref, w_ref, b_ref, o_ref = refs
        p = p_ref[0]                                       # (kdim, L) bf16
        acc = jnp.dot(w_ref[...], p,
                      preferred_element_type=jnp.float32) + b_ref[...]
        main = acc[:cout, :]
        if fuse_norm_act:
            main = _inorm_prelu_segments(main, a_ref[0, 0], npack, s)
        if has_residual:
            main = main + acc[cout:2 * cout, :]
        o_ref[0, :, :] = main.astype(o_ref.dtype)
    return kernel


def _make_convt_kernel(cout, npack, s):
    """Fused 4-phase ConvTranspose + InstanceNorm (pooled over phases) + PReLU."""
    def kernel(p_ref, w_ref, b_ref, a_ref, o_ref):
        p = p_ref[0]                                       # (4*Cin, L) bf16
        acc = jnp.dot(w_ref[...], p,
                      preferred_element_type=jnp.float32) + b_ref[...]
        a = a_ref[0, 0]
        segs = []
        for t in range(npack):
            seg = acc[:, t * s:(t + 1) * s]                # (4*Cout, s)
            rm = jnp.mean(seg, axis=-1, keepdims=True)
            cm = (rm[0:cout] + rm[cout:2 * cout]
                  + rm[2 * cout:3 * cout] + rm[3 * cout:4 * cout]) * 0.25
            mu = jnp.concatenate([cm, cm, cm, cm], axis=0)
            d = seg - mu
            rv = jnp.mean(d * d, axis=-1, keepdims=True)
            cv = (rv[0:cout] + rv[cout:2 * cout]
                  + rv[2 * cout:3 * cout] + rv[3 * cout:4 * cout]) * 0.25
            var = jnp.concatenate([cv, cv, cv, cv], axis=0)
            y = d * lax.rsqrt(var + EPS)
            segs.append(jnp.where(y > 0.0, y, a * y))
        out = segs[0] if npack == 1 else jnp.concatenate(segs, axis=-1)
        o_ref[0, :, :] = out.astype(o_ref.dtype)
    return kernel


# ------------------------------ layer wrappers -------------------------------

def fused_unit(x, wmat, bcol, cout, k, stride, *, alpha=None,
               out_dtype=jnp.bfloat16):
    """One ResidualUnit (or bare conv) as a single pallas_call."""
    n = x.shape[0]
    pad = (k - 1) // 2
    p, ho, wo = _im2col(x.astype(jnp.bfloat16), k, stride, pad)
    s = ho * wo
    npack = _pick_npack(n, s)
    pp = _pack_lanes(p, npack)                             # (G, kdim, L)
    g, kdim, L = pp.shape
    rows = wmat.shape[0]
    has_residual = rows == 2 * cout
    fuse_norm_act = alpha is not None

    inputs = [pp, wmat.astype(jnp.bfloat16), bcol.astype(jnp.float32)]
    in_specs = [
        pl.BlockSpec((1, kdim, L), lambda i: (i, 0, 0)),
        pl.BlockSpec((rows, kdim), lambda i: (0, 0)),      # grid-invariant
        pl.BlockSpec((rows, 1), lambda i: (0, 0)),
    ]
    if fuse_norm_act:
        inputs.append(jnp.asarray(alpha, jnp.float32).reshape(1, 1))
        in_specs.append(pl.BlockSpec(memory_space=pltpu.MemorySpace.SMEM))

    flops = 2 * g * rows * kdim * L + (8 * g * cout * L if fuse_norm_act else 0)
    bytes_accessed = int(pp.size * 2 + rows * kdim * 2 + rows * 4
                         + g * cout * L * jnp.dtype(out_dtype).itemsize)

    out = pl.pallas_call(
        _make_unit_kernel(cout, npack, s, fuse_norm_act, has_residual),
        out_shape=jax.ShapeDtypeStruct((g, cout, L), out_dtype),
        grid=(g,),
        in_specs=in_specs,
        out_specs=pl.BlockSpec((1, cout, L), lambda i: (i, 0, 0)),
        compiler_params=pltpu.CompilerParams(
            dimension_semantics=("parallel",)),
        cost_estimate=pl.CostEstimate(flops=flops, transcendentals=0,
                                      bytes_accessed=bytes_accessed),
    )(*inputs)

    out = _unpack_lanes(out, npack, s)                     # (N, Cout, S)
    return out.reshape(n, cout, ho, wo)


def residual_unit(x, prm, stride, *, last_conv_only=False,
                  out_dtype=jnp.bfloat16):
    """MONAI ResidualUnit (subunits=1) as ONE fused pallas_call."""
    cin = x.shape[1]
    wmat, bcol, cout = _residual_unit_mats(prm, cin)
    alpha = None if last_conv_only else prm['alpha']
    return fused_unit(x, wmat, bcol, cout, 3, stride, alpha=alpha,
                      out_dtype=out_dtype)


def conv_transpose_fused(x, w, b, alpha, *, out_dtype=jnp.bfloat16):
    """ConvTranspose2d(stride=2, padding=1, output_padding=1), w [Cin,Cout,3,3],
    via sub-pixel (4-phase) decomposition fused with InstanceNorm + PReLU."""
    n, cin, h, wd = x.shape
    cout = w.shape[1]
    p = _im2col_tap2(x.astype(jnp.bfloat16))               # (N, 4*Cin, H*W)
    s = h * wd
    npack = _pick_npack(n, s)
    pp = _pack_lanes(p, npack)
    g, kdim, L = pp.shape

    wmat = _phase_weights(w).astype(jnp.bfloat16)          # (4*Cout, 4*Cin)
    bcol = jnp.tile(jnp.asarray(b, jnp.float32).reshape(cout, 1), (4, 1))

    flops = 2 * g * 4 * cout * kdim * L
    bytes_accessed = int(pp.size * 2 + 4 * cout * kdim * 2 + 4 * cout * 4
                         + g * 4 * cout * L * 2)

    out = pl.pallas_call(
        _make_convt_kernel(cout, npack, s),
        out_shape=jax.ShapeDtypeStruct((g, 4 * cout, L), out_dtype),
        grid=(g,),
        in_specs=[
            pl.BlockSpec((1, kdim, L), lambda i: (i, 0, 0)),
            pl.BlockSpec((4 * cout, kdim), lambda i: (0, 0)),
            pl.BlockSpec((4 * cout, 1), lambda i: (0, 0)),
            pl.BlockSpec(memory_space=pltpu.MemorySpace.SMEM),
        ],
        out_specs=pl.BlockSpec((1, 4 * cout, L), lambda i: (i, 0, 0)),
        compiler_params=pltpu.CompilerParams(
            dimension_semantics=("parallel",)),
        cost_estimate=pl.CostEstimate(flops=flops, transcendentals=0,
                                      bytes_accessed=bytes_accessed),
    )(pp, wmat, bcol, jnp.asarray(alpha, jnp.float32).reshape(1, 1))

    out = _unpack_lanes(out, npack, s)                     # (N, 4*Cout, H*W)
    # depth-to-space: rows are phase-major [(0,0),(0,1),(1,0),(1,1)]
    out = out.reshape(n, 2, 2, cout, h, wd).transpose(0, 3, 4, 1, 5, 2)
    return out.reshape(n, cout, 2 * h, 2 * wd)


def up_block(x, prm, is_top):
    """MONAI up layer: ConvTranspose(+IN+PReLU) then ResidualUnit(stride=1)."""
    y = conv_transpose_fused(x, prm['tw'], prm['tb'], prm['talpha'])
    return residual_unit(y, prm['ru'], 1, last_conv_only=is_top,
                         out_dtype=jnp.float32 if is_top else jnp.bfloat16)


def unet_forward(params, x):
    d0 = residual_unit(x, params['down0'], 2)        # [N, 8,  H/2, W/2] bf16
    d1 = residual_unit(d0, params['down1'], 2)       # [N, 16, H/4, W/4] bf16
    bt = residual_unit(d1, params['bottom'], 1)      # [N, 32, H/4, W/4] bf16
    c1 = jnp.concatenate([d1, bt], axis=1)           # [N, 48, H/4, W/4]
    u1 = up_block(c1, params['up1'], is_top=False)   # [N, 8,  H/2, W/2] bf16
    c0 = jnp.concatenate([d0, u1], axis=1)           # [N, 16, H/2, W/2]
    u0 = up_block(c0, params['up0'], is_top=True)    # [N, 2,  H,   W]   f32
    return u0


# --------------------------- pure-JAX reference -----------------------------
# Mirrors the Pallas path's bf16 operand casts and bf16 intermediate storage.

def _conv_ref(x, w, b, stride, pad):
    y = lax.conv_general_dilated(
        x.astype(jnp.bfloat16), w.astype(jnp.bfloat16),
        window_strides=(stride, stride), padding=((pad, pad), (pad, pad)),
        dimension_numbers=('NCHW', 'OIHW', 'NCHW'),
        preferred_element_type=jnp.float32)
    return y + b[None, :, None, None]


def _convt_ref(x, w, b):
    w_eq = jnp.flip(w, axis=(2, 3)).transpose(1, 0, 2, 3)
    y = lax.conv_general_dilated(
        x.astype(jnp.bfloat16), w_eq.astype(jnp.bfloat16),
        window_strides=(1, 1), padding=((1, 2), (1, 2)), lhs_dilation=(2, 2),
        dimension_numbers=('NCHW', 'OIHW', 'NCHW'),
        preferred_element_type=jnp.float32)
    return y + b[None, :, None, None]


def _inorm_prelu_ref(x, alpha):
    mean = jnp.mean(x, axis=(2, 3), keepdims=True)
    var = jnp.mean((x - mean) ** 2, axis=(2, 3), keepdims=True)
    y = (x - mean) * lax.rsqrt(var + EPS)
    return jnp.where(y > 0, y, alpha * y)


def _residual_unit_ref(x, prm, stride, last_conv_only=False,
                       out_dtype=jnp.bfloat16):
    cx = _conv_ref(x, prm['w'], prm['b'], stride, 1)
    if not last_conv_only:
        cx = _inorm_prelu_ref(cx, prm['alpha'])
    if 'rw' in prm:
        rk = prm['rw'].shape[-1]
        res = _conv_ref(x, prm['rw'], prm['rb'], stride, (rk - 1) // 2)
    else:
        res = x.astype(jnp.bfloat16).astype(jnp.float32)
    return (cx + res).astype(out_dtype)


def _up_block_ref(x, prm, is_top):
    y = _inorm_prelu_ref(_convt_ref(x, prm['tw'], prm['tb']),
                         prm['talpha']).astype(jnp.bfloat16)
    return _residual_unit_ref(y, prm['ru'], 1, last_conv_only=is_top,
                              out_dtype=jnp.float32 if is_top else jnp.bfloat16)


def unet_forward_ref(params, x):
    d0 = _residual_unit_ref(x, params['down0'], 2)
    d1 = _residual_unit_ref(d0, params['down1'], 2)
    bt = _residual_unit_ref(d1, params['bottom'], 1)
    u1 = _up_block_ref(jnp.concatenate([d1, bt], axis=1), params['up1'], False)
    u0 = _up_block_ref(jnp.concatenate([d0, u1], axis=1), params['up0'], True)
    return u0


# ------------------------------- parameters --------------------------------

def init_params(key):
    keys = iter(jax.random.split(key, 32))

    def nrm(shape, s=0.1):
        return s * jax.random.normal(next(keys), shape, jnp.float32)

    prelu0 = 0.25  # nn.PReLU() default init
    return {
        # ResidualUnit(4 -> 8, stride 2): conv3x3 + IN + PReLU, residual conv3x3
        'down0': dict(w=nrm((8, 4, 3, 3)), b=nrm((8,)), alpha=prelu0,
                      rw=nrm((8, 4, 3, 3)), rb=nrm((8,))),
        # ResidualUnit(8 -> 16, stride 2)
        'down1': dict(w=nrm((16, 8, 3, 3)), b=nrm((16,)), alpha=prelu0,
                      rw=nrm((16, 8, 3, 3)), rb=nrm((16,))),
        # bottom ResidualUnit(16 -> 32, stride 1): residual is a 1x1 conv
        'bottom': dict(w=nrm((32, 16, 3, 3)), b=nrm((32,)), alpha=prelu0,
                       rw=nrm((32, 16, 1, 1)), rb=nrm((32,))),
        # up layer (not top): ConvTranspose(48 -> 8) + IN + PReLU, then
        # ResidualUnit(8 -> 8, stride 1) with conv+IN+PReLU, identity residual
        'up1': dict(tw=nrm((48, 8, 3, 3)), tb=nrm((8,)), talpha=prelu0,
                    ru=dict(w=nrm((8, 8, 3, 3)), b=nrm((8,)), alpha=prelu0)),
        # top up layer: ConvTranspose(16 -> 2) + IN + PReLU, then
        # ResidualUnit(2 -> 2) with last_conv_only=True (bare conv + identity)
        'up0': dict(tw=nrm((16, 2, 3, 3)), tb=nrm((2,)), talpha=prelu0,
                    ru=dict(w=nrm((2, 2, 3, 3)), b=nrm((2,)))),
    }


# ---------------------------------- main ------------------------------------

if __name__ == "__main__":
    key = jax.random.PRNGKey(0)
    kx, kp = jax.random.split(key)
    x = jax.random.normal(kx, (2, 4, 16, 16), jnp.float32)   # NCHW
    params = init_params(kp)

    fwd = jax.jit(unet_forward)
    out = jax.block_until_ready(fwd(params, x))

    assert out.shape == (2, 2, 16, 16), out.shape
    assert out.dtype == jnp.float32
    assert bool(jnp.all(jnp.isfinite(out)))

    # full-network check against a pure-JAX (XLA) reference
    ref = jax.block_until_ready(jax.jit(unet_forward_ref)(params, x))
    err = float(jnp.max(jnp.abs(out - ref)))
    assert err < 5e-2, f"mismatch vs pure-JAX reference: max abs err = {err}"

    print("KERNEL_OK")
</pallas_src>

<mosaic_0001>
module attributes {stable_mosaic.version = 11 : i64} {
  func.func @kernel(%arg0: i32, %arg1: memref<1x36x128xbf16, #tpu.memory_space<vmem>>, %arg2: memref<16x36xbf16, #tpu.memory_space<vmem>>, %arg3: memref<16x1xf32, #tpu.memory_space<vmem>>, %arg4: memref<1x1xf32, #tpu.memory_space<smem>>, %arg5: memref<1x8x128xbf16, #tpu.memory_space<vmem>>) attributes {dimension_semantics = [#tpu.dimension_semantics<parallel>], iteration_bounds = array<i64: 1>, scalar_prefetch = 0 : i64, scratch_operands = 0 : i64, tpu.core_type = #tpu.core_type<tc>, window_params = [{transform_indices = @transform_0, window_bounds = array<i64: 1, 36, 128>}, {pipeline_mode = #tpu.pipeline_mode<synchronous>, transform_indices = @transform_1, window_bounds = array<i64: 16, 36>}, {pipeline_mode = #tpu.pipeline_mode<synchronous>, transform_indices = @transform_2, window_bounds = array<i64: 16, 1>}, {transform_indices = @transform_3, window_bounds = array<i64: 1, 1>}, {transform_indices = @transform_4, window_bounds = array<i64: 1, 8, 128>}]} {
    %c0 = arith.constant 0 : index
    %c0_0 = arith.constant 0 : index
    %c0_1 = arith.constant 0 : index
    %0 = vector.load %arg1[%c0, %c0_0, %c0_1] : memref<1x36x128xbf16, #tpu.memory_space<vmem>>, vector<1x36x128xbf16>
    %1 = vector.shape_cast %0 : vector<1x36x128xbf16> to vector<36x128xbf16>
    %c0_2 = arith.constant 0 : index
    %c0_3 = arith.constant 0 : index
    %2 = vector.load %arg2[%c0_2, %c0_3] : memref<16x36xbf16, #tpu.memory_space<vmem>>, vector<16x36xbf16>
    %cst = arith.constant dense<0.000000e+00> : vector<16x128xf32>
    %3 = tpu.matmul %2, %1, %cst {dimension_numbers = #tpu.dot_dimension_numbers<[1], [0], [0], [1], [0, 0, 1, 1], [], []>} : vector<16x36xbf16>, vector<36x128xbf16>, vector<16x128xf32> -> vector<16x128xf32>
    %c0_4 = arith.constant 0 : index
    %c0_5 = arith.constant 0 : index
    %4 = vector.load %arg3[%c0_4, %c0_5] : memref<16x1xf32, #tpu.memory_space<vmem>>, vector<16x1xf32>
    %5 = vector.broadcast %4 : vector<16x1xf32> to vector<16x128xf32>
    %6 = arith.addf %3, %5 : vector<16x128xf32>
    %7 = vector.extract_strided_slice %6 {offsets = [0, 0], sizes = [8, 128], strides = [1, 1]} : vector<16x128xf32> to vector<8x128xf32>
    %c0_6 = arith.constant 0 : index
    %c0_7 = arith.constant 0 : index
    %8 = memref.load %arg4[%c0_6, %c0_7] : memref<1x1xf32, #tpu.memory_space<smem>>
    %9 = vector.extract_strided_slice %7 {offsets = [0, 0], sizes = [8, 64], strides = [1, 1]} : vector<8x128xf32> to vector<8x64xf32>
    %cst_8 = arith.constant dense<0.000000e+00> : vector<8xf32>
    %10 = vector.multi_reduction <add>, %9, %cst_8 [1] : vector<8x64xf32> to vector<8xf32>
    %11 = vector.shape_cast %10 : vector<8xf32> to vector<8x1xf32>
    %cst_9 = arith.constant 6.400000e+01 : f32
    %12 = vector.broadcast %cst_9 : f32 to vector<8x1xf32>
    %13 = arith.divf %11, %12 : vector<8x1xf32>
    %14 = vector.broadcast %13 : vector<8x1xf32> to vector<8x64xf32>
    %15 = arith.subf %9, %14 : vector<8x64xf32>
    %16 = arith.mulf %15, %15 : vector<8x64xf32>
    %cst_10 = arith.constant dense<0.000000e+00> : vector<8xf32>
    %17 = vector.multi_reduction <add>, %16, %cst_10 [1] : vector<8x64xf32> to vector<8xf32>
    %18 = vector.shape_cast %17 : vector<8xf32> to vector<8x1xf32>
    %cst_11 = arith.constant 6.400000e+01 : f32
    %19 = vector.broadcast %cst_11 : f32 to vector<8x1xf32>
    %20 = arith.divf %18, %19 : vector<8x1xf32>
    %cst_12 = arith.constant 9.99999974E-6 : f32
    %21 = vector.broadcast %cst_12 : f32 to vector<8x1xf32>
    %22 = arith.addf %20, %21 : vector<8x1xf32>
    %23 = math.rsqrt %22 : vector<8x1xf32>
    %24 = vector.broadcast %23 : vector<8x1xf32> to vector<8x64xf32>
    %25 = arith.mulf %15, %24 : vector<8x64xf32>
    %cst_13 = arith.constant 0.000000e+00 : f32
    %26 = vector.broadcast %cst_13 : f32 to vector<8x64xf32>
    %27 = arith.cmpf ogt, %25, %26 : vector<8x64xf32>
    %28 = vector.broadcast %8 : f32 to vector<8x64xf32>
    %29 = arith.mulf %28, %25 : vector<8x64xf32>
    %30 = arith.select %27, %25, %29 : vector<8x64xi1>, vector<8x64xf32>
    %31 = vector.extract_strided_slice %7 {offsets = [0, 64], sizes = [8, 64], strides = [1, 1]} : vector<8x128xf32> to vector<8x64xf32>
    %cst_14 = arith.constant dense<0.000000e+00> : vector<8xf32>
    %32 = vector.multi_reduction <add>, %31, %cst_14 [1] : vector<8x64xf32> to vector<8xf32>
    %33 = vector.shape_cast %32 : vector<8xf32> to vector<8x1xf32>
    %cst_15 = arith.constant 6.400000e+01 : f32
    %34 = vector.broadcast %cst_15 : f32 to vector<8x1xf32>
    %35 = arith.divf %33, %34 : vector<8x1xf32>
    %36 = vector.broadcast %35 : vector<8x1xf32> to vector<8x64xf32>
    %37 = arith.subf %31, %36 : vector<8x64xf32>
    %38 = arith.mulf %37, %37 : vector<8x64xf32>
    %cst_16 = arith.constant dense<0.000000e+00> : vector<8xf32>
    %39 = vector.multi_reduction <add>, %38, %cst_16 [1] : vector<8x64xf32> to vector<8xf32>
    %40 = vector.shape_cast %39 : vector<8xf32> to vector<8x1xf32>
    %cst_17 = arith.constant 6.400000e+01 : f32
    %41 = vector.broadcast %cst_17 : f32 to vector<8x1xf32>
    %42 = arith.divf %40, %41 : vector<8x1xf32>
    %cst_18 = arith.constant 9.99999974E-6 : f32
    %43 = vector.broadcast %cst_18 : f32 to vector<8x1xf32>
    %44 = arith.addf %42, %43 : vector<8x1xf32>
    %45 = math.rsqrt %44 : vector<8x1xf32>
    %46 = vector.broadcast %45 : vector<8x1xf32> to vector<8x64xf32>
    %47 = arith.mulf %37, %46 : vector<8x64xf32>
    %cst_19 = arith.constant 0.000000e+00 : f32
    %48 = vector.broadcast %cst_19 : f32 to vector<8x64xf32>
    %49 = arith.cmpf ogt, %47, %48 : vector<8x64xf32>
    %50 = vector.broadcast %8 : f32 to vector<8x64xf32>
    %51 = arith.mulf %50, %47 : vector<8x64xf32>
    %52 = arith.select %49, %47, %51 : vector<8x64xi1>, vector<8x64xf32>
    %53 = tpu.concatenate %30, %52 in 1 : vector<8x64xf32>, vector<8x64xf32> -> vector<8x128xf32>
    %54 = vector.extract_strided_slice %6 {offsets = [8, 0], sizes = [8, 128], strides = [1, 1]} : vector<16x128xf32> to vector<8x128xf32>
    %55 = arith.addf %53, %54 : vector<8x128xf32>
    %56 = arith.truncf %55 : vector<8x128xf32> to vector<8x128xbf16>
    %c0_20 = arith.constant 0 : index
    %c0_21 = arith.constant 0 : index
    %c0_22 = arith.constant 0 : index
    %57 = vector.load %arg5[%c0_20, %c0_21, %c0_22] : memref<1x8x128xbf16, #tpu.memory_space<vmem>>, vector<1x8x128xbf16>
    %58 = vector.shape_cast %57 : vector<1x8x128xbf16> to vector<8x128xbf16>
    %59 = vector.shape_cast %56 : vector<8x128xbf16> to vector<1x8x128xbf16>
    tpu.vector_store %arg5[%c0_20, %c0_21, %c0_22], %59 {strides = array<i32>} : memref<1x8x128xbf16, #tpu.memory_space<vmem>>, vector<1x8x128xbf16>,
    return
  }
  func.func @transform_0(%arg0: i32) -> (i32, i32, i32) {
    %c0_i32 = arith.constant 0 : i32
    %c0_i32_0 = arith.constant 0 : i32
    %c0_i32_1 = arith.constant 0 : i32
    return %arg0, %c0_i32, %c0_i32_0 : i32, i32, i32
  }
  func.func @transform_1(%arg0: i32) -> (i32, i32) {
    %c0_i32 = arith.constant 0 : i32
    %c0_i32_0 = arith.constant 0 : i32
    %c0_i32_1 = arith.constant 0 : i32
    return %c0_i32, %c0_i32_0 : i32, i32
  }
  func.func @transform_2(%arg0: i32) -> (i32, i32) {
    %c0_i32 = arith.constant 0 : i32
    %c0_i32_0 = arith.constant 0 : i32
    %c0_i32_1 = arith.constant 0 : i32
    return %c0_i32, %c0_i32_0 : i32, i32
  }
  func.func @transform_3(%arg0: i32) -> (i32, i32) {
    %c0_i32 = arith.constant 0 : i32
    %c0_i32_0 = arith.constant 0 : i32
    %c0_i32_1 = arith.constant 0 : i32
    return %c0_i32, %c0_i32_0 : i32, i32
  }
  func.func @transform_4(%arg0: i32) -> (i32, i32, i32) {
    %c0_i32 = arith.constant 0 : i32
    %c0_i32_0 = arith.constant 0 : i32
    %c0_i32_1 = arith.constant 0 : i32
    return %arg0, %c0_i32, %c0_i32_0 : i32, i32, i32
  }
}

module attributes {stable_mosaic.version = 11 : i64} {
  func.func @kernel(%arg0: i32, %arg1: memref<1x72x32xbf16, #tpu.memory_space<vmem>>, %arg2: memref<32x72xbf16, #tpu.memory_space<vmem>>, %arg3: memref<32x1xf32, #tpu.memory_space<vmem>>, %arg4: memref<1x1xf32, #tpu.memory_space<smem>>, %arg5: memref<1x16x32xbf16, #tpu.memory_space<vmem>>) attributes {dimension_semantics = [#tpu.dimension_semantics<parallel>], iteration_bounds = array<i64: 1>, scalar_prefetch = 0 : i64, scratch_operands = 0 : i64, tpu.core_type = #tpu.core_type<tc>, window_params = [{transform_indices = @transform_0, window_bounds = array<i64: 1, 72, 32>}, {pipeline_mode = #tpu.pipeline_mode<synchronous>, transform_indices = @transform_1, window_bounds = array<i64: 32, 72>}, {pipeline_mode = #tpu.pipeline_mode<synchronous>, transform_indices = @transform_2, window_bounds = array<i64: 32, 1>}, {transform_indices = @transform_3, window_bounds = array<i64: 1, 1>}, {transform_indices = @transform_4, window_bounds = array<i64: 1, 16, 32>}]} {
    %c0 = arith.constant 0 : index
    %c0_0 = arith.constant 0 : index
    %c0_1 = arith.constant 0 : index
    %0 = vector.load %arg1[%c0, %c0_0, %c0_1] : memref<1x72x32xbf16, #tpu.memory_space<vmem>>, vector<1x72x32xbf16>
    %1 = vector.shape_cast %0 : vector<1x72x32xbf16> to vector<72x32xbf16>
    %c0_2 = arith.constant 0 : index
    %c0_3 = arith.constant 0 : index
    %2 = vector.load %arg2[%c0_2, %c0_3] : memref<32x72xbf16, #tpu.memory_space<vmem>>, vector<32x72xbf16>
    %cst = arith.constant dense<0.000000e+00> : vector<32x32xf32>
    %3 = tpu.matmul %2, %1, %cst {dimension_numbers = #tpu.dot_dimension_numbers<[1], [0], [0], [1], [0, 0, 1, 1], [], []>} : vector<32x72xbf16>, vector<72x32xbf16>, vector<32x32xf32> -> vector<32x32xf32>
    %c0_4 = arith.constant 0 : index
    %c0_5 = arith.constant 0 : index
    %4 = vector.load %arg3[%c0_4, %c0_5] : memref<32x1xf32, #tpu.memory_space<vmem>>, vector<32x1xf32>
    %5 = vector.broadcast %4 : vector<32x1xf32> to vector<32x32xf32>
    %6 = arith.addf %3, %5 : vector<32x32xf32>
    %7 = vector.extract_strided_slice %6 {offsets = [0, 0], sizes = [16, 32], strides = [1, 1]} : vector<32x32xf32> to vector<16x32xf32>
    %c0_6 = arith.constant 0 : index
    %c0_7 = arith.constant 0 : index
    %8 = memref.load %arg4[%c0_6, %c0_7] : memref<1x1xf32, #tpu.memory_space<smem>>
    %9 = vector.extract_strided_slice %7 {offsets = [0, 0], sizes = [16, 16], strides = [1, 1]} : vector<16x32xf32> to vector<16x16xf32>
    %cst_8 = arith.constant dense<0.000000e+00> : vector<16xf32>
    %10 = vector.multi_reduction <add>, %9, %cst_8 [1] : vector<16x16xf32> to vector<16xf32>
    %11 = vector.shape_cast %10 : vector<16xf32> to vector<16x1xf32>
    %cst_9 = arith.constant 1.600000e+01 : f32
    %12 = vector.broadcast %cst_9 : f32 to vector<16x1xf32>
    %13 = arith.divf %11, %12 : vector<16x1xf32>
    %14 = vector.broadcast %13 : vector<16x1xf32> to vector<16x16xf32>
    %15 = arith.subf %9, %14 : vector<16x16xf32>
    %16 = arith.mulf %15, %15 : vector<16x16xf32>
    %cst_10 = arith.constant dense<0.000000e+00> : vector<16xf32>
    %17 = vector.multi_reduction <add>, %16, %cst_10 [1] : vector<16x16xf32> to vector<16xf32>
    %18 = vector.shape_cast %17 : vector<16xf32> to vector<16x1xf32>
    %cst_11 = arith.constant 1.600000e+01 : f32
    %19 = vector.broadcast %cst_11 : f32 to vector<16x1xf32>
    %20 = arith.divf %18, %19 : vector<16x1xf32>
    %cst_12 = arith.constant 9.99999974E-6 : f32
    %21 = vector.broadcast %cst_12 : f32 to vector<16x1xf32>
    %22 = arith.addf %20, %21 : vector<16x1xf32>
    %23 = math.rsqrt %22 : vector<16x1xf32>
    %24 = vector.broadcast %23 : vector<16x1xf32> to vector<16x16xf32>
    %25 = arith.mulf %15, %24 : vector<16x16xf32>
    %cst_13 = arith.constant 0.000000e+00 : f32
    %26 = vector.broadcast %cst_13 : f32 to vector<16x16xf32>
    %27 = arith.cmpf ogt, %25, %26 : vector<16x16xf32>
    %28 = vector.broadcast %8 : f32 to vector<16x16xf32>
    %29 = arith.mulf %28, %25 : vector<16x16xf32>
    %30 = arith.select %27, %25, %29 : vector<16x16xi1>, vector<16x16xf32>
    %31 = vector.extract_strided_slice %7 {offsets = [0, 16], sizes = [16, 16], strides = [1, 1]} : vector<16x32xf32> to vector<16x16xf32>
    %cst_14 = arith.constant dense<0.000000e+00> : vector<16xf32>
    %32 = vector.multi_reduction <add>, %31, %cst_14 [1] : vector<16x16xf32> to vector<16xf32>
    %33 = vector.shape_cast %32 : vector<16xf32> to vector<16x1xf32>
    %cst_15 = arith.constant 1.600000e+01 : f32
    %34 = vector.broadcast %cst_15 : f32 to vector<16x1xf32>
    %35 = arith.divf %33, %34 : vector<16x1xf32>
    %36 = vector.broadcast %35 : vector<16x1xf32> to vector<16x16xf32>
    %37 = arith.subf %31, %36 : vector<16x16xf32>
    %38 = arith.mulf %37, %37 : vector<16x16xf32>
    %cst_16 = arith.constant dense<0.000000e+00> : vector<16xf32>
    %39 = vector.multi_reduction <add>, %38, %cst_16 [1] : vector<16x16xf32> to vector<16xf32>
    %40 = vector.shape_cast %39 : vector<16xf32> to vector<16x1xf32>
    %cst_17 = arith.constant 1.600000e+01 : f32
    %41 = vector.broadcast %cst_17 : f32 to vector<16x1xf32>
    %42 = arith.divf %40, %41 : vector<16x1xf32>
    %cst_18 = arith.constant 9.99999974E-6 : f32
    %43 = vector.broadcast %cst_18 : f32 to vector<16x1xf32>
    %44 = arith.addf %42, %43 : vector<16x1xf32>
    %45 = math.rsqrt %44 : vector<16x1xf32>
    %46 = vector.broadcast %45 : vector<16x1xf32> to vector<16x16xf32>
    %47 = arith.mulf %37, %46 : vector<16x16xf32>
    %cst_19 = arith.constant 0.000000e+00 : f32
    %48 = vector.broadcast %cst_19 : f32 to vector<16x16xf32>
    %49 = arith.cmpf ogt, %47, %48 : vector<16x16xf32>
    %50 = vector.broadcast %8 : f32 to vector<16x16xf32>
    %51 = arith.mulf %50, %47 : vector<16x16xf32>
    %52 = arith.select %49, %47, %51 : vector<16x16xi1>, vector<16x16xf32>
    %53 = tpu.concatenate %30, %52 in 1 : vector<16x16xf32>, vector<16x16xf32> -> vector<16x32xf32>
    %54 = vector.extract_strided_slice %6 {offsets = [16, 0], sizes = [16, 32], strides = [1, 1]} : vector<32x32xf32> to vector<16x32xf32>
    %55 = arith.addf %53, %54 : vector<16x32xf32>
    %56 = arith.truncf %55 : vector<16x32xf32> to vector<16x32xbf16>
    %c0_20 = arith.constant 0 : index
    %c0_21 = arith.constant 0 : index
    %c0_22 = arith.constant 0 : index
    %57 = vector.load %arg5[%c0_20, %c0_21, %c0_22] : memref<1x16x32xbf16, #tpu.memory_space<vmem>>, vector<1x16x32xbf16>
    %58 = vector.shape_cast %57 : vector<1x16x32xbf16> to vector<16x32xbf16>
    %59 = vector.shape_cast %56 : vector<16x32xbf16> to vector<1x16x32xbf16>
    tpu.vector_store %arg5[%c0_20, %c0_21, %c0_22], %59 {strides = array<i32>} : memref<1x16x32xbf16, #tpu.memory_space<vmem>>, vector<1x16x32xbf16>,
    return
  }
  func.func @transform_0(%arg0: i32) -> (i32, i32, i32) {
    %c0_i32 = arith.constant 0 : i32
    %c0_i32_0 = arith.constant 0 : i32
    %c0_i32_1 = arith.constant 0 : i32
    return %arg0, %c0_i32, %c0_i32_0 : i32, i32, i32
  }
  func.func @transform_1(%arg0: i32) -> (i32, i32) {
    %c0_i32 = arith.constant 0 : i32
    %c0_i32_0 = arith.constant 0 : i32
    %c0_i32_1 = arith.constant 0 : i32
    return %c0_i32, %c0_i32_0 : i32, i32
  }
  func.func @transform_2(%arg0: i32) -> (i32, i32) {
    %c0_i32 = arith.constant 0 : i32
    %c0_i32_0 = arith.constant 0 : i32
    %c0_i32_1 = arith.constant 0 : i32
    return %c0_i32, %c0_i32_0 : i32, i32
  }
  func.func @transform_3(%arg0: i32) -> (i32, i32) {
    %c0_i32 = arith.constant 0 : i32
    %c0_i32_0 = arith.constant 0 : i32
    %c0_i32_1 = arith.constant 0 : i32
    return %c0_i32, %c0_i32_0 : i32, i32
  }
  func.func @transform_4(%arg0: i32) -> (i32, i32, i32) {
    %c0_i32 = arith.constant 0 : i32
    %c0_i32_0 = arith.constant 0 : i32
    %c0_i32_1 = arith.constant 0 : i32
    return %arg0, %c0_i32, %c0_i32_0 : i32, i32, i32
  }
}

module attributes {stable_mosaic.version = 11 : i64} {
  func.func @kernel(%arg0: i32, %arg1: memref<1x144x32xbf16, #tpu.memory_space<vmem>>, %arg2: memref<64x144xbf16, #tpu.memory_space<vmem>>, %arg3: memref<64x1xf32, #tpu.memory_space<vmem>>, %arg4: memref<1x1xf32, #tpu.memory_space<smem>>, %arg5: memref<1x32x32xbf16, #tpu.memory_space<vmem>>) attributes {dimension_semantics = [#tpu.dimension_semantics<parallel>], iteration_bounds = array<i64: 1>, scalar_prefetch = 0 : i64, scratch_operands = 0 : i64, tpu.core_type = #tpu.core_type<tc>, window_params = [{transform_indices = @transform_0, window_bounds = array<i64: 1, 144, 32>}, {pipeline_mode = #tpu.pipeline_mode<synchronous>, transform_indices = @transform_1, window_bounds = array<i64: 64, 144>}, {pipeline_mode = #tpu.pipeline_mode<synchronous>, transform_indices = @transform_2, window_bounds = array<i64: 64, 1>}, {transform_indices = @transform_3, window_bounds = array<i64: 1, 1>}, {transform_indices = @transform_4, window_bounds = array<i64: 1, 32, 32>}]} {
    %c0 = arith.constant 0 : index
    %c0_0 = arith.constant 0 : index
    %c0_1 = arith.constant 0 : index
    %0 = vector.load %arg1[%c0, %c0_0, %c0_1] : memref<1x144x32xbf16, #tpu.memory_space<vmem>>, vector<1x144x32xbf16>
    %1 = vector.shape_cast %0 : vector<1x144x32xbf16> to vector<144x32xbf16>
    %c0_2 = arith.constant 0 : index
    %c0_3 = arith.constant 0 : index
    %2 = vector.load %arg2[%c0_2, %c0_3] : memref<64x144xbf16, #tpu.memory_space<vmem>>, vector<64x144xbf16>
    %cst = arith.constant dense<0.000000e+00> : vector<64x32xf32>
    %3 = tpu.matmul %2, %1, %cst {dimension_numbers = #tpu.dot_dimension_numbers<[1], [0], [0], [1], [0, 0, 1, 1], [], []>} : vector<64x144xbf16>, vector<144x32xbf16>, vector<64x32xf32> -> vector<64x32xf32>
    %c0_4 = arith.constant 0 : index
    %c0_5 = arith.constant 0 : index
    %4 = vector.load %arg3[%c0_4, %c0_5] : memref<64x1xf32, #tpu.memory_space<vmem>>, vector<64x1xf32>
    %5 = vector.broadcast %4 : vector<64x1xf32> to vector<64x32xf32>
    %6 = arith.addf %3, %5 : vector<64x32xf32>
    %7 = vector.extract_strided_slice %6 {offsets = [0, 0], sizes = [32, 32], strides = [1, 1]} : vector<64x32xf32> to vector<32x32xf32>
    %c0_6 = arith.constant 0 : index
    %c0_7 = arith.constant 0 : index
    %8 = memref.load %arg4[%c0_6, %c0_7] : memref<1x1xf32, #tpu.memory_space<smem>>
    %9 = vector.extract_strided_slice %7 {offsets = [0, 0], sizes = [32, 16], strides = [1, 1]} : vector<32x32xf32> to vector<32x16xf32>
    %cst_8 = arith.constant dense<0.000000e+00> : vector<32xf32>
    %10 = vector.multi_reduction <add>, %9, %cst_8 [1] : vector<32x16xf32> to vector<32xf32>
    %11 = vector.shape_cast %10 : vector<32xf32> to vector<32x1xf32>
    %cst_9 = arith.constant 1.600000e+01 : f32
    %12 = vector.broadcast %cst_9 : f32 to vector<32x1xf32>
    %13 = arith.divf %11, %12 : vector<32x1xf32>
    %14 = vector.broadcast %13 : vector<32x1xf32> to vector<32x16xf32>
    %15 = arith.subf %9, %14 : vector<32x16xf32>
    %16 = arith.mulf %15, %15 : vector<32x16xf32>
    %cst_10 = arith.constant dense<0.000000e+00> : vector<32xf32>
    %17 = vector.multi_reduction <add>, %16, %cst_10 [1] : vector<32x16xf32> to vector<32xf32>
    %18 = vector.shape_cast %17 : vector<32xf32> to vector<32x1xf32>
    %cst_11 = arith.constant 1.600000e+01 : f32
    %19 = vector.broadcast %cst_11 : f32 to vector<32x1xf32>
    %20 = arith.divf %18, %19 : vector<32x1xf32>
    %cst_12 = arith.constant 9.99999974E-6 : f32
    %21 = vector.broadcast %cst_12 : f32 to vector<32x1xf32>
    %22 = arith.addf %20, %21 : vector<32x1xf32>
    %23 = math.rsqrt %22 : vector<32x1xf32>
    %24 = vector.broadcast %23 : vector<32x1xf32> to vector<32x16xf32>
    %25 = arith.mulf %15, %24 : vector<32x16xf32>
    %cst_13 = arith.constant 0.000000e+00 : f32
    %26 = vector.broadcast %cst_13 : f32 to vector<32x16xf32>
    %27 = arith.cmpf ogt, %25, %26 : vector<32x16xf32>
    %28 = vector.broadcast %8 : f32 to vector<32x16xf32>
    %29 = arith.mulf %28, %25 : vector<32x16xf32>
    %30 = arith.select %27, %25, %29 : vector<32x16xi1>, vector<32x16xf32>
    %31 = vector.extract_strided_slice %7 {offsets = [0, 16], sizes = [32, 16], strides = [1, 1]} : vector<32x32xf32> to vector<32x16xf32>
    %cst_14 = arith.constant dense<0.000000e+00> : vector<32xf32>
    %32 = vector.multi_reduction <add>, %31, %cst_14 [1] : vector<32x16xf32> to vector<32xf32>
    %33 = vector.shape_cast %32 : vector<32xf32> to vector<32x1xf32>
    %cst_15 = arith.constant 1.600000e+01 : f32
    %34 = vector.broadcast %cst_15 : f32 to vector<32x1xf32>
    %35 = arith.divf %33, %34 : vector<32x1xf32>
    %36 = vector.broadcast %35 : vector<32x1xf32> to vector<32x16xf32>
    %37 = arith.subf %31, %36 : vector<32x16xf32>
    %38 = arith.mulf %37, %37 : vector<32x16xf32>
    %cst_16 = arith.constant dense<0.000000e+00> : vector<32xf32>
    %39 = vector.multi_reduction <add>, %38, %cst_16 [1] : vector<32x16xf32> to vector<32xf32>
    %40 = vector.shape_cast %39 : vector<32xf32> to vector<32x1xf32>
    %cst_17 = arith.constant 1.600000e+01 : f32
    %41 = vector.broadcast %cst_17 : f32 to vector<32x1xf32>
    %42 = arith.divf %40, %41 : vector<32x1xf32>
    %cst_18 = arith.constant 9.99999974E-6 : f32
    %43 = vector.broadcast %cst_18 : f32 to vector<32x1xf32>
    %44 = arith.addf %42, %43 : vector<32x1xf32>
    %45 = math.rsqrt %44 : vector<32x1xf32>
    %46 = vector.broadcast %45 : vector<32x1xf32> to vector<32x16xf32>
    %47 = arith.mulf %37, %46 : vector<32x16xf32>
    %cst_19 = arith.constant 0.000000e+00 : f32
    %48 = vector.broadcast %cst_19 : f32 to vector<32x16xf32>
    %49 = arith.cmpf ogt, %47, %48 : vector<32x16xf32>
    %50 = vector.broadcast %8 : f32 to vector<32x16xf32>
    %51 = arith.mulf %50, %47 : vector<32x16xf32>
    %52 = arith.select %49, %47, %51 : vector<32x16xi1>, vector<32x16xf32>
    %53 = tpu.concatenate %30, %52 in 1 : vector<32x16xf32>, vector<32x16xf32> -> vector<32x32xf32>
    %54 = vector.extract_strided_slice %6 {offsets = [32, 0], sizes = [32, 32], strides = [1, 1]} : vector<64x32xf32> to vector<32x32xf32>
    %55 = arith.addf %53, %54 : vector<32x32xf32>
    %56 = arith.truncf %55 : vector<32x32xf32> to vector<32x32xbf16>
    %c0_20 = arith.constant 0 : index
    %c0_21 = arith.constant 0 : index
    %c0_22 = arith.constant 0 : index
    %57 = vector.load %arg5[%c0_20, %c0_21, %c0_22] : memref<1x32x32xbf16, #tpu.memory_space<vmem>>, vector<1x32x32xbf16>
    %58 = vector.shape_cast %57 : vector<1x32x32xbf16> to vector<32x32xbf16>
    %59 = vector.shape_cast %56 : vector<32x32xbf16> to vector<1x32x32xbf16>
    tpu.vector_store %arg5[%c0_20, %c0_21, %c0_22], %59 {strides = array<i32>} : memref<1x32x32xbf16, #tpu.memory_space<vmem>>, vector<1x32x32xbf16>,
    return
  }
  func.func @transform_0(%arg0: i32) -> (i32, i32, i32) {
    %c0_i32 = arith.constant 0 : i32
    %c0_i32_0 = arith.constant 0 : i32
    %c0_i32_1 = arith.constant 0 : i32
    return %arg0, %c0_i32, %c0_i32_0 : i32, i32, i32
  }
  func.func @transform_1(%arg0: i32) -> (i32, i32) {
    %c0_i32 = arith.constant 0 : i32
    %c0_i32_0 = arith.constant 0 : i32
    %c0_i32_1 = arith.constant 0 : i32
    return %c0_i32, %c0_i32_0 : i32, i32
  }
  func.func @transform_2(%arg0: i32) -> (i32, i32) {
    %c0_i32 = arith.constant 0 : i32
    %c0_i32_0 = arith.constant 0 : i32
    %c0_i32_1 = arith.constant 0 : i32
    return %c0_i32, %c0_i32_0 : i32, i32
  }
  func.func @transform_3(%arg0: i32) -> (i32, i32) {
    %c0_i32 = arith.constant 0 : i32
    %c0_i32_0 = arith.constant 0 : i32
    %c0_i32_1 = arith.constant 0 : i32
    return %c0_i32, %c0_i32_0 : i32, i32
  }
  func.func @transform_4(%arg0: i32) -> (i32, i32, i32) {
    %c0_i32 = arith.constant 0 : i32
    %c0_i32_0 = arith.constant 0 : i32
    %c0_i32_1 = arith.constant 0 : i32
    return %arg0, %c0_i32, %c0_i32_0 : i32, i32, i32
  }
}

module attributes {stable_mosaic.version = 11 : i64} {
  func.func @kernel(%arg0: i32, %arg1: memref<1x192x32xbf16, #tpu.memory_space<vmem>>, %arg2: memref<32x192xbf16, #tpu.memory_space<vmem>>, %arg3: memref<32x1xf32, #tpu.memory_space<vmem>>, %arg4: memref<1x1xf32, #tpu.memory_space<smem>>, %arg5: memref<1x32x32xbf16, #tpu.memory_space<vmem>>) attributes {dimension_semantics = [#tpu.dimension_semantics<parallel>], iteration_bounds = array<i64: 1>, scalar_prefetch = 0 : i64, scratch_operands = 0 : i64, tpu.core_type = #tpu.core_type<tc>, window_params = [{transform_indices = @transform_0, window_bounds = array<i64: 1, 192, 32>}, {pipeline_mode = #tpu.pipeline_mode<synchronous>, transform_indices = @transform_1, window_bounds = array<i64: 32, 192>}, {pipeline_mode = #tpu.pipeline_mode<synchronous>, transform_indices = @transform_2, window_bounds = array<i64: 32, 1>}, {transform_indices = @transform_3, window_bounds = array<i64: 1, 1>}, {transform_indices = @transform_4, window_bounds = array<i64: 1, 32, 32>}]} {
    %c0 = arith.constant 0 : index
    %c0_0 = arith.constant 0 : index
    %c0_1 = arith.constant 0 : index
    %0 = vector.load %arg1[%c0, %c0_0, %c0_1] : memref<1x192x32xbf16, #tpu.memory_space<vmem>>, vector<1x192x32xbf16>
    %1 = vector.shape_cast %0 : vector<1x192x32xbf16> to vector<192x32xbf16>
    %c0_2 = arith.constant 0 : index
    %c0_3 = arith.constant 0 : index
    %2 = vector.load %arg2[%c0_2, %c0_3] : memref<32x192xbf16, #tpu.memory_space<vmem>>, vector<32x192xbf16>
    %cst = arith.constant dense<0.000000e+00> : vector<32x32xf32>
    %3 = tpu.matmul %2, %1, %cst {dimension_numbers = #tpu.dot_dimension_numbers<[1], [0], [0], [1], [0, 0, 1, 1], [], []>} : vector<32x192xbf16>, vector<192x32xbf16>, vector<32x32xf32> -> vector<32x32xf32>
    %c0_4 = arith.constant 0 : index
    %c0_5 = arith.constant 0 : index
    %4 = vector.load %arg3[%c0_4, %c0_5] : memref<32x1xf32, #tpu.memory_space<vmem>>, vector<32x1xf32>
    %5 = vector.broadcast %4 : vector<32x1xf32> to vector<32x32xf32>
    %6 = arith.addf %3, %5 : vector<32x32xf32>
    %c0_6 = arith.constant 0 : index
    %c0_7 = arith.constant 0 : index
    %7 = memref.load %arg4[%c0_6, %c0_7] : memref<1x1xf32, #tpu.memory_space<smem>>
    %8 = vector.extract_strided_slice %6 {offsets = [0, 0], sizes = [32, 16], strides = [1, 1]} : vector<32x32xf32> to vector<32x16xf32>
    %cst_8 = arith.constant dense<0.000000e+00> : vector<32xf32>
    %9 = vector.multi_reduction <add>, %8, %cst_8 [1] : vector<32x16xf32> to vector<32xf32>
    %10 = vector.shape_cast %9 : vector<32xf32> to vector<32x1xf32>
    %cst_9 = arith.constant 1.600000e+01 : f32
    %11 = vector.broadcast %cst_9 : f32 to vector<32x1xf32>
    %12 = arith.divf %10, %11 : vector<32x1xf32>
    %13 = vector.extract_strided_slice %12 {offsets = [0, 0], sizes = [8, 1], strides = [1, 1]} : vector<32x1xf32> to vector<8x1xf32>
    %14 = vector.extract_strided_slice %12 {offsets = [8, 0], sizes = [8, 1], strides = [1, 1]} : vector<32x1xf32> to vector<8x1xf32>
    %15 = arith.addf %13, %14 : vector<8x1xf32>
    %16 = vector.extract_strided_slice %12 {offsets = [16, 0], sizes = [8, 1], strides = [1, 1]} : vector<32x1xf32> to vector<8x1xf32>
    %17 = arith.addf %15, %16 : vector<8x1xf32>
    %18 = vector.extract_strided_slice %12 {offsets = [24, 0], sizes = [8, 1], strides = [1, 1]} : vector<32x1xf32> to vector<8x1xf32>
    %19 = arith.addf %17, %18 : vector<8x1xf32>
    %cst_10 = arith.constant 2.500000e-01 : f32
    %20 = vector.broadcast %cst_10 : f32 to vector<8x1xf32>
    %21 = arith.mulf %19, %20 : vector<8x1xf32>
    %22 = tpu.concatenate %21, %21, %21, %21 in 0 : vector<8x1xf32>, vector<8x1xf32>, vector<8x1xf32>, vector<8x1xf32> -> vector<32x1xf32>
    %23 = vector.broadcast %22 : vector<32x1xf32> to vector<32x16xf32>
    %24 = arith.subf %8, %23 : vector<32x16xf32>
    %25 = arith.mulf %24, %24 : vector<32x16xf32>
    %cst_11 = arith.constant dense<0.000000e+00> : vector<32xf32>
    %26 = vector.multi_reduction <add>, %25, %cst_11 [1] : vector<32x16xf32> to vector<32xf32>
    %27 = vector.shape_cast %26 : vector<32xf32> to vector<32x1xf32>
    %cst_12 = arith.constant 1.600000e+01 : f32
    %28 = vector.broadcast %cst_12 : f32 to vector<32x1xf32>
    %29 = arith.divf %27, %28 : vector<32x1xf32>
    %30 = vector.extract_strided_slice %29 {offsets = [0, 0], sizes = [8, 1], strides = [1, 1]} : vector<32x1xf32> to vector<8x1xf32>
    %31 = vector.extract_strided_slice %29 {offsets = [8, 0], sizes = [8, 1], strides = [1, 1]} : vector<32x1xf32> to vector<8x1xf32>
    %32 = arith.addf %30, %31 : vector<8x1xf32>
    %33 = vector.extract_strided_slice %29 {offsets = [16, 0], sizes = [8, 1], strides = [1, 1]} : vector<32x1xf32> to vector<8x1xf32>
    %34 = arith.addf %32, %33 : vector<8x1xf32>
    %35 = vector.extract_strided_slice %29 {offsets = [24, 0], sizes = [8, 1], strides = [1, 1]} : vector<32x1xf32> to vector<8x1xf32>
    %36 = arith.addf %34, %35 : vector<8x1xf32>
    %cst_13 = arith.constant 2.500000e-01 : f32
    %37 = vector.broadcast %cst_13 : f32 to vector<8x1xf32>
    %38 = arith.mulf %36, %37 : vector<8x1xf32>
    %39 = tpu.concatenate %38, %38, %38, %38 in 0 : vector<8x1xf32>, vector<8x1xf32>, vector<8x1xf32>, vector<8x1xf32> -> vector<32x1xf32>
    %cst_14 = arith.constant 9.99999974E-6 : f32
    %40 = vector.broadcast %cst_14 : f32 to vector<32x1xf32>
    %41 = arith.addf %39, %40 : vector<32x1xf32>
    %42 = math.rsqrt %41 : vector<32x1xf32>
    %43 = vector.broadcast %42 : vector<32x1xf32> to vector<32x16xf32>
    %44 = arith.mulf %24, %43 : vector<32x16xf32>
    %cst_15 = arith.constant 0.000000e+00 : f32
    %45 = vector.broadcast %cst_15 : f32 to vector<32x16xf32>
    %46 = arith.cmpf ogt, %44, %45 : vector<32x16xf32>
    %47 = vector.broadcast %7 : f32 to vector<32x16xf32>
    %48 = arith.mulf %47, %44 : vector<32x16xf32>
    %49 = arith.select %46, %44, %48 : vector<32x16xi1>, vector<32x16xf32>
    %50 = vector.extract_strided_slice %6 {offsets = [0, 16], sizes = [32, 16], strides = [1, 1]} : vector<32x32xf32> to vector<32x16xf32>
    %cst_16 = arith.constant dense<0.000000e+00> : vector<32xf32>
    %51 = vector.multi_reduction <add>, %50, %cst_16 [1] : vector<32x16xf32> to vector<32xf32>
    %52 = vector.shape_cast %51 : vector<32xf32> to vector<32x1xf32>
    %cst_17 = arith.constant 1.600000e+01 : f32
    %53 = vector.broadcast %cst_17 : f32 to vector<32x1xf32>
    %54 = arith.divf %52, %53 : vector<32x1xf32>
    %55 = vector.extract_strided_slice %54 {offsets = [0, 0], sizes = [8, 1], strides = [1, 1]} : vector<32x1xf32> to vector<8x1xf32>
    %56 = vector.extract_strided_slice %54 {offsets = [8, 0], sizes = [8, 1], strides = [1, 1]} : vector<32x1xf32> to vector<8x1xf32>
    %57 = arith.addf %55, %56 : vector<8x1xf32>
    %58 = vector.extract_strided_slice %54 {offsets = [16, 0], sizes = [8, 1], strides = [1, 1]} : vector<32x1xf32> to vector<8x1xf32>
    %59 = arith.addf %57, %58 : vector<8x1xf32>
    %60 = vector.extract_strided_slice %54 {offsets = [24, 0], sizes = [8, 1], strides = [1, 1]} : vector<32x1xf32> to vector<8x1xf32>
    %61 = arith.addf %59, %60 : vector<8x1xf32>
    %cst_18 = arith.constant 2.500000e-01 : f32
    %62 = vector.broadcast %cst_18 : f32 to vector<8x1xf32>
    %63 = arith.mulf %61, %62 : vector<8x1xf32>
    %64 = tpu.concatenate %63, %63, %63, %63 in 0 : vector<8x1xf32>, vector<8x1xf32>, vector<8x1xf32>, vector<8x1xf32> -> vector<32x1xf32>
    %65 = vector.broadcast %64 : vector<32x1xf32> to vector<32x16xf32>
    %66 = arith.subf %50, %65 : vector<32x16xf32>
    %67 = arith.mulf %66, %66 : vector<32x16xf32>
    %cst_19 = arith.constant dense<0.000000e+00> : vector<32xf32>
    %68 = vector.multi_reduction <add>, %67, %cst_19 [1] : vector<32x16xf32> to vector<32xf32>
    %69 = vector.shape_cast %68 : vector<32xf32> to vector<32x1xf32>
    %cst_20 = arith.constant 1.600000e+01 : f32
    %70 = vector.broadcast %cst_20 : f32 to vector<32x1xf32>
    %71 = arith.divf %69, %70 : vector<32x1xf32>
    %72 = vector.extract_strided_slice %71 {offsets = [0, 0], sizes = [8, 1], strides = [1, 1]} : vector<32x1xf32> to vector<8x1xf32>
    %73 = vector.extract_strided_slice %71 {offsets = [8, 0], sizes = [8, 1], strides = [1, 1]} : vector<32x1xf32> to vector<8x1xf32>
    %74 = arith.addf %72, %73 : vector<8x1xf32>
    %75 = vector.extract_strided_slice %71 {offsets = [16, 0], sizes = [8, 1], strides = [1, 1]} : vector<32x1xf32> to vector<8x1xf32>
    %76 = arith.addf %74, %75 : vector<8x1xf32>
    %77 = vector.extract_strided_slice %71 {offsets = [24, 0], sizes = [8, 1], strides = [1, 1]} : vector<32x1xf32> to vector<8x1xf32>
    %78 = arith.addf %76, %77 : vector<8x1xf32>
    %cst_21 = arith.constant 2.500000e-01 : f32
    %79 = vector.broadcast %cst_21 : f32 to vector<8x1xf32>
    %80 = arith.mulf %78, %79 : vector<8x1xf32>
    %81 = tpu.concatenate %80, %80, %80, %80 in 0 : vector<8x1xf32>, vector<8x1xf32>, vector<8x1xf32>, vector<8x1xf32> -> vector<32x1xf32>
    %cst_22 = arith.constant 9.99999974E-6 : f32
    %82 = vector.broadcast %cst_22 : f32 to vector<32x1xf32>
    %83 = arith.addf %81, %82 : vector<32x1xf32>
    %84 = math.rsqrt %83 : vector<32x1xf32>
    %85 = vector.broadcast %84 : vector<32x1xf32> to vector<32x16xf32>
    %86 = arith.mulf %66, %85 : vector<32x16xf32>
    %cst_23 = arith.constant 0.000000e+00 : f32
    %87 = vector.broadcast %cst_23 : f32 to vector<32x16xf32>
    %88 = arith.cmpf ogt, %86, %87 : vector<32x16xf32>
    %89 = vector.broadcast %7 : f32 to vector<32x16xf32>
    %90 = arith.mulf %89, %86 : vector<32x16xf32>
    %91 = arith.select %88, %86, %90 : vector<32x16xi1>, vector<32x16xf32>
    %92 = tpu.concatenate %49, %91 in 1 : vector<32x16xf32>, vector<32x16xf32> -> vector<32x32xf32>
    %93 = arith.truncf %92 : vector<32x32xf32> to vector<32x32xbf16>
    %c0_24 = arith.constant 0 : index
    %c0_25 = arith.constant 0 : index
    %c0_26 = arith.constant 0 : index
    %94 = vector.load %arg5[%c0_24, %c0_25, %c0_26] : memref<1x32x32xbf16, #tpu.memory_space<vmem>>, vector<1x32x32xbf16>
    %95 = vector.shape_cast %94 : vector<1x32x32xbf16> to vector<32x32xbf16>
    %96 = vector.shape_cast %93 : vector<32x32xbf16> to vector<1x32x32xbf16>
    tpu.vector_store %arg5[%c0_24, %c0_25, %c0_26], %96 {strides = array<i32>} : memref<1x32x32xbf16, #tpu.memory_space<vmem>>, vector<1x32x32xbf16>,
    return
  }
  func.func @transform_0(%arg0: i32) -> (i32, i32, i32) {
    %c0_i32 = arith.constant 0 : i32
    %c0_i32_0 = arith.constant 0 : i32
    %c0_i32_1 = arith.constant 0 : i32
    return %arg0, %c0_i32, %c0_i32_0 : i32, i32, i32
  }
  func.func @transform_1(%arg0: i32) -> (i32, i32) {
    %c0_i32 = arith.constant 0 : i32
    %c0_i32_0 = arith.constant 0 : i32
    %c0_i32_1 = arith.constant 0 : i32
    return %c0_i32, %c0_i32_0 : i32, i32
  }
  func.func @transform_2(%arg0: i32) -> (i32, i32) {
    %c0_i32 = arith.constant 0 : i32
    %c0_i32_0 = arith.constant 0 : i32
    %c0_i32_1 = arith.constant 0 : i32
    return %c0_i32, %c0_i32_0 : i32, i32
  }
  func.func @transform_3(%arg0: i32) -> (i32, i32) {
    %c0_i32 = arith.constant 0 : i32
    %c0_i32_0 = arith.constant 0 : i32
    %c0_i32_1 = arith.constant 0 : i32
    return %c0_i32, %c0_i32_0 : i32, i32
  }
  func.func @transform_4(%arg0: i32) -> (i32, i32, i32) {
    %c0_i32 = arith.constant 0 : i32
    %c0_i32_0 = arith.constant 0 : i32
    %c0_i32_1 = arith.constant 0 : i32
    return %arg0, %c0_i32, %c0_i32_0 : i32, i32, i32
  }
}

module attributes {stable_mosaic.version = 11 : i64} {
  func.func @kernel(%arg0: i32, %arg1: memref<1x72x128xbf16, #tpu.memory_space<vmem>>, %arg2: memref<16x72xbf16, #tpu.memory_space<vmem>>, %arg3: memref<16x1xf32, #tpu.memory_space<vmem>>, %arg4: memref<1x1xf32, #tpu.memory_space<smem>>, %arg5: memref<1x8x128xbf16, #tpu.memory_space<vmem>>) attributes {dimension_semantics = [#tpu.dimension_semantics<parallel>], iteration_bounds = array<i64: 1>, scalar_prefetch = 0 : i64, scratch_operands = 0 : i64, tpu.core_type = #tpu.core_type<tc>, window_params = [{transform_indices = @transform_0, window_bounds = array<i64: 1, 72, 128>}, {pipeline_mode = #tpu.pipeline_mode<synchronous>, transform_indices = @transform_1, window_bounds = array<i64: 16, 72>}, {pipeline_mode = #tpu.pipeline_mode<synchronous>, transform_indices = @transform_2, window_bounds = array<i64: 16, 1>}, {transform_indices = @transform_3, window_bounds = array<i64: 1, 1>}, {transform_indices = @transform_4, window_bounds = array<i64: 1, 8, 128>}]} {
    %c0 = arith.constant 0 : index
    %c0_0 = arith.constant 0 : index
    %c0_1 = arith.constant 0 : index
    %0 = vector.load %arg1[%c0, %c0_0, %c0_1] : memref<1x72x128xbf16, #tpu.memory_space<vmem>>, vector<1x72x128xbf16>
    %1 = vector.shape_cast %0 : vector<1x72x128xbf16> to vector<72x128xbf16>
    %c0_2 = arith.constant 0 : index
    %c0_3 = arith.constant 0 : index
    %2 = vector.load %arg2[%c0_2, %c0_3] : memref<16x72xbf16, #tpu.memory_space<vmem>>, vector<16x72xbf16>
    %cst = arith.constant dense<0.000000e+00> : vector<16x128xf32>
    %3 = tpu.matmul %2, %1, %cst {dimension_numbers = #tpu.dot_dimension_numbers<[1], [0], [0], [1], [0, 0, 1, 1], [], []>} : vector<16x72xbf16>, vector<72x128xbf16>, vector<16x128xf32> -> vector<16x128xf32>
    %c0_4 = arith.constant 0 : index
    %c0_5 = arith.constant 0 : index
    %4 = vector.load %arg3[%c0_4, %c0_5] : memref<16x1xf32, #tpu.memory_space<vmem>>, vector<16x1xf32>
    %5 = vector.broadcast %4 : vector<16x1xf32> to vector<16x128xf32>
    %6 = arith.addf %3, %5 : vector<16x128xf32>
    %7 = vector.extract_strided_slice %6 {offsets = [0, 0], sizes = [8, 128], strides = [1, 1]} : vector<16x128xf32> to vector<8x128xf32>
    %c0_6 = arith.constant 0 : index
    %c0_7 = arith.constant 0 : index
    %8 = memref.load %arg4[%c0_6, %c0_7] : memref<1x1xf32, #tpu.memory_space<smem>>
    %9 = vector.extract_strided_slice %7 {offsets = [0, 0], sizes = [8, 64], strides = [1, 1]} : vector<8x128xf32> to vector<8x64xf32>
    %cst_8 = arith.constant dense<0.000000e+00> : vector<8xf32>
    %10 = vector.multi_reduction <add>, %9, %cst_8 [1] : vector<8x64xf32> to vector<8xf32>
    %11 = vector.shape_cast %10 : vector<8xf32> to vector<8x1xf32>
    %cst_9 = arith.constant 6.400000e+01 : f32
    %12 = vector.broadcast %cst_9 : f32 to vector<8x1xf32>
    %13 = arith.divf %11, %12 : vector<8x1xf32>
    %14 = vector.broadcast %13 : vector<8x1xf32> to vector<8x64xf32>
    %15 = arith.subf %9, %14 : vector<8x64xf32>
    %16 = arith.mulf %15, %15 : vector<8x64xf32>
    %cst_10 = arith.constant dense<0.000000e+00> : vector<8xf32>
    %17 = vector.multi_reduction <add>, %16, %cst_10 [1] : vector<8x64xf32> to vector<8xf32>
    %18 = vector.shape_cast %17 : vector<8xf32> to vector<8x1xf32>
    %cst_11 = arith.constant 6.400000e+01 : f32
    %19 = vector.broadcast %cst_11 : f32 to vector<8x1xf32>
    %20 = arith.divf %18, %19 : vector<8x1xf32>
    %cst_12 = arith.constant 9.99999974E-6 : f32
    %21 = vector.broadcast %cst_12 : f32 to vector<8x1xf32>
    %22 = arith.addf %20, %21 : vector<8x1xf32>
    %23 = math.rsqrt %22 : vector<8x1xf32>
    %24 = vector.broadcast %23 : vector<8x1xf32> to vector<8x64xf32>
    %25 = arith.mulf %15, %24 : vector<8x64xf32>
    %cst_13 = arith.constant 0.000000e+00 : f32
    %26 = vector.broadcast %cst_13 : f32 to vector<8x64xf32>
    %27 = arith.cmpf ogt, %25, %26 : vector<8x64xf32>
    %28 = vector.broadcast %8 : f32 to vector<8x64xf32>
    %29 = arith.mulf %28, %25 : vector<8x64xf32>
    %30 = arith.select %27, %25, %29 : vector<8x64xi1>, vector<8x64xf32>
    %31 = vector.extract_strided_slice %7 {offsets = [0, 64], sizes = [8, 64], strides = [1, 1]} : vector<8x128xf32> to vector<8x64xf32>
    %cst_14 = arith.constant dense<0.000000e+00> : vector<8xf32>
    %32 = vector.multi_reduction <add>, %31, %cst_14 [1] : vector<8x64xf32> to vector<8xf32>
    %33 = vector.shape_cast %32 : vector<8xf32> to vector<8x1xf32>
    %cst_15 = arith.constant 6.400000e+01 : f32
    %34 = vector.broadcast %cst_15 : f32 to vector<8x1xf32>
    %35 = arith.divf %33, %34 : vector<8x1xf32>
    %36 = vector.broadcast %35 : vector<8x1xf32> to vector<8x64xf32>
    %37 = arith.subf %31, %36 : vector<8x64xf32>
    %38 = arith.mulf %37, %37 : vector<8x64xf32>
    %cst_16 = arith.constant dense<0.000000e+00> : vector<8xf32>
    %39 = vector.multi_reduction <add>, %38, %cst_16 [1] : vector<8x64xf32> to vector<8xf32>
    %40 = vector.shape_cast %39 : vector<8xf32> to vector<8x1xf32>
    %cst_17 = arith.constant 6.400000e+01 : f32
    %41 = vector.broadcast %cst_17 : f32 to vector<8x1xf32>
    %42 = arith.divf %40, %41 : vector<8x1xf32>
    %cst_18 = arith.constant 9.99999974E-6 : f32
    %43 = vector.broadcast %cst_18 : f32 to vector<8x1xf32>
    %44 = arith.addf %42, %43 : vector<8x1xf32>
    %45 = math.rsqrt %44 : vector<8x1xf32>
    %46 = vector.broadcast %45 : vector<8x1xf32> to vector<8x64xf32>
    %47 = arith.mulf %37, %46 : vector<8x64xf32>
    %cst_19 = arith.constant 0.000000e+00 : f32
    %48 = vector.broadcast %cst_19 : f32 to vector<8x64xf32>
    %49 = arith.cmpf ogt, %47, %48 : vector<8x64xf32>
    %50 = vector.broadcast %8 : f32 to vector<8x64xf32>
    %51 = arith.mulf %50, %47 : vector<8x64xf32>
    %52 = arith.select %49, %47, %51 : vector<8x64xi1>, vector<8x64xf32>
    %53 = tpu.concatenate %30, %52 in 1 : vector<8x64xf32>, vector<8x64xf32> -> vector<8x128xf32>
    %54 = vector.extract_strided_slice %6 {offsets = [8, 0], sizes = [8, 128], strides = [1, 1]} : vector<16x128xf32> to vector<8x128xf32>
    %55 = arith.addf %53, %54 : vector<8x128xf32>
    %56 = arith.truncf %55 : vector<8x128xf32> to vector<8x128xbf16>
    %c0_20 = arith.constant 0 : index
    %c0_21 = arith.constant 0 : index
    %c0_22 = arith.constant 0 : index
    %57 = vector.load %arg5[%c0_20, %c0_21, %c0_22] : memref<1x8x128xbf16, #tpu.memory_space<vmem>>, vector<1x8x128xbf16>
    %58 = vector.shape_cast %57 : vector<1x8x128xbf16> to vector<8x128xbf16>
    %59 = vector.shape_cast %56 : vector<8x128xbf16> to vector<1x8x128xbf16>
    tpu.vector_store %arg5[%c0_20, %c0_21, %c0_22], %59 {strides = array<i32>} : memref<1x8x128xbf16, #tpu.memory_space<vmem>>, vector<1x8x128xbf16>,
    return
  }
  func.func @transform_0(%arg0: i32) -> (i32, i32, i32) {
    %c0_i32 = arith.constant 0 : i32
    %c0_i32_0 = arith.constant 0 : i32
    %c0_i32_1 = arith.constant 0 : i32
    return %arg0, %c0_i32, %c0_i32_0 : i32, i32, i32
  }
  func.func @transform_1(%arg0: i32) -> (i32, i32) {
    %c0_i32 = arith.constant 0 : i32
    %c0_i32_0 = arith.constant 0 : i32
    %c0_i32_1 = arith.constant 0 : i32
    return %c0_i32, %c0_i32_0 : i32, i32
  }
  func.func @transform_2(%arg0: i32) -> (i32, i32) {
    %c0_i32 = arith.constant 0 : i32
    %c0_i32_0 = arith.constant 0 : i32
    %c0_i32_1 = arith.constant 0 : i32
    return %c0_i32, %c0_i32_0 : i32, i32
  }
  func.func @transform_3(%arg0: i32) -> (i32, i32) {
    %c0_i32 = arith.constant 0 : i32
    %c0_i32_0 = arith.constant 0 : i32
    %c0_i32_1 = arith.constant 0 : i32
    return %c0_i32, %c0_i32_0 : i32, i32
  }
  func.func @transform_4(%arg0: i32) -> (i32, i32, i32) {
    %c0_i32 = arith.constant 0 : i32
    %c0_i32_0 = arith.constant 0 : i32
    %c0_i32_1 = arith.constant 0 : i32
    return %arg0, %c0_i32, %c0_i32_0 : i32, i32, i32
  }
}

module attributes {stable_mosaic.version = 11 : i64} {
  func.func @kernel(%arg0: i32, %arg1: memref<1x64x128xbf16, #tpu.memory_space<vmem>>, %arg2: memref<8x64xbf16, #tpu.memory_space<vmem>>, %arg3: memref<8x1xf32, #tpu.memory_space<vmem>>, %arg4: memref<1x1xf32, #tpu.memory_space<smem>>, %arg5: memref<1x8x128xbf16, #tpu.memory_space<vmem>>) attributes {dimension_semantics = [#tpu.dimension_semantics<parallel>], iteration_bounds = array<i64: 1>, scalar_prefetch = 0 : i64, scratch_operands = 0 : i64, tpu.core_type = #tpu.core_type<tc>, window_params = [{transform_indices = @transform_0, window_bounds = array<i64: 1, 64, 128>}, {pipeline_mode = #tpu.pipeline_mode<synchronous>, transform_indices = @transform_1, window_bounds = array<i64: 8, 64>}, {pipeline_mode = #tpu.pipeline_mode<synchronous>, transform_indices = @transform_2, window_bounds = array<i64: 8, 1>}, {transform_indices = @transform_3, window_bounds = array<i64: 1, 1>}, {transform_indices = @transform_4, window_bounds = array<i64: 1, 8, 128>}]} {
    %c0 = arith.constant 0 : index
    %c0_0 = arith.constant 0 : index
    %c0_1 = arith.constant 0 : index
    %0 = vector.load %arg1[%c0, %c0_0, %c0_1] : memref<1x64x128xbf16, #tpu.memory_space<vmem>>, vector<1x64x128xbf16>
    %1 = vector.shape_cast %0 : vector<1x64x128xbf16> to vector<64x128xbf16>
    %c0_2 = arith.constant 0 : index
    %c0_3 = arith.constant 0 : index
    %2 = vector.load %arg2[%c0_2, %c0_3] : memref<8x64xbf16, #tpu.memory_space<vmem>>, vector<8x64xbf16>
    %cst = arith.constant dense<0.000000e+00> : vector<8x128xf32>
    %3 = tpu.matmul %2, %1, %cst {dimension_numbers = #tpu.dot_dimension_numbers<[1], [0], [0], [1], [0, 0, 1, 1], [], []>} : vector<8x64xbf16>, vector<64x128xbf16>, vector<8x128xf32> -> vector<8x128xf32>
    %c0_4 = arith.constant 0 : index
    %c0_5 = arith.constant 0 : index
    %4 = vector.load %arg3[%c0_4, %c0_5] : memref<8x1xf32, #tpu.memory_space<vmem>>, vector<8x1xf32>
    %5 = vector.broadcast %4 : vector<8x1xf32> to vector<8x128xf32>
    %6 = arith.addf %3, %5 : vector<8x128xf32>
    %c0_6 = arith.constant 0 : index
    %c0_7 = arith.constant 0 : index
    %7 = memref.load %arg4[%c0_6, %c0_7] : memref<1x1xf32, #tpu.memory_space<smem>>
    %8 = vector.extract_strided_slice %6 {offsets = [0, 0], sizes = [8, 64], strides = [1, 1]} : vector<8x128xf32> to vector<8x64xf32>
    %cst_8 = arith.constant dense<0.000000e+00> : vector<8xf32>
    %9 = vector.multi_reduction <add>, %8, %cst_8 [1] : vector<8x64xf32> to vector<8xf32>
    %10 = vector.shape_cast %9 : vector<8xf32> to vector<8x1xf32>
    %cst_9 = arith.constant 6.400000e+01 : f32
    %11 = vector.broadcast %cst_9 : f32 to vector<8x1xf32>
    %12 = arith.divf %10, %11 : vector<8x1xf32>
    %13 = vector.extract_strided_slice %12 {offsets = [0, 0], sizes = [2, 1], strides = [1, 1]} : vector<8x1xf32> to vector<2x1xf32>
    %14 = vector.extract_strided_slice %12 {offsets = [2, 0], sizes = [2, 1], strides = [1, 1]} : vector<8x1xf32> to vector<2x1xf32>
    %15 = arith.addf %13, %14 : vector<2x1xf32>
    %16 = vector.extract_strided_slice %12 {offsets = [4, 0], sizes = [2, 1], strides = [1, 1]} : vector<8x1xf32> to vector<2x1xf32>
    %17 = arith.addf %15, %16 : vector<2x1xf32>
    %18 = vector.extract_strided_slice %12 {offsets = [6, 0], sizes = [2, 1], strides = [1, 1]} : vector<8x1xf32> to vector<2x1xf32>
    %19 = arith.addf %17, %18 : vector<2x1xf32>
    %cst_10 = arith.constant 2.500000e-01 : f32
    %20 = vector.broadcast %cst_10 : f32 to vector<2x1xf32>
    %21 = arith.mulf %19, %20 : vector<2x1xf32>
    %22 = tpu.concatenate %21, %21, %21, %21 in 0 : vector<2x1xf32>, vector<2x1xf32>, vector<2x1xf32>, vector<2x1xf32> -> vector<8x1xf32>
    %23 = vector.broadcast %22 : vector<8x1xf32> to vector<8x64xf32>
    %24 = arith.subf %8, %23 : vector<8x64xf32>
    %25 = arith.mulf %24, %24 : vector<8x64xf32>
    %cst_11 = arith.constant dense<0.000000e+00> : vector<8xf32>
    %26 = vector.multi_reduction <add>, %25, %cst_11 [1] : vector<8x64xf32> to vector<8xf32>
    %27 = vector.shape_cast %26 : vector<8xf32> to vector<8x1xf32>
    %cst_12 = arith.constant 6.400000e+01 : f32
    %28 = vector.broadcast %cst_12 : f32 to vector<8x1xf32>
    %29 = arith.divf %27, %28 : vector<8x1xf32>
    %30 = vector.extract_strided_slice %29 {offsets = [0, 0], sizes = [2, 1], strides = [1, 1]} : vector<8x1xf32> to vector<2x1xf32>
    %31 = vector.extract_strided_slice %29 {offsets = [2, 0], sizes = [2, 1], strides = [1, 1]} : vector<8x1xf32> to vector<2x1xf32>
    %32 = arith.addf %30, %31 : vector<2x1xf32>
    %33 = vector.extract_strided_slice %29 {offsets = [4, 0], sizes = [2, 1], strides = [1, 1]} : vector<8x1xf32> to vector<2x1xf32>
    %34 = arith.addf %32, %33 : vector<2x1xf32>
    %35 = vector.extract_strided_slice %29 {offsets = [6, 0], sizes = [2, 1], strides = [1, 1]} : vector<8x1xf32> to vector<2x1xf32>
    %36 = arith.addf %34, %35 : vector<2x1xf32>
    %cst_13 = arith.constant 2.500000e-01 : f32
    %37 = vector.broadcast %cst_13 : f32 to vector<2x1xf32>
    %38 = arith.mulf %36, %37 : vector<2x1xf32>
    %39 = tpu.concatenate %38, %38, %38, %38 in 0 : vector<2x1xf32>, vector<2x1xf32>, vector<2x1xf32>, vector<2x1xf32> -> vector<8x1xf32>
    %cst_14 = arith.constant 9.99999974E-6 : f32
    %40 = vector.broadcast %cst_14 : f32 to vector<8x1xf32>
    %41 = arith.addf %39, %40 : vector<8x1xf32>
    %42 = math.rsqrt %41 : vector<8x1xf32>
    %43 = vector.broadcast %42 : vector<8x1xf32> to vector<8x64xf32>
    %44 = arith.mulf %24, %43 : vector<8x64xf32>
    %cst_15 = arith.constant 0.000000e+00 : f32
    %45 = vector.broadcast %cst_15 : f32 to vector<8x64xf32>
    %46 = arith.cmpf ogt, %44, %45 : vector<8x64xf32>
    %47 = vector.broadcast %7 : f32 to vector<8x64xf32>
    %48 = arith.mulf %47, %44 : vector<8x64xf32>
    %49 = arith.select %46, %44, %48 : vector<8x64xi1>, vector<8x64xf32>
    %50 = vector.extract_strided_slice %6 {offsets = [0, 64], sizes = [8, 64], strides = [1, 1]} : vector<8x128xf32> to vector<8x64xf32>
    %cst_16 = arith.constant dense<0.000000e+00> : vector<8xf32>
    %51 = vector.multi_reduction <add>, %50, %cst_16 [1] : vector<8x64xf32> to vector<8xf32>
    %52 = vector.shape_cast %51 : vector<8xf32> to vector<8x1xf32>
    %cst_17 = arith.constant 6.400000e+01 : f32
    %53 = vector.broadcast %cst_17 : f32 to vector<8x1xf32>
    %54 = arith.divf %52, %53 : vector<8x1xf32>
    %55 = vector.extract_strided_slice %54 {offsets = [0, 0], sizes = [2, 1], strides = [1, 1]} : vector<8x1xf32> to vector<2x1xf32>
    %56 = vector.extract_strided_slice %54 {offsets = [2, 0], sizes = [2, 1], strides = [1, 1]} : vector<8x1xf32> to vector<2x1xf32>
    %57 = arith.addf %55, %56 : vector<2x1xf32>
    %58 = vector.extract_strided_slice %54 {offsets = [4, 0], sizes = [2, 1], strides = [1, 1]} : vector<8x1xf32> to vector<2x1xf32>
    %59 = arith.addf %57, %58 : vector<2x1xf32>
    %60 = vector.extract_strided_slice %54 {offsets = [6, 0], sizes = [2, 1], strides = [1, 1]} : vector<8x1xf32> to vector<2x1xf32>
    %61 = arith.addf %59, %60 : vector<2x1xf32>
    %cst_18 = arith.constant 2.500000e-01 : f32
    %62 = vector.broadcast %cst_18 : f32 to vector<2x1xf32>
    %63 = arith.mulf %61, %62 : vector<2x1xf32>
    %64 = tpu.concatenate %63, %63, %63, %63 in 0 : vector<2x1xf32>, vector<2x1xf32>, vector<2x1xf32>, vector<2x1xf32> -> vector<8x1xf32>
    %65 = vector.broadcast %64 : vector<8x1xf32> to vector<8x64xf32>
    %66 = arith.subf %50, %65 : vector<8x64xf32>
    %67 = arith.mulf %66, %66 : vector<8x64xf32>
    %cst_19 = arith.constant dense<0.000000e+00> : vector<8xf32>
    %68 = vector.multi_reduction <add>, %67, %cst_19 [1] : vector<8x64xf32> to vector<8xf32>
    %69 = vector.shape_cast %68 : vector<8xf32> to vector<8x1xf32>
    %cst_20 = arith.constant 6.400000e+01 : f32
    %70 = vector.broadcast %cst_20 : f32 to vector<8x1xf32>
    %71 = arith.divf %69, %70 : vector<8x1xf32>
    %72 = vector.extract_strided_slice %71 {offsets = [0, 0], sizes = [2, 1], strides = [1, 1]} : vector<8x1xf32> to vector<2x1xf32>
    %73 = vector.extract_strided_slice %71 {offsets = [2, 0], sizes = [2, 1], strides = [1, 1]} : vector<8x1xf32> to vector<2x1xf32>
    %74 = arith.addf %72, %73 : vector<2x1xf32>
    %75 = vector.extract_strided_slice %71 {offsets = [4, 0], sizes = [2, 1], strides = [1, 1]} : vector<8x1xf32> to vector<2x1xf32>
    %76 = arith.addf %74, %75 : vector<2x1xf32>
    %77 = vector.extract_strided_slice %71 {offsets = [6, 0], sizes = [2, 1], strides = [1, 1]} : vector<8x1xf32> to vector<2x1xf32>
    %78 = arith.addf %76, %77 : vector<2x1xf32>
    %cst_21 = arith.constant 2.500000e-01 : f32
    %79 = vector.broadcast %cst_21 : f32 to vector<2x1xf32>
    %80 = arith.mulf %78, %79 : vector<2x1xf32>
    %81 = tpu.concatenate %80, %80, %80, %80 in 0 : vector<2x1xf32>, vector<2x1xf32>, vector<2x1xf32>, vector<2x1xf32> -> vector<8x1xf32>
    %cst_22 = arith.constant 9.99999974E-6 : f32
    %82 = vector.broadcast %cst_22 : f32 to vector<8x1xf32>
    %83 = arith.addf %81, %82 : vector<8x1xf32>
    %84 = math.rsqrt %83 : vector<8x1xf32>
    %85 = vector.broadcast %84 : vector<8x1xf32> to vector<8x64xf32>
    %86 = arith.mulf %66, %85 : vector<8x64xf32>
    %cst_23 = arith.constant 0.000000e+00 : f32
    %87 = vector.broadcast %cst_23 : f32 to vector<8x64xf32>
    %88 = arith.cmpf ogt, %86, %87 : vector<8x64xf32>
    %89 = vector.broadcast %7 : f32 to vector<8x64xf32>
    %90 = arith.mulf %89, %86 : vector<8x64xf32>
    %91 = arith.select %88, %86, %90 : vector<8x64xi1>, vector<8x64xf32>
    %92 = tpu.concatenate %49, %91 in 1 : vector<8x64xf32>, vector<8x64xf32> -> vector<8x128xf32>
    %93 = arith.truncf %92 : vector<8x128xf32> to vector<8x128xbf16>
    %c0_24 = arith.constant 0 : index
    %c0_25 = arith.constant 0 : index
    %c0_26 = arith.constant 0 : index
    %94 = vector.load %arg5[%c0_24, %c0_25, %c0_26] : memref<1x8x128xbf16, #tpu.memory_space<vmem>>, vector<1x8x128xbf16>
    %95 = vector.shape_cast %94 : vector<1x8x128xbf16> to vector<8x128xbf16>
    %96 = vector.shape_cast %93 : vector<8x128xbf16> to vector<1x8x128xbf16>
    tpu.vector_store %arg5[%c0_24, %c0_25, %c0_26], %96 {strides = array<i32>} : memref<1x8x128xbf16, #tpu.memory_space<vmem>>, vector<1x8x128xbf16>,
    return
  }
  func.func @transform_0(%arg0: i32) -> (i32, i32, i32) {
    %c0_i32 = arith.constant 0 : i32
    %c0_i32_0 = arith.constant 0 : i32
    %c0_i32_1 = arith.constant 0 : i32
    return %arg0, %c0_i32, %c0_i32_0 : i32, i32, i32
  }
  func.func @transform_1(%arg0: i32) -> (i32, i32) {
    %c0_i32 = arith.constant 0 : i32
    %c0_i32_0 = arith.constant 0 : i32
    %c0_i32_1 = arith.constant 0 : i32
    return %c0_i32, %c0_i32_0 : i32, i32
  }
  func.func @transform_2(%arg0: i32) -> (i32, i32) {
    %c0_i32 = arith.constant 0 : i32
    %c0_i32_0 = arith.constant 0 : i32
    %c0_i32_1 = arith.constant 0 : i32
    return %c0_i32, %c0_i32_0 : i32, i32
  }
  func.func @transform_3(%arg0: i32) -> (i32, i32) {
    %c0_i32 = arith.constant 0 : i32
    %c0_i32_0 = arith.constant 0 : i32
    %c0_i32_1 = arith.constant 0 : i32
    return %c0_i32, %c0_i32_0 : i32, i32
  }
  func.func @transform_4(%arg0: i32) -> (i32, i32, i32) {
    %c0_i32 = arith.constant 0 : i32
    %c0_i32_0 = arith.constant 0 : i32
    %c0_i32_1 = arith.constant 0 : i32
    return %arg0, %c0_i32, %c0_i32_0 : i32, i32, i32
  }
}

module attributes {stable_mosaic.version = 11 : i64} {
  func.func @kernel(%arg0: i32, %arg1: memref<1x18x256xbf16, #tpu.memory_space<vmem>>, %arg2: memref<4x18xbf16, #tpu.memory_space<vmem>>, %arg3: memref<4x1xf32, #tpu.memory_space<vmem>>, %arg4: memref<1x2x256xf32, #tpu.memory_space<vmem>>) attributes {dimension_semantics = [#tpu.dimension_semantics<parallel>], iteration_bounds = array<i64: 2>, scalar_prefetch = 0 : i64, scratch_operands = 0 : i64, tpu.core_type = #tpu.core_type<tc>, window_params = [{transform_indices = @transform_0, window_bounds = array<i64: 1, 18, 256>}, {pipeline_mode = #tpu.pipeline_mode<synchronous>, transform_indices = @transform_1, window_bounds = array<i64: 4, 18>}, {pipeline_mode = #tpu.pipeline_mode<synchronous>, transform_indices = @transform_2, window_bounds = array<i64: 4, 1>}, {transform_indices = @transform_3, window_bounds = array<i64: 1, 2, 256>}]} {
    %c0 = arith.constant 0 : index
    %c0_0 = arith.constant 0 : index
    %c0_1 = arith.constant 0 : index
    %0 = vector.load %arg1[%c0, %c0_0, %c0_1] : memref<1x18x256xbf16, #tpu.memory_space<vmem>>, vector<1x18x256xbf16>
    %1 = vector.shape_cast %0 : vector<1x18x256xbf16> to vector<18x256xbf16>
    %c0_2 = arith.constant 0 : index
    %c0_3 = arith.constant 0 : index
    %2 = vector.load %arg2[%c0_2, %c0_3] : memref<4x18xbf16, #tpu.memory_space<vmem>>, vector<4x18xbf16>
    %cst = arith.constant dense<0.000000e+00> : vector<4x256xf32>
    %3 = tpu.matmul %2, %1, %cst {dimension_numbers = #tpu.dot_dimension_numbers<[1], [0], [0], [1], [0, 0, 1, 1], [], []>} : vector<4x18xbf16>, vector<18x256xbf16>, vector<4x256xf32> -> vector<4x256xf32>
    %c0_4 = arith.constant 0 : index
    %c0_5 = arith.constant 0 : index
    %4 = vector.load %arg3[%c0_4, %c0_5] : memref<4x1xf32, #tpu.memory_space<vmem>>, vector<4x1xf32>
    %5 = vector.broadcast %4 : vector<4x1xf32> to vector<4x256xf32>
    %6 = arith.addf %3, %5 : vector<4x256xf32>
    %7 = vector.extract_strided_slice %6 {offsets = [0, 0], sizes = [2, 256], strides = [1, 1]} : vector<4x256xf32> to vector<2x256xf32>
    %8 = vector.extract_strided_slice %6 {offsets = [2, 0], sizes = [2, 256], strides = [1, 1]} : vector<4x256xf32> to vector<2x256xf32>
    %9 = arith.addf %7, %8 : vector<2x256xf32>
    %c0_6 = arith.constant 0 : index
    %c0_7 = arith.constant 0 : index
    %c0_8 = arith.constant 0 : index
    %10 = vector.load %arg4[%c0_6, %c0_7, %c0_8] : memref<1x2x256xf32, #tpu.memory_space<vmem>>, vector<1x2x256xf32>
    %11 = vector.shape_cast %10 : vector<1x2x256xf32> to vector<2x256xf32>
    %12 = vector.shape_cast %9 : vector<2x256xf32> to vector<1x2x256xf32>
    tpu.vector_store %arg4[%c0_6, %c0_7, %c0_8], %12 {strides = array<i32>} : memref<1x2x256xf32, #tpu.memory_space<vmem>>, vector<1x2x256xf32>,
    return
  }
  func.func @transform_0(%arg0: i32) -> (i32, i32, i32) {
    %c0_i32 = arith.constant 0 : i32
    %c0_i32_0 = arith.constant 0 : i32
    %c0_i32_1 = arith.constant 0 : i32
    return %arg0, %c0_i32, %c0_i32_0 : i32, i32, i32
  }
  func.func @transform_1(%arg0: i32) -> (i32, i32) {
    %c0_i32 = arith.constant 0 : i32
    %c0_i32_0 = arith.constant 0 : i32
    %c0_i32_1 = arith.constant 0 : i32
    return %c0_i32, %c0_i32_0 : i32, i32
  }
  func.func @transform_2(%arg0: i32) -> (i32, i32) {
    %c0_i32 = arith.constant 0 : i32
    %c0_i32_0 = arith.constant 0 : i32
    %c0_i32_1 = arith.constant 0 : i32
    return %c0_i32, %c0_i32_0 : i32, i32
  }
  func.func @transform_3(%arg0: i32) -> (i32, i32, i32) {
    %c0_i32 = arith.constant 0 : i32
    %c0_i32_0 = arith.constant 0 : i32
    %c0_i32_1 = arith.constant 0 : i32
    return %arg0, %c0_i32, %c0_i32_0 : i32, i32, i32
  }
}

</mosaic_0001>

<llo_original>
// kernel: unet_forward.7
$region0: #{unet_forward.7}
  #allocation0 [shape = 'u32[]', space=smem, size = 0x4, offset = 0x4, fixed_abs, tag = 'smem constant byte address 0x4 - core index']
  #allocation1 [shape = 'u32[144,128]{1,0:T(1,128)}', space=vmem, size = 0x12000, scoped, tag = 'internal scratch']
  #allocation2 [shape = 'f32[1,1]{1,0:T(1,128)S(6)}', space=smem, size = 0x200, scoped, tag = 'scoped memory for unet_forward.7']
  %s0 = inlined_call_operand.vmem [shape: bf16[1,36,128], index: 0, kind: input, shape index: {}]
  %s1 = inlined_call_operand.vmem [shape: bf16[16,36], index: 1, kind: input, shape index: {}]
  %s2 = inlined_call_operand.vmem [shape: f32[16,1], index: 2, kind: input, shape index: {}]
  %s3 = inlined_call_operand.<no memory space> [shape: f32[1,1], index: 3, kind: input, shape index: {}]
  %s4 = inlined_call_operand.vmem [shape: bf16[1,8,128], index: 4, kind: output, shape index: {}]
  %s5 = sld [smem:[#allocation0]]
  $region26: #{unet_forward.7} parent=0
    _
  %s7 = ssub.s32 1, %s5
  %s8 = scalar_select 0, %s7, %s5
  %9 = sst [smem:[#allocation2]] %s3
  // Predicated region
  $region2: #{unet_forward.7} parent=0 // pred_check
    _
  $region3: #{unet_forward.7} parent=0 // pred_check_branch
    %11 = sbr.rel (0) target = $region5
  $region4: #{unet_forward.7} parent=0 // pred_region
    _
  $region5: #{unet_forward.7} parent=0 // pred_fallthru
    _
  // Predicated region
  $region6: #{unet_forward.7} parent=0 // pred_check
    _
  $region7: #{unet_forward.7} parent=0 // pred_check_branch
    %13 = sbr.rel (0) target = $region9
  $region8: #{unet_forward.7} parent=0 // pred_region
    _
  $region9: #{unet_forward.7} parent=0 // pred_fallthru
    _
  // Predicated region
  $region10: #{unet_forward.7} parent=0 // pred_check
    _
  $region11: #{unet_forward.7} parent=0 // pred_check_branch
    %15 = sbr.rel (0) target = $region13
  $region12: #{unet_forward.7} parent=0 // pred_region
    _
  $region13: #{unet_forward.7} parent=0 // pred_fallthru
    _
  // Predicated region
  $region14: #{unet_forward.7} parent=0 // pred_check
    _
  $region15: #{unet_forward.7} parent=0 // pred_check_branch
    %17 = sbr.rel (0) target = $region17
  $region16: #{unet_forward.7} parent=0 // pred_region
    _
  $region17: #{unet_forward.7} parent=0 // pred_fallthru
    _
  %v19 = vld [vmem:[%s0] sm:$0xf]
  %v20 = vld [vmem:[%s0 + $0x4] sm:$0xf]
  %v21 = vld [vmem:[%s0 + $0x8] sm:$0xf]
  %v22 = vld [vmem:[%s0 + $0xc] sm:$0xf]
  %v23 = vld [vmem:[%s0 + $0x10] sm:$0x3]
  %v24 = vld [vmem:[%s1] sm:$0xf]
  %v25 = vld [vmem:[%s1 + $0x4] sm:$0xf]
  %v26 = vld [vmem:[%s2] sm:$0xff]
  %v27 = vld [vmem:[%s2 + $0x8] sm:$0xff]
  %29 = vset.pattern.permute.xlu0 0
  %30 = vperm.xlu0 %29, %v26
  %v31 = vpop.permute.xlu0 %30
  %34 = vset.pattern.permute.xlu0 0
  %35 = vperm.xlu0 %34, %v27
  %v36 = vpop.permute.xlu0 %35
  %v40 = vunpack.c.l.b16 %v24
  %v41 = vunpack.c.l.b16 %v25
  %v42 = vpack.c.b16 %v41, %v40
  %v48 = vunpack.c.l.b16 %v19
  %v49 = vunpack.c.l.b16 %v20
  %v50 = vunpack.c.l.b16 %v21
  %v51 = vunpack.c.l.b16 %v22
  %v52 = vunpack.c.l.b16 %v23
  %v53 = vpack.c.b16 %v49, %v48
  %v54 = vpack.c.b16 %v51, %v50
  %v55 = vpack.c.b16 %v52, %v52
  %vm58 = vcmask 293888
  %v60 = vsel %vm58, %v42, 0
  %vm62 = vcmask 1041408
  %v64 = vsel %vm62, %v55, 0
  %66 = vmatprep.subr.bf16.mxu0 0
  %67 = vmatpush1.bf16.msra.mxu0 %v53
  %68 = vmatprep.subr.bf16.mxu0 0
  %69 = vmatpush1.bf16.msra.mxu0 %v54
  %70 = vmatprep.subr.bf16.mxu0 0
  %71 = vmatpush1.bf16.msra.mxu0 %v64
  %72 = vmatprep.subr.bf16.mxu0 0
  %73 = vmatpush1.bf16.msra.mxu0 0
  %74 = vmatprep.subr.bf16.mxu0 0
  %75 = vmatpush1.bf16.msra.mxu0 0
  %76 = vmatprep.subr.bf16.mxu0 0
  %77 = vmatpush1.bf16.msra.mxu0 0
  %78 = vmatprep.subr.bf16.mxu0 0
  %79 = vmatpush1.bf16.msra.mxu0 0
  %80 = vmatprep.subr.bf16.mxu0 0
  %81 = vmatpush1.bf16.msra.mxu0 0
  %82 = vmatprep.subr.bf16.mxu0 0
  %83 = vmatpush1.bf16.msra.mxu0 0
  %84 = vmatprep.subr.bf16.mxu0 0
  %85 = vmatpush1.bf16.msra.mxu0 0
  %86 = vmatprep.subr.bf16.mxu0 0
  %87 = vmatpush1.bf16.msra.mxu0 0
  %88 = vmatprep.subr.bf16.mxu0 0
  %89 = vmatpush1.bf16.msra.mxu0 0
  %90 = vmatprep.subr.bf16.mxu0 0
  %91 = vmatpush1.bf16.msra.mxu0 0
  %92 = vmatprep.subr.bf16.mxu0 0
  %93 = vmatpush1.bf16.msra.mxu0 0
  %94 = vmatprep.subr.bf16.mxu0 0
  %95 = vmatpush1.bf16.msra.mxu0 0
  %96 = vmatprep.subr.bf16.mxu0 0
  %97 = vmatpush1.bf16.msra.mxu0 0
  %98 = vmatprep.mubr.bf16.mxu0 0
  %99 = vmatmul.mubr.bf16.gmra.mrb[0].mxu0 %v60
  %v100 = vpop.f32.mrb[0].mxu0
  %v101 = vadd.f32 %v31, %v100
  %v102 = vpop.f32.mrb[0].mxu0
  %v103 = vpop.f32.mrb[0].mxu0
  %v104 = vadd.f32 %v36, %v103
  %v105 = vpop.f32.mrb[0].mxu0
  %106 = vdwg.mxu0
  %s107 = sld [smem:[#allocation2]]
  %vm108 = vcmask 523264
  %v109 = vsel %vm108, %v101, 0.0
  %110 = vadd.xlane.f32.xlu0 %v109
  %v111 = vpop.xlane.xlu0 %110
  %v112 = vrcp.pop 64.0
  %v113 = vmul.f32 %v111, %v112
  %v114 = vsub.f32 %v101, %v113
  %v115 = vmul.f32 %v114, %v114
  %v116 = vsel %vm108, %v115, 0.0
  %117 = vadd.xlane.f32.xlu0 %v116
  %v118 = vpop.xlane.xlu0 %117
  %v119 = vmul.f32 %v118, %v112
  %v120 = vadd.f32 %v119, 1e-05
  %v121 = vrsqrt.pop %v120
  %v122 = vmul.f32 %v114, %v121
  %vm123 = vcmp.gt.f32.partialorder %v122, 0.0
  %v124 = vstv %s107
  %v125 = vmul.f32 %v124, %v122
  %v126 = vsel %vm123, %v122, %v125
  %128 = vrot.lane.b32.xlu0 %v101, 64
  %v129 = vpop.permute.xlu0 %128
  %v131 = vsel %vm108, %v129, 0.0
  %132 = vadd.xlane.f32.xlu0 %v131
  %v133 = vpop.xlane.xlu0 %132
  %v134 = vmul.f32 %v133, %v112
  %v135 = vsub.f32 %v101, %v134
  %v136 = vmul.f32 %v135, %v135
  %138 = vrot.lane.b32.xlu0 %v136, 64
  %v139 = vpop.permute.xlu0 %138
  %v141 = vsel %vm108, %v139, 0.0
  %142 = vadd.xlane.f32.xlu0 %v141
  %v143 = vpop.xlane.xlu0 %142
  %v144 = vmul.f32 %v143, %v112
  %v145 = vadd.f32 %v144, 1e-05
  %v146 = vrsqrt.pop %v145
  %v147 = vmul.f32 %v135, %v146
  %vm148 = vcmp.gt.f32.partialorder %v147, 0.0
  %v149 = vmul.f32 %v124, %v147
  %v150 = vsel %vm148, %v147, %v149
  %v151 = vsel %vm108, %v126, %v150
  %v152 = vadd.f32 %v151, %v104
  %v153 = vpack.c.bf16 %v152, %v152
  %154 = vst [vmem:[%s4] sm:$0xf] %v153
  // Predicated region
  $region18: #{unet_forward.7} parent=0 // pred_check
    _
  $region19: #{unet_forward.7} parent=0 // pred_check_branch
    %156 = sbr.rel (0) target = $region21
  $region20: #{unet_forward.7} parent=0 // pred_region
    _
  $region21: #{unet_forward.7} parent=0 // pred_fallthru
    _
  // Predicated region
  $region22: #{unet_forward.7} parent=0 // pred_check
    _
  $region23: #{unet_forward.7} parent=0 // pred_check_branch
    %158 = sbr.rel (0) target = $region25
  $region24: #{unet_forward.7} parent=0 // pred_region
    _
  $region25: #{unet_forward.7} parent=0 // pred_fallthru
    _

// kernel: unet_forward.8
$region0: #{unet_forward.8}
  #allocation0 [shape = 'u32[]', space=smem, size = 0x4, offset = 0x4, fixed_abs, tag = 'smem constant byte address 0x4 - core index']
  #allocation1 [shape = 'u32[144,128]{1,0:T(1,128)}', space=vmem, size = 0x12000, scoped, tag = 'internal scratch']
  #allocation2 [shape = 'f32[1,1]{1,0:T(1,128)S(6)}', space=smem, size = 0x200, scoped, tag = 'scoped memory for unet_forward.8']
  %s0 = inlined_call_operand.vmem [shape: bf16[1,72,32], index: 0, kind: input, shape index: {}]
  %s1 = inlined_call_operand.vmem [shape: bf16[32,72], index: 1, kind: input, shape index: {}]
  %s2 = inlined_call_operand.vmem [shape: f32[32,1], index: 2, kind: input, shape index: {}]
  %s3 = inlined_call_operand.<no memory space> [shape: f32[1,1], index: 3, kind: input, shape index: {}]
  %s4 = inlined_call_operand.vmem [shape: bf16[1,16,32], index: 4, kind: output, shape index: {}]
  %s5 = sld [smem:[#allocation0]]
  $region26: #{unet_forward.8} parent=0
    _
  %s7 = ssub.s32 1, %s5
  %s8 = scalar_select 0, %s7, %s5
  %9 = sst [smem:[#allocation2]] %s3
  // Predicated region
  $region2: #{unet_forward.8} parent=0 // pred_check
    _
  $region3: #{unet_forward.8} parent=0 // pred_check_branch
    %11 = sbr.rel (0) target = $region5
  $region4: #{unet_forward.8} parent=0 // pred_region
    _
  $region5: #{unet_forward.8} parent=0 // pred_fallthru
    _
  // Predicated region
  $region6: #{unet_forward.8} parent=0 // pred_check
    _
  $region7: #{unet_forward.8} parent=0 // pred_check_branch
    %13 = sbr.rel (0) target = $region9
  $region8: #{unet_forward.8} parent=0 // pred_region
    _
  $region9: #{unet_forward.8} parent=0 // pred_fallthru
    _
  // Predicated region
  $region10: #{unet_forward.8} parent=0 // pred_check
    _
  $region11: #{unet_forward.8} parent=0 // pred_check_branch
    %15 = sbr.rel (0) target = $region13
  $region12: #{unet_forward.8} parent=0 // pred_region
    _
  $region13: #{unet_forward.8} parent=0 // pred_fallthru
    _
  // Predicated region
  $region14: #{unet_forward.8} parent=0 // pred_check
    _
  $region15: #{unet_forward.8} parent=0 // pred_check_branch
    %17 = sbr.rel (0) target = $region17
  $region16: #{unet_forward.8} parent=0 // pred_region
    _
  $region17: #{unet_forward.8} parent=0 // pred_fallthru
    _
  %v19 = vld [vmem:[%s0] sm:$0xf]
  %v20 = vld [vmem:[%s0 + $0x4] sm:$0xf]
  %v21 = vld [vmem:[%s0 + $0x8] sm:$0xf]
  %v22 = vld [vmem:[%s0 + $0xc] sm:$0xf]
  %v23 = vld [vmem:[%s0 + $0x10] sm:$0xf]
  %v24 = vld [vmem:[%s0 + $0x14] sm:$0xf]
  %v25 = vld [vmem:[%s0 + $0x18] sm:$0xf]
  %v26 = vld [vmem:[%s0 + $0x1c] sm:$0xf]
  %v27 = vld [vmem:[%s0 + $0x20] sm:$0xf]
  %v28 = vld [vmem:[%s1] sm:$0xf]
  %v29 = vld [vmem:[%s1 + $0x4] sm:$0xf]
  %v30 = vld [vmem:[%s1 + $0x8] sm:$0xf]
  %v31 = vld [vmem:[%s1 + $0xc] sm:$0xf]
  %v32 = vld [vmem:[%s2] sm:$0xff]
  %v33 = vld [vmem:[%s2 + $0x8] sm:$0xff]
  %v34 = vld [vmem:[%s2 + $0x10] sm:$0xff]
  %v35 = vld [vmem:[%s2 + $0x18] sm:$0xff]
  %37 = vset.pattern.permute.xlu0 0
  %38 = vperm.xlu0 %37, %v32
  %v39 = vpop.permute.xlu0 %38
  %42 = vset.pattern.permute.xlu0 0
  %43 = vperm.xlu0 %42, %v33
  %v44 = vpop.permute.xlu0 %43
  %47 = vset.pattern.permute.xlu0 0
  %48 = vperm.xlu0 %47, %v34
  %v49 = vpop.permute.xlu0 %48
  %52 = vset.pattern.permute.xlu0 0
  %53 = vperm.xlu0 %52, %v35
  %v54 = vpop.permute.xlu0 %53
  %v60 = vunpack.c.l.b16 %v28
  %v61 = vunpack.c.l.b16 %v29
  %v62 = vunpack.c.l.b16 %v30
  %v63 = vunpack.c.l.b16 %v31
  %v64 = vpack.c.b16 %v61, %v60
  %v65 = vpack.c.b16 %v63, %v62
  %v75 = vunpack.c.l.b16 %v19
  %v76 = vunpack.c.l.b16 %v20
  %v77 = vunpack.c.l.b16 %v21
  %v78 = vunpack.c.l.b16 %v22
  %v79 = vunpack.c.l.b16 %v23
  %v80 = vunpack.c.l.b16 %v24
  %v81 = vunpack.c.l.b16 %v25
  %v82 = vunpack.c.l.b16 %v26
  %v83 = vunpack.c.l.b16 %v27
  %v84 = vpack.c.b16 %v76, %v75
  %v85 = vpack.c.b16 %v78, %v77
  %v86 = vpack.c.b16 %v80, %v79
  %v87 = vpack.c.b16 %v82, %v81
  %v88 = vpack.c.b16 %v83, %v83
  %vm93 = vcmask 588800
  %v95 = vsel %vm93, %v64, 0
  %v98 = vsel %vm93, %v65, 0
  %vm100 = vcmask 1043456
  %v102 = vsel %vm100, %v88, 0
  %104 = vmatprep.subr.bf16.mxu0 0
  %105 = vmatpush1.bf16.msra.mxu0 %v84
  %106 = vmatprep.subr.bf16.mxu0 0
  %107 = vmatpush1.bf16.msra.mxu0 %v85
  %108 = vmatprep.subr.bf16.mxu0 0
  %109 = vmatpush1.bf16.msra.mxu0 %v86
  %110 = vmatprep.subr.bf16.mxu0 0
  %111 = vmatpush1.bf16.msra.mxu0 %v87
  %112 = vmatprep.subr.bf16.mxu0 0
  %113 = vmatpush1.bf16.msra.mxu0 %v102
  %114 = vmatprep.subr.bf16.mxu0 0
  %115 = vmatpush1.bf16.msra.mxu0 0
  %116 = vmatprep.subr.bf16.mxu0 0
  %117 = vmatpush1.bf16.msra.mxu0 0
  %118 = vmatprep.subr.bf16.mxu0 0
  %119 = vmatpush1.bf16.msra.mxu0 0
  %120 = vmatprep.subr.bf16.mxu0 0
  %121 = vmatpush1.bf16.msra.mxu0 0
  %122 = vmatprep.subr.bf16.mxu0 0
  %123 = vmatpush1.bf16.msra.mxu0 0
  %124 = vmatprep.subr.bf16.mxu0 0
  %125 = vmatpush1.bf16.msra.mxu0 0
  %126 = vmatprep.subr.bf16.mxu0 0
  %127 = vmatpush1.bf16.msra.mxu0 0
  %128 = vmatprep.subr.bf16.mxu0 0
  %129 = vmatpush1.bf16.msra.mxu0 0
  %130 = vmatprep.subr.bf16.mxu0 0
  %131 = vmatpush1.bf16.msra.mxu0 0
  %132 = vmatprep.subr.bf16.mxu0 0
  %133 = vmatpush1.bf16.msra.mxu0 0
  %134 = vmatprep.subr.bf16.mxu0 0
  %135 = vmatpush1.bf16.msra.mxu0 0
  %136 = vmatprep.mubr.bf16.mxu0 0
  %137 = vmatmul.mubr.bf16.gmra.mrb[0].mxu0 %v95
  %v138 = vpop.f32.mrb[0].mxu0
  %v139 = vadd.f32 %v39, %v138
  %v140 = vpop.f32.mrb[0].mxu0
  %v141 = vpop.f32.mrb[0].mxu0
  %v142 = vadd.f32 %v44, %v141
  %v143 = vpop.f32.mrb[0].mxu0
  %144 = vmatprep.mubr.bf16.mxu0 0
  %145 = vmatmul.mubr.bf16.gmra.mrb[0].mxu0 %v98
  %v146 = vpop.f32.mrb[0].mxu0
  %v147 = vadd.f32 %v49, %v146
  %v148 = vpop.f32.mrb[0].mxu0
  %v149 = vpop.f32.mrb[0].mxu0
  %v150 = vadd.f32 %v54, %v149
  %v151 = vpop.f32.mrb[0].mxu0
  %152 = vdwg.mxu0
  %s153 = sld [smem:[#allocation2]]
  %vm154 = vcmask 130048
  %v155 = vsel %vm154, %v139, 0.0
  %156 = vadd.xlane.f32.xlu0 %v155
  %v157 = vpop.xlane.xlu0 %156
  %v158 = vsel %vm154, %v142, 0.0
  %159 = vadd.xlane.f32.xlu0 %v158
  %v160 = vpop.xlane.xlu0 %159
  %v161 = vrcp.pop 16.0
  %v162 = vmul.f32 %v157, %v161
  %v163 = vmul.f32 %v160, %v161
  %v164 = vsub.f32 %v139, %v162
  %v165 = vsub.f32 %v142, %v163
  %v166 = vmul.f32 %v164, %v164
  %v167 = vmul.f32 %v165, %v165
  %v168 = vsel %vm154, %v166, 0.0
  %169 = vadd.xlane.f32.xlu0 %v168
  %v170 = vpop.xlane.xlu0 %169
  %v171 = vsel %vm154, %v167, 0.0
  %172 = vadd.xlane.f32.xlu0 %v171
  %v173 = vpop.xlane.xlu0 %172
  %v174 = vmul.f32 %v170, %v161
  %v175 = vmul.f32 %v173, %v161
  %v176 = vadd.f32 %v174, 1e-05
  %v177 = vadd.f32 %v175, 1e-05
  %v178 = vrsqrt.pop %v176
  %v179 = vrsqrt.pop %v177
  %v180 = vmul.f32 %v164, %v178
  %v181 = vmul.f32 %v165, %v179
  %vm182 = vcmp.gt.f32.partialorder %v180, 0.0
  %vm183 = vcmp.gt.f32.partialorder %v181, 0.0
  %v184 = vstv %s153
  %v185 = vmul.f32 %v184, %v180
  %v186 = vmul.f32 %v184, %v181
  %v187 = vsel %vm182, %v180, %v185
  %v188 = vsel %vm183, %v181, %v186
  %191 = vrot.lane.b32.xlu0 %v139, 112
  %v192 = vpop.permute.xlu0 %191
  %193 = vrot.lane.b32.xlu0 %v142, 112
  %v194 = vpop.permute.xlu0 %193
  %v197 = vsel %vm154, %v192, 0.0
  %198 = vadd.xlane.f32.xlu0 %v197
  %v199 = vpop.xlane.xlu0 %198
  %v200 = vsel %vm154, %v194, 0.0
  %201 = vadd.xlane.f32.xlu0 %v200
  %v202 = vpop.xlane.xlu0 %201
  %v203 = vmul.f32 %v199, %v161
  %v204 = vmul.f32 %v202, %v161
  %v205 = vsub.f32 %v139, %v203
  %v206 = vsub.f32 %v142, %v204
  %v207 = vmul.f32 %v205, %v205
  %v208 = vmul.f32 %v206, %v206
  %211 = vrot.lane.b32.xlu0 %v207, 112
  %v212 = vpop.permute.xlu0 %211
  %213 = vrot.lane.b32.xlu0 %v208, 112
  %v214 = vpop.permute.xlu0 %213
  %v217 = vsel %vm154, %v212, 0.0
  %218 = vadd.xlane.f32.xlu0 %v217
  %v219 = vpop.xlane.xlu0 %218
  %v220 = vsel %vm154, %v214, 0.0
  %221 = vadd.xlane.f32.xlu0 %v220
  %v222 = vpop.xlane.xlu0 %221
  %v223 = vmul.f32 %v219, %v161
  %v224 = vmul.f32 %v222, %v161
  %v225 = vadd.f32 %v223, 1e-05
  %v226 = vadd.f32 %v224, 1e-05
  %v227 = vrsqrt.pop %v225
  %v228 = vrsqrt.pop %v226
  %v229 = vmul.f32 %v205, %v227
  %v230 = vmul.f32 %v206, %v228
  %vm231 = vcmp.gt.f32.partialorder %v229, 0.0
  %vm232 = vcmp.gt.f32.partialorder %v230, 0.0
  %v233 = vmul.f32 %v184, %v229
  %v234 = vmul.f32 %v184, %v230
  %v235 = vsel %vm231, %v229, %v233
  %v236 = vsel %vm232, %v230, %v234
  %v237 = vsel %vm154, %v187, %v235
  %v238 = vsel %vm154, %v188, %v236
  %v239 = vadd.f32 %v237, %v147
  %v240 = vadd.f32 %v238, %v150
  %v241 = vpack.c.bf16 %v240, %v239
  %v243 = vunpack.c.l.b16 %v241
  %v244 = vunpack.c.h.b16 %v241
  %v245 = vpack.c.b16 %v243, %v243
  %v246 = vpack.c.b16 %v244, %v244
  %vm249 = vcmask 257024
  %250 = vst.msk [vmem:[%s4] sm:$0xf] %vm249, %v245
  %251 = vst.msk [vmem:[%s4 + $0x4] sm:$0xf] %vm249, %v246
  // Predicated region
  $region18: #{unet_forward.8} parent=0 // pred_check
    _
  $region19: #{unet_forward.8} parent=0 // pred_check_branch
    %253 = sbr.rel (0) target = $region21
  $region20: #{unet_forward.8} parent=0 // pred_region
    _
  $region21: #{unet_forward.8} parent=0 // pred_fallthru
    _
  // Predicated region
  $region22: #{unet_forward.8} parent=0 // pred_check
    _
  $region23: #{unet_forward.8} parent=0 // pred_check_branch
    %255 = sbr.rel (0) target = $region25
  $region24: #{unet_forward.8} parent=0 // pred_region
    _
  $region25: #{unet_forward.8} parent=0 // pred_fallthru
    _

// kernel: unet_forward.9
$region0: #{unet_forward.9}
  #allocation0 [shape = 'u32[]', space=smem, size = 0x4, offset = 0x4, fixed_abs, tag = 'smem constant byte address 0x4 - core index']
  #allocation1 [shape = 'u32[144,128]{1,0:T(1,128)}', space=vmem, size = 0x12000, scoped, tag = 'internal scratch']
  #allocation2 [shape = 'f32[1,1]{1,0:T(1,128)S(6)}', space=smem, size = 0x200, scoped, tag = 'scoped memory for unet_forward.9']
  %s0 = inlined_call_operand.vmem [shape: bf16[1,144,32], index: 0, kind: input, shape index: {}]
  %s1 = inlined_call_operand.vmem [shape: bf16[64,144], index: 1, kind: input, shape index: {}]
  %s2 = inlined_call_operand.vmem [shape: f32[64,1], index: 2, kind: input, shape index: {}]
  %s3 = inlined_call_operand.<no memory space> [shape: f32[1,1], index: 3, kind: input, shape index: {}]
  %s4 = inlined_call_operand.vmem [shape: bf16[1,32,32], index: 4, kind: output, shape index: {}]
  %s5 = sld [smem:[#allocation0]]
  $region26: #{unet_forward.9} parent=0
    _
  %s7 = ssub.s32 1, %s5
  %s8 = scalar_select 0, %s7, %s5
  %9 = sst [smem:[#allocation2]] %s3
  // Predicated region
  $region2: #{unet_forward.9} parent=0 // pred_check
    _
  $region3: #{unet_forward.9} parent=0 // pred_check_branch
    %11 = sbr.rel (0) target = $region5
  $region4: #{unet_forward.9} parent=0 // pred_region
    _
  $region5: #{unet_forward.9} parent=0 // pred_fallthru
    _
  // Predicated region
  $region6: #{unet_forward.9} parent=0 // pred_check
    _
  $region7: #{unet_forward.9} parent=0 // pred_check_branch
    %13 = sbr.rel (0) target = $region9
  $region8: #{unet_forward.9} parent=0 // pred_region
    _
  $region9: #{unet_forward.9} parent=0 // pred_fallthru
    _
  // Predicated region
  $region10: #{unet_forward.9} parent=0 // pred_check
    _
  $region11: #{unet_forward.9} parent=0 // pred_check_branch
    %15 = sbr.rel (0) target = $region13
  $region12: #{unet_forward.9} parent=0 // pred_region
    _
  $region13: #{unet_forward.9} parent=0 // pred_fallthru
    _
  // Predicated region
  $region14: #{unet_forward.9} parent=0 // pred_check
    _
  $region15: #{unet_forward.9} parent=0 // pred_check_branch
    %17 = sbr.rel (0) target = $region17
  $region16: #{unet_forward.9} parent=0 // pred_region
    _
  $region17: #{unet_forward.9} parent=0 // pred_fallthru
    _
  %v19 = vld [vmem:[%s0] sm:$0xf]
  %v20 = vld [vmem:[%s0 + $0x4] sm:$0xf]
  %v21 = vld [vmem:[%s0 + $0x8] sm:$0xf]
  %v22 = vld [vmem:[%s0 + $0xc] sm:$0xf]
  %v23 = vld [vmem:[%s0 + $0x10] sm:$0xf]
  %v24 = vld [vmem:[%s0 + $0x14] sm:$0xf]
  %v25 = vld [vmem:[%s0 + $0x18] sm:$0xf]
  %v26 = vld [vmem:[%s0 + $0x1c] sm:$0xf]
  %v27 = vld [vmem:[%s0 + $0x20] sm:$0xf]
  %v28 = vld [vmem:[%s0 + $0x24] sm:$0xf]
  %v29 = vld [vmem:[%s0 + $0x28] sm:$0xf]
  %v30 = vld [vmem:[%s0 + $0x2c] sm:$0xf]
  %v31 = vld [vmem:[%s0 + $0x30] sm:$0xf]
  %v32 = vld [vmem:[%s0 + $0x34] sm:$0xf]
  %v33 = vld [vmem:[%s0 + $0x38] sm:$0xf]
  %v34 = vld [vmem:[%s0 + $0x3c] sm:$0xf]
  %v35 = vld [vmem:[%s0 + $0x40] sm:$0xf]
  %v36 = vld [vmem:[%s0 + $0x44] sm:$0xf]
  %v37 = vld [vmem:[%s1] sm:$0xff]
  %v38 = vld [vmem:[%s1 + $0x8] sm:$0xff]
  %v39 = vld [vmem:[%s1 + $0x10] sm:$0xff]
  %v40 = vld [vmem:[%s1 + $0x18] sm:$0xff]
  %v41 = vld [vmem:[%s1 + $0x20] sm:$0xff]
  %v42 = vld [vmem:[%s1 + $0x28] sm:$0xff]
  %v43 = vld [vmem:[%s1 + $0x30] sm:$0xff]
  %v44 = vld [vmem:[%s1 + $0x38] sm:$0xff]
  %v45 = vld [vmem:[%s2] sm:$0xff]
  %v46 = vld [vmem:[%s2 + $0x8] sm:$0xff]
  %v47 = vld [vmem:[%s2 + $0x10] sm:$0xff]
  %v48 = vld [vmem:[%s2 + $0x18] sm:$0xff]
  %v49 = vld [vmem:[%s2 + $0x20] sm:$0xff]
  %v50 = vld [vmem:[%s2 + $0x28] sm:$0xff]
  %v51 = vld [vmem:[%s2 + $0x30] sm:$0xff]
  %v52 = vld [vmem:[%s2 + $0x38] sm:$0xff]
  %54 = vset.pattern.permute.xlu0 0
  %55 = vperm.xlu0 %54, %v45
  %v56 = vpop.permute.xlu0 %55
  %59 = vset.pattern.permute.xlu0 0
  %60 = vperm.xlu0 %59, %v46
  %v61 = vpop.permute.xlu0 %60
  %64 = vset.pattern.permute.xlu0 0
  %65 = vperm.xlu0 %64, %v47
  %v66 = vpop.permute.xlu0 %65
  %69 = vset.pattern.permute.xlu0 0
  %70 = vperm.xlu0 %69, %v48
  %v71 = vpop.permute.xlu0 %70
  %74 = vset.pattern.permute.xlu0 0
  %75 = vperm.xlu0 %74, %v49
  %v76 = vpop.permute.xlu0 %75
  %79 = vset.pattern.permute.xlu0 0
  %80 = vperm.xlu0 %79, %v50
  %v81 = vpop.permute.xlu0 %80
  %84 = vset.pattern.permute.xlu0 0
  %85 = vperm.xlu0 %84, %v51
  %v86 = vpop.permute.xlu0 %85
  %89 = vset.pattern.permute.xlu0 0
  %90 = vperm.xlu0 %89, %v52
  %v91 = vpop.permute.xlu0 %90
  %v101 = vunpack.c.l.b16 %v37
  %v102 = vunpack.c.h.b16 %v37
  %v103 = vunpack.c.l.b16 %v38
  %v104 = vunpack.c.h.b16 %v38
  %v105 = vunpack.c.l.b16 %v39
  %v106 = vunpack.c.h.b16 %v39
  %v107 = vunpack.c.l.b16 %v40
  %v108 = vunpack.c.h.b16 %v40
  %v109 = vunpack.c.l.b16 %v41
  %v110 = vunpack.c.h.b16 %v41
  %v111 = vunpack.c.l.b16 %v42
  %v112 = vunpack.c.h.b16 %v42
  %v113 = vunpack.c.l.b16 %v43
  %v114 = vunpack.c.h.b16 %v43
  %v115 = vunpack.c.l.b16 %v44
  %v116 = vunpack.c.h.b16 %v44
  %v117 = vpack.c.b16 %v103, %v101
  %v118 = vpack.c.b16 %v104, %v102
  %v119 = vpack.c.b16 %v107, %v105
  %v120 = vpack.c.b16 %v108, %v106
  %v121 = vpack.c.b16 %v111, %v109
  %v122 = vpack.c.b16 %v112, %v110
  %v123 = vpack.c.b16 %v115, %v113
  %v124 = vpack.c.b16 %v116, %v114
  %v147 = vunpack.c.l.b16 %v19
  %v148 = vunpack.c.l.b16 %v20
  %v149 = vunpack.c.l.b16 %v21
  %v150 = vunpack.c.l.b16 %v22
  %v151 = vunpack.c.l.b16 %v23
  %v152 = vunpack.c.l.b16 %v24
  %v153 = vunpack.c.l.b16 %v25
  %v154 = vunpack.c.l.b16 %v26
  %v155 = vunpack.c.l.b16 %v27
  %v156 = vunpack.c.l.b16 %v28
  %v157 = vunpack.c.l.b16 %v29
  %v158 = vunpack.c.l.b16 %v30
  %v159 = vunpack.c.l.b16 %v31
  %v160 = vunpack.c.l.b16 %v32
  %v161 = vunpack.c.l.b16 %v33
  %v162 = vunpack.c.l.b16 %v34
  %v163 = vunpack.c.l.b16 %v35
  %v164 = vunpack.c.l.b16 %v36
  %v165 = vpack.c.b16 %v148, %v147
  %v166 = vpack.c.b16 %v150, %v149
  %v167 = vpack.c.b16 %v152, %v151
  %v168 = vpack.c.b16 %v154, %v153
  %v169 = vpack.c.b16 %v156, %v155
  %v170 = vpack.c.b16 %v158, %v157
  %v171 = vpack.c.b16 %v160, %v159
  %v172 = vpack.c.b16 %v162, %v161
  %v173 = vpack.c.b16 %v164, %v163
  %vm183 = vcmask 130048
  %v185 = vsel %vm183, %v118, 0
  %v188 = vsel %vm183, %v120, 0
  %v191 = vsel %vm183, %v122, 0
  %v194 = vsel %vm183, %v124, 0
  %196 = vmatprep.subr.bf16.mxu0 0
  %197 = vmatpush1.bf16.msra.mxu0 %v165
  %198 = vmatprep.subr.bf16.mxu0 0
  %199 = vmatpush1.bf16.msra.mxu0 %v166
  %200 = vmatprep.subr.bf16.mxu0 0
  %201 = vmatpush1.bf16.msra.mxu0 %v167
  %202 = vmatprep.subr.bf16.mxu0 0
  %203 = vmatpush1.bf16.msra.mxu0 %v168
  %204 = vmatprep.subr.bf16.mxu0 0
  %205 = vmatpush1.bf16.msra.mxu0 %v169
  %206 = vmatprep.subr.bf16.mxu0 0
  %207 = vmatpush1.bf16.msra.mxu0 %v170
  %208 = vmatprep.subr.bf16.mxu0 0
  %209 = vmatpush1.bf16.msra.mxu0 %v171
  %210 = vmatprep.subr.bf16.mxu0 0
  %211 = vmatpush1.bf16.msra.mxu0 %v172
  %212 = vmatprep.subr.bf16.mxu0 0
  %213 = vmatpush1.bf16.msra.mxu0 %v173
  %214 = vmatprep.subr.bf16.mxu0 0
  %215 = vmatpush1.bf16.msra.mxu0 0
  %216 = vmatprep.subr.bf16.mxu0 0
  %217 = vmatpush1.bf16.msra.mxu0 0
  %218 = vmatprep.subr.bf16.mxu0 0
  %219 = vmatpush1.bf16.msra.mxu0 0
  %220 = vmatprep.subr.bf16.mxu0 0
  %221 = vmatpush1.bf16.msra.mxu0 0
  %222 = vmatprep.subr.bf16.mxu0 0
  %223 = vmatpush1.bf16.msra.mxu0 0
  %224 = vmatprep.subr.bf16.mxu0 0
  %225 = vmatpush1.bf16.msra.mxu0 0
  %226 = vmatprep.subr.bf16.mxu0 0
  %227 = vmatpush1.bf16.msra.mxu0 0
  %228 = vmatprep.mubr.bf16.mxu0 %v185
  %229 = vmatmul.mubr.bf16.gmra.mrb[0].mxu0 %v117
  %v230 = vpop.f32.mrb[0].mxu0
  %v231 = vadd.f32 %v56, %v230
  %v232 = vpop.f32.mrb[0].mxu0
  %v233 = vpop.f32.mrb[0].mxu0
  %v234 = vadd.f32 %v61, %v233
  %v235 = vpop.f32.mrb[0].mxu0
  %236 = vmatprep.mubr.bf16.mxu0 %v188
  %237 = vmatmul.mubr.bf16.gmra.mrb[0].mxu0 %v119
  %v238 = vpop.f32.mrb[0].mxu0
  %v239 = vadd.f32 %v66, %v238
  %v240 = vpop.f32.mrb[0].mxu0
  %v241 = vpop.f32.mrb[0].mxu0
  %v242 = vadd.f32 %v71, %v241
  %v243 = vpop.f32.mrb[0].mxu0
  %244 = vmatprep.mubr.bf16.mxu0 %v191
  %245 = vmatmul.mubr.bf16.gmra.mrb[0].mxu0 %v121
  %v246 = vpop.f32.mrb[0].mxu0
  %v247 = vadd.f32 %v76, %v246
  %v248 = vpop.f32.mrb[0].mxu0
  %v249 = vpop.f32.mrb[0].mxu0
  %v250 = vadd.f32 %v81, %v249
  %v251 = vpop.f32.mrb[0].mxu0
  %252 = vmatprep.mubr.bf16.mxu0 %v194
  %253 = vmatmul.mubr.bf16.gmra.mrb[0].mxu0 %v123
  %v254 = vpop.f32.mrb[0].mxu0
  %v255 = vadd.f32 %v86, %v254
  %v256 = vpop.f32.mrb[0].mxu0
  %v257 = vpop.f32.mrb[0].mxu0
  %v258 = vadd.f32 %v91, %v257
  %v259 = vpop.f32.mrb[0].mxu0
  %260 = vdwg.mxu0
  %s261 = sld [smem:[#allocation2]]
  %v262 = vsel %vm183, %v231, 0.0
  %263 = vadd.xlane.f32.xlu0 %v262
  %v264 = vpop.xlane.xlu0 %263
  %v265 = vsel %vm183, %v234, 0.0
  %266 = vadd.xlane.f32.xlu0 %v265
  %v267 = vpop.xlane.xlu0 %266
  %v268 = vsel %vm183, %v239, 0.0
  %269 = vadd.xlane.f32.xlu0 %v268
  %v270 = vpop.xlane.xlu0 %269
  %v271 = vsel %vm183, %v242, 0.0
  %272 = vadd.xlane.f32.xlu0 %v271
  %v273 = vpop.xlane.xlu0 %272
  %v274 = vrcp.pop 16.0
  %v275 = vmul.f32 %v264, %v274
  %v276 = vmul.f32 %v267, %v274
  %v277 = vmul.f32 %v270, %v274
  %v278 = vmul.f32 %v273, %v274
  %v279 = vsub.f32 %v231, %v275
  %v280 = vsub.f32 %v234, %v276
  %v281 = vsub.f32 %v239, %v277
  %v282 = vsub.f32 %v242, %v278
  %v283 = vmul.f32 %v279, %v279
  %v284 = vmul.f32 %v280, %v280
  %v285 = vmul.f32 %v281, %v281
  %v286 = vmul.f32 %v282, %v282
  %v287 = vsel %vm183, %v283, 0.0
  %288 = vadd.xlane.f32.xlu0 %v287
  %v289 = vpop.xlane.xlu0 %288
  %v290 = vsel %vm183, %v284, 0.0
  %291 = vadd.xlane.f32.xlu0 %v290
  %v292 = vpop.xlane.xlu0 %291
  %v293 = vsel %vm183, %v285, 0.0
  %294 = vadd.xlane.f32.xlu0 %v293
  %v295 = vpop.xlane.xlu0 %294
  %v296 = vsel %vm183, %v286, 0.0
  %297 = vadd.xlane.f32.xlu0 %v296
  %v298 = vpop.xlane.xlu0 %297
  %v299 = vmul.f32 %v289, %v274
  %v300 = vmul.f32 %v292, %v274
  %v301 = vmul.f32 %v295, %v274
  %v302 = vmul.f32 %v298, %v274
  %v303 = vadd.f32 %v299, 1e-05
  %v304 = vadd.f32 %v300, 1e-05
  %v305 = vadd.f32 %v301, 1e-05
  %v306 = vadd.f32 %v302, 1e-05
  %v307 = vrsqrt.pop %v303
  %v308 = vrsqrt.pop %v304
  %v309 = vrsqrt.pop %v305
  %v310 = vrsqrt.pop %v306
  %v311 = vmul.f32 %v279, %v307
  %v312 = vmul.f32 %v280, %v308
  %v313 = vmul.f32 %v281, %v309
  %v314 = vmul.f32 %v282, %v310
  %vm315 = vcmp.gt.f32.partialorder %v311, 0.0
  %vm316 = vcmp.gt.f32.partialorder %v312, 0.0
  %vm317 = vcmp.gt.f32.partialorder %v313, 0.0
  %vm318 = vcmp.gt.f32.partialorder %v314, 0.0
  %v319 = vstv %s261
  %v320 = vmul.f32 %v319, %v311
  %v321 = vmul.f32 %v319, %v312
  %v322 = vmul.f32 %v319, %v313
  %v323 = vmul.f32 %v319, %v314
  %v324 = vsel %vm315, %v311, %v320
  %v325 = vsel %vm316, %v312, %v321
  %v326 = vsel %vm317, %v313, %v322
  %v327 = vsel %vm318, %v314, %v323
  %332 = vrot.lane.b32.xlu0 %v231, 112
  %v333 = vpop.permute.xlu0 %332
  %334 = vrot.lane.b32.xlu0 %v234, 112
  %v335 = vpop.permute.xlu0 %334
  %336 = vrot.lane.b32.xlu0 %v239, 112
  %v337 = vpop.permute.xlu0 %336
  %338 = vrot.lane.b32.xlu0 %v242, 112
  %v339 = vpop.permute.xlu0 %338
  %v344 = vsel %vm183, %v333, 0.0
  %345 = vadd.xlane.f32.xlu0 %v344
  %v346 = vpop.xlane.xlu0 %345
  %v347 = vsel %vm183, %v335, 0.0
  %348 = vadd.xlane.f32.xlu0 %v347
  %v349 = vpop.xlane.xlu0 %348
  %v350 = vsel %vm183, %v337, 0.0
  %351 = vadd.xlane.f32.xlu0 %v350
  %v352 = vpop.xlane.xlu0 %351
  %v353 = vsel %vm183, %v339, 0.0
  %354 = vadd.xlane.f32.xlu0 %v353
  %v355 = vpop.xlane.xlu0 %354
  %v356 = vmul.f32 %v346, %v274
  %v357 = vmul.f32 %v349, %v274
  %v358 = vmul.f32 %v352, %v274
  %v359 = vmul.f32 %v355, %v274
  %v360 = vsub.f32 %v231, %v356
  %v361 = vsub.f32 %v234, %v357
  %v362 = vsub.f32 %v239, %v358
  %v363 = vsub.f32 %v242, %v359
  %v364 = vmul.f32 %v360, %v360
  %v365 = vmul.f32 %v361, %v361
  %v366 = vmul.f32 %v362, %v362
  %v367 = vmul.f32 %v363, %v363
  %372 = vrot.lane.b32.xlu0 %v364, 112
  %v373 = vpop.permute.xlu0 %372
  %374 = vrot.lane.b32.xlu0 %v365, 112
  %v375 = vpop.permute.xlu0 %374
  %376 = vrot.lane.b32.xlu0 %v366, 112
  %v377 = vpop.permute.xlu0 %376
  %378 = vrot.lane.b32.xlu0 %v367, 112
  %v379 = vpop.permute.xlu0 %378
  %v384 = vsel %vm183, %v373, 0.0
  %385 = vadd.xlane.f32.xlu0 %v384
  %v386 = vpop.xlane.xlu0 %385
  %v387 = vsel %vm183, %v375, 0.0
  %388 = vadd.xlane.f32.xlu0 %v387
  %v389 = vpop.xlane.xlu0 %388
  %v390 = vsel %vm183, %v377, 0.0
  %391 = vadd.xlane.f32.xlu0 %v390
  %v392 = vpop.xlane.xlu0 %391
  %v393 = vsel %vm183, %v379, 0.0
  %394 = vadd.xlane.f32.xlu0 %v393
  %v395 = vpop.xlane.xlu0 %394
  %v396 = vmul.f32 %v386, %v274
  %v397 = vmul.f32 %v389, %v274
  %v398 = vmul.f32 %v392, %v274
  %v399 = vmul.f32 %v395, %v274
  %v400 = vadd.f32 %v396, 1e-05
  %v401 = vadd.f32 %v397, 1e-05
  %v402 = vadd.f32 %v398, 1e-05
  %v403 = vadd.f32 %v399, 1e-05
  %v404 = vrsqrt.pop %v400
  %v405 = vrsqrt.pop %v401
  %v406 = vrsqrt.pop %v402
  %v407 = vrsqrt.pop %v403
  %v408 = vmul.f32 %v360, %v404
  %v409 = vmul.f32 %v361, %v405
  %v410 = vmul.f32 %v362, %v406
  %v411 = vmul.f32 %v363, %v407
  %vm412 = vcmp.gt.f32.partialorder %v408, 0.0
  %vm413 = vcmp.gt.f32.partialorder %v409, 0.0
  %vm414 = vcmp.gt.f32.partialorder %v410, 0.0
  %vm415 = vcmp.gt.f32.partialorder %v411, 0.0
  %v416 = vmul.f32 %v319, %v408
  %v417 = vmul.f32 %v319, %v409
  %v418 = vmul.f32 %v319, %v410
  %v419 = vmul.f32 %v319, %v411
  %v420 = vsel %vm412, %v408, %v416
  %v421 = vsel %vm413, %v409, %v417
  %v422 = vsel %vm414, %v410, %v418
  %v423 = vsel %vm415, %v411, %v419
  %v424 = vsel %vm183, %v324, %v420
  %v425 = vsel %vm183, %v325, %v421
  %v426 = vsel %vm183, %v326, %v422
  %v427 = vsel %vm183, %v327, %v423
  %v428 = vadd.f32 %v424, %v247
  %v429 = vadd.f32 %v425, %v250
  %v430 = vadd.f32 %v426, %v255
  %v431 = vadd.f32 %v427, %v258
  %v432 = vpack.c.bf16 %v429, %v428
  %v433 = vpack.c.bf16 %v431, %v430
  %v436 = vunpack.c.l.b16 %v432
  %v437 = vunpack.c.h.b16 %v432
  %v438 = vunpack.c.l.b16 %v433
  %v439 = vunpack.c.h.b16 %v433
  %v440 = vpack.c.b16 %v436, %v436
  %v441 = vpack.c.b16 %v437, %v437
  %v442 = vpack.c.b16 %v438, %v438
  %v443 = vpack.c.b16 %v439, %v439
  %vm448 = vcmask 257024
  %449 = vst.msk [vmem:[%s4] sm:$0xf] %vm448, %v440
  %450 = vst.msk [vmem:[%s4 + $0x4] sm:$0xf] %vm448, %v441
  %451 = vst.msk [vmem:[%s4 + $0x8] sm:$0xf] %vm448, %v442
  %452 = vst.msk [vmem:[%s4 + $0xc] sm:$0xf] %vm448, %v443
  // Predicated region
  $region18: #{unet_forward.9} parent=0 // pred_check
    _
  $region19: #{unet_forward.9} parent=0 // pred_check_branch
    %454 = sbr.rel (0) target = $region21
  $region20: #{unet_forward.9} parent=0 // pred_region
    _
  $region21: #{unet_forward.9} parent=0 // pred_fallthru
    _
  // Predicated region
  $region22: #{unet_forward.9} parent=0 // pred_check
    _
  $region23: #{unet_forward.9} parent=0 // pred_check_branch
    %456 = sbr.rel (0) target = $region25
  $region24: #{unet_forward.9} parent=0 // pred_region
    _
  $region25: #{unet_forward.9} parent=0 // pred_fallthru
    _

// kernel: unet_forward.10
$region0: #{unet_forward.10}
  #allocation0 [shape = 'u32[]', space=smem, size = 0x4, offset = 0x4, fixed_abs, tag = 'smem constant byte address 0x4 - core index']
  #allocation1 [shape = 'u32[144,128]{1,0:T(1,128)}', space=vmem, size = 0x12000, scoped, tag = 'internal scratch']
  #allocation2 [shape = 'f32[1,1]{1,0:T(1,128)S(6)}', space=smem, size = 0x200, scoped, tag = 'scoped memory for unet_forward.10']
  %s0 = inlined_call_operand.vmem [shape: bf16[1,192,32], index: 0, kind: input, shape index: {}]
  %s1 = inlined_call_operand.vmem [shape: bf16[32,192], index: 1, kind: input, shape index: {}]
  %s2 = inlined_call_operand.vmem [shape: f32[32,1], index: 2, kind: input, shape index: {}]
  %s3 = inlined_call_operand.<no memory space> [shape: f32[1,1], index: 3, kind: input, shape index: {}]
  %s4 = inlined_call_operand.vmem [shape: bf16[1,32,32], index: 4, kind: output, shape index: {}]
  %s5 = sld [smem:[#allocation0]]
  $region26: #{unet_forward.10} parent=0
    _
  %s7 = ssub.s32 1, %s5
  %s8 = scalar_select 0, %s7, %s5
  %9 = sst [smem:[#allocation2]] %s3
  // Predicated region
  $region2: #{unet_forward.10} parent=0 // pred_check
    _
  $region3: #{unet_forward.10} parent=0 // pred_check_branch
    %11 = sbr.rel (0) target = $region5
  $region4: #{unet_forward.10} parent=0 // pred_region
    _
  $region5: #{unet_forward.10} parent=0 // pred_fallthru
    _
  // Predicated region
  $region6: #{unet_forward.10} parent=0 // pred_check
    _
  $region7: #{unet_forward.10} parent=0 // pred_check_branch
    %13 = sbr.rel (0) target = $region9
  $region8: #{unet_forward.10} parent=0 // pred_region
    _
  $region9: #{unet_forward.10} parent=0 // pred_fallthru
    _
  // Predicated region
  $region10: #{unet_forward.10} parent=0 // pred_check
    _
  $region11: #{unet_forward.10} parent=0 // pred_check_branch
    %15 = sbr.rel (0) target = $region13
  $region12: #{unet_forward.10} parent=0 // pred_region
    _
  $region13: #{unet_forward.10} parent=0 // pred_fallthru
    _
  // Predicated region
  $region14: #{unet_forward.10} parent=0 // pred_check
    _
  $region15: #{unet_forward.10} parent=0 // pred_check_branch
    %17 = sbr.rel (0) target = $region17
  $region16: #{unet_forward.10} parent=0 // pred_region
    _
  $region17: #{unet_forward.10} parent=0 // pred_fallthru
    _
  %v19 = vld [vmem:[%s0] sm:$0xf]
  %v20 = vld [vmem:[%s0 + $0x4] sm:$0xf]
  %v21 = vld [vmem:[%s0 + $0x8] sm:$0xf]
  %v22 = vld [vmem:[%s0 + $0xc] sm:$0xf]
  %v23 = vld [vmem:[%s0 + $0x10] sm:$0xf]
  %v24 = vld [vmem:[%s0 + $0x14] sm:$0xf]
  %v25 = vld [vmem:[%s0 + $0x18] sm:$0xf]
  %v26 = vld [vmem:[%s0 + $0x1c] sm:$0xf]
  %v27 = vld [vmem:[%s0 + $0x20] sm:$0xf]
  %v28 = vld [vmem:[%s0 + $0x24] sm:$0xf]
  %v29 = vld [vmem:[%s0 + $0x28] sm:$0xf]
  %v30 = vld [vmem:[%s0 + $0x2c] sm:$0xf]
  %v31 = vld [vmem:[%s0 + $0x30] sm:$0xf]
  %v32 = vld [vmem:[%s0 + $0x34] sm:$0xf]
  %v33 = vld [vmem:[%s0 + $0x38] sm:$0xf]
  %v34 = vld [vmem:[%s0 + $0x3c] sm:$0xf]
  %v35 = vld [vmem:[%s0 + $0x40] sm:$0xf]
  %v36 = vld [vmem:[%s0 + $0x44] sm:$0xf]
  %v37 = vld [vmem:[%s0 + $0x48] sm:$0xf]
  %v38 = vld [vmem:[%s0 + $0x4c] sm:$0xf]
  %v39 = vld [vmem:[%s0 + $0x50] sm:$0xf]
  %v40 = vld [vmem:[%s0 + $0x54] sm:$0xf]
  %v41 = vld [vmem:[%s0 + $0x58] sm:$0xf]
  %v42 = vld [vmem:[%s0 + $0x5c] sm:$0xf]
  %v43 = vld [vmem:[%s1] sm:$0xff]
  %v44 = vld [vmem:[%s1 + $0x8] sm:$0xff]
  %v45 = vld [vmem:[%s1 + $0x10] sm:$0xff]
  %v46 = vld [vmem:[%s1 + $0x18] sm:$0xff]
  %v47 = vld [vmem:[%s2] sm:$0xff]
  %v48 = vld [vmem:[%s2 + $0x8] sm:$0xff]
  %v49 = vld [vmem:[%s2 + $0x10] sm:$0xff]
  %v50 = vld [vmem:[%s2 + $0x18] sm:$0xff]
  %52 = vset.pattern.permute.xlu0 0
  %53 = vperm.xlu0 %52, %v47
  %v54 = vpop.permute.xlu0 %53
  %57 = vset.pattern.permute.xlu0 0
  %58 = vperm.xlu0 %57, %v48
  %v59 = vpop.permute.xlu0 %58
  %62 = vset.pattern.permute.xlu0 0
  %63 = vperm.xlu0 %62, %v49
  %v64 = vpop.permute.xlu0 %63
  %67 = vset.pattern.permute.xlu0 0
  %68 = vperm.xlu0 %67, %v50
  %v69 = vpop.permute.xlu0 %68
  %v75 = vunpack.c.l.b16 %v43
  %v76 = vunpack.c.h.b16 %v43
  %v77 = vunpack.c.l.b16 %v44
  %v78 = vunpack.c.h.b16 %v44
  %v79 = vunpack.c.l.b16 %v45
  %v80 = vunpack.c.h.b16 %v45
  %v81 = vunpack.c.l.b16 %v46
  %v82 = vunpack.c.h.b16 %v46
  %v83 = vpack.c.b16 %v77, %v75
  %v84 = vpack.c.b16 %v78, %v76
  %v85 = vpack.c.b16 %v81, %v79
  %v86 = vpack.c.b16 %v82, %v80
  %v113 = vunpack.c.l.b16 %v19
  %v114 = vunpack.c.l.b16 %v20
  %v115 = vunpack.c.l.b16 %v21
  %v116 = vunpack.c.l.b16 %v22
  %v117 = vunpack.c.l.b16 %v23
  %v118 = vunpack.c.l.b16 %v24
  %v119 = vunpack.c.l.b16 %v25
  %v120 = vunpack.c.l.b16 %v26
  %v121 = vunpack.c.l.b16 %v27
  %v122 = vunpack.c.l.b16 %v28
  %v123 = vunpack.c.l.b16 %v29
  %v124 = vunpack.c.l.b16 %v30
  %v125 = vunpack.c.l.b16 %v31
  %v126 = vunpack.c.l.b16 %v32
  %v127 = vunpack.c.l.b16 %v33
  %v128 = vunpack.c.l.b16 %v34
  %v129 = vunpack.c.l.b16 %v35
  %v130 = vunpack.c.l.b16 %v36
  %v131 = vunpack.c.l.b16 %v37
  %v132 = vunpack.c.l.b16 %v38
  %v133 = vunpack.c.l.b16 %v39
  %v134 = vunpack.c.l.b16 %v40
  %v135 = vunpack.c.l.b16 %v41
  %v136 = vunpack.c.l.b16 %v42
  %v137 = vpack.c.b16 %v114, %v113
  %v138 = vpack.c.b16 %v116, %v115
  %v139 = vpack.c.b16 %v118, %v117
  %v140 = vpack.c.b16 %v120, %v119
  %v141 = vpack.c.b16 %v122, %v121
  %v142 = vpack.c.b16 %v124, %v123
  %v143 = vpack.c.b16 %v126, %v125
  %v144 = vpack.c.b16 %v128, %v127
  %v145 = vpack.c.b16 %v130, %v129
  %v146 = vpack.c.b16 %v132, %v131
  %v147 = vpack.c.b16 %v134, %v133
  %v148 = vpack.c.b16 %v136, %v135
  %vm161 = vcmask 523264
  %v163 = vsel %vm161, %v84, 0
  %v166 = vsel %vm161, %v86, 0
  %168 = vmatprep.subr.bf16.mxu0 0
  %169 = vmatpush1.bf16.msra.mxu0 %v137
  %170 = vmatprep.subr.bf16.mxu0 0
  %171 = vmatpush1.bf16.msra.mxu0 %v138
  %172 = vmatprep.subr.bf16.mxu0 0
  %173 = vmatpush1.bf16.msra.mxu0 %v139
  %174 = vmatprep.subr.bf16.mxu0 0
  %175 = vmatpush1.bf16.msra.mxu0 %v140
  %176 = vmatprep.subr.bf16.mxu0 0
  %177 = vmatpush1.bf16.msra.mxu0 %v141
  %178 = vmatprep.subr.bf16.mxu0 0
  %179 = vmatpush1.bf16.msra.mxu0 %v142
  %180 = vmatprep.subr.bf16.mxu0 0
  %181 = vmatpush1.bf16.msra.mxu0 %v143
  %182 = vmatprep.subr.bf16.mxu0 0
  %183 = vmatpush1.bf16.msra.mxu0 %v144
  %184 = vmatprep.subr.bf16.mxu0 0
  %185 = vmatpush1.bf16.msra.mxu0 %v145
  %186 = vmatprep.subr.bf16.mxu0 0
  %187 = vmatpush1.bf16.msra.mxu0 %v146
  %188 = vmatprep.subr.bf16.mxu0 0
  %189 = vmatpush1.bf16.msra.mxu0 %v147
  %190 = vmatprep.subr.bf16.mxu0 0
  %191 = vmatpush1.bf16.msra.mxu0 %v148
  %192 = vmatprep.subr.bf16.mxu0 0
  %193 = vmatpush1.bf16.msra.mxu0 0
  %194 = vmatprep.subr.bf16.mxu0 0
  %195 = vmatpush1.bf16.msra.mxu0 0
  %196 = vmatprep.subr.bf16.mxu0 0
  %197 = vmatpush1.bf16.msra.mxu0 0
  %198 = vmatprep.subr.bf16.mxu0 0
  %199 = vmatpush1.bf16.msra.mxu0 0
  %200 = vmatprep.mubr.bf16.mxu0 %v163
  %201 = vmatmul.mubr.bf16.gmra.mrb[0].mxu0 %v83
  %v202 = vpop.f32.mrb[0].mxu0
  %v203 = vadd.f32 %v54, %v202
  %v204 = vpop.f32.mrb[0].mxu0
  %v205 = vpop.f32.mrb[0].mxu0
  %v206 = vadd.f32 %v59, %v205
  %v207 = vpop.f32.mrb[0].mxu0
  %208 = vmatprep.mubr.bf16.mxu0 %v166
  %209 = vmatmul.mubr.bf16.gmra.mrb[0].mxu0 %v85
  %v210 = vpop.f32.mrb[0].mxu0
  %v211 = vadd.f32 %v64, %v210
  %v212 = vpop.f32.mrb[0].mxu0
  %v213 = vpop.f32.mrb[0].mxu0
  %v214 = vadd.f32 %v69, %v213
  %v215 = vpop.f32.mrb[0].mxu0
  %216 = vdwg.mxu0
  %s217 = sld [smem:[#allocation2]]
  %vm218 = vcmask 130048
  %v219 = vsel %vm218, %v203, 0.0
  %220 = vadd.xlane.f32.xlu0 %v219
  %v221 = vpop.xlane.xlu0 %220
  %v222 = vsel %vm218, %v206, 0.0
  %223 = vadd.xlane.f32.xlu0 %v222
  %v224 = vpop.xlane.xlu0 %223
  %v225 = vsel %vm218, %v211, 0.0
  %226 = vadd.xlane.f32.xlu0 %v225
  %v227 = vpop.xlane.xlu0 %226
  %v228 = vsel %vm218, %v214, 0.0
  %229 = vadd.xlane.f32.xlu0 %v228
  %v230 = vpop.xlane.xlu0 %229
  %v231 = vrcp.pop 16.0
  %v232 = vmul.f32 %v221, %v231
  %v233 = vmul.f32 %v224, %v231
  %v234 = vmul.f32 %v227, %v231
  %v235 = vmul.f32 %v230, %v231
  %v236 = vadd.f32 %v232, %v233
  %v237 = vadd.f32 %v236, %v234
  %v238 = vadd.f32 %v237, %v235
  %v239 = vmul.f32 %v238, 0.25
  %241 = vset.pattern.permute.xlu0 0
  %242 = vperm.xlu0 %241, %v239
  %v243 = vpop.permute.xlu0 %242
  %v245 = vsub.f32 %v203, %v243
  %v246 = vsub.f32 %v206, %v243
  %v247 = vsub.f32 %v211, %v243
  %v248 = vsub.f32 %v214, %v243
  %v249 = vmul.f32 %v245, %v245
  %v250 = vmul.f32 %v246, %v246
  %v251 = vmul.f32 %v247, %v247
  %v252 = vmul.f32 %v248, %v248
  %v253 = vsel %vm218, %v249, 0.0
  %254 = vadd.xlane.f32.xlu0 %v253
  %v255 = vpop.xlane.xlu0 %254
  %v256 = vsel %vm218, %v250, 0.0
  %257 = vadd.xlane.f32.xlu0 %v256
  %v258 = vpop.xlane.xlu0 %257
  %v259 = vsel %vm218, %v251, 0.0
  %260 = vadd.xlane.f32.xlu0 %v259
  %v261 = vpop.xlane.xlu0 %260
  %v262 = vsel %vm218, %v252, 0.0
  %263 = vadd.xlane.f32.xlu0 %v262
  %v264 = vpop.xlane.xlu0 %263
  %v265 = vmul.f32 %v255, %v231
  %v266 = vmul.f32 %v258, %v231
  %v267 = vmul.f32 %v261, %v231
  %v268 = vmul.f32 %v264, %v231
  %v269 = vadd.f32 %v265, %v266
  %v270 = vadd.f32 %v269, %v267
  %v271 = vadd.f32 %v270, %v268
  %v272 = vmul.f32 %v271, 0.25
  %v273 = vadd.f32 %v272, 1e-05
  %v274 = vrsqrt.pop %v273
  %276 = vset.pattern.permute.xlu0 0
  %277 = vperm.xlu0 %276, %v274
  %v278 = vpop.permute.xlu0 %277
  %v280 = vmul.f32 %v245, %v278
  %v281 = vmul.f32 %v246, %v278
  %v282 = vmul.f32 %v247, %v278
  %v283 = vmul.f32 %v248, %v278
  %vm284 = vcmp.gt.f32.partialorder %v280, 0.0
  %vm285 = vcmp.gt.f32.partialorder %v281, 0.0
  %vm286 = vcmp.gt.f32.partialorder %v282, 0.0
  %vm287 = vcmp.gt.f32.partialorder %v283, 0.0
  %v288 = vstv %s217
  %v289 = vmul.f32 %v288, %v280
  %v290 = vmul.f32 %v288, %v281
  %v291 = vmul.f32 %v288, %v282
  %v292 = vmul.f32 %v288, %v283
  %v293 = vsel %vm284, %v280, %v289
  %v294 = vsel %vm285, %v281, %v290
  %v295 = vsel %vm286, %v282, %v291
  %v296 = vsel %vm287, %v283, %v292
  %301 = vrot.lane.b32.xlu0 %v203, 112
  %v302 = vpop.permute.xlu0 %301
  %303 = vrot.lane.b32.xlu0 %v206, 112
  %v304 = vpop.permute.xlu0 %303
  %305 = vrot.lane.b32.xlu0 %v211, 112
  %v306 = vpop.permute.xlu0 %305
  %307 = vrot.lane.b32.xlu0 %v214, 112
  %v308 = vpop.permute.xlu0 %307
  %v313 = vsel %vm218, %v302, 0.0
  %314 = vadd.xlane.f32.xlu0 %v313
  %v315 = vpop.xlane.xlu0 %314
  %v316 = vsel %vm218, %v304, 0.0
  %317 = vadd.xlane.f32.xlu0 %v316
  %v318 = vpop.xlane.xlu0 %317
  %v319 = vsel %vm218, %v306, 0.0
  %320 = vadd.xlane.f32.xlu0 %v319
  %v321 = vpop.xlane.xlu0 %320
  %v322 = vsel %vm218, %v308, 0.0
  %323 = vadd.xlane.f32.xlu0 %v322
  %v324 = vpop.xlane.xlu0 %323
  %v325 = vmul.f32 %v315, %v231
  %v326 = vmul.f32 %v318, %v231
  %v327 = vmul.f32 %v321, %v231
  %v328 = vmul.f32 %v324, %v231
  %v329 = vadd.f32 %v325, %v326
  %v330 = vadd.f32 %v329, %v327
  %v331 = vadd.f32 %v330, %v328
  %v332 = vmul.f32 %v331, 0.25
  %334 = vset.pattern.permute.xlu0 0
  %335 = vperm.xlu0 %334, %v332
  %v336 = vpop.permute.xlu0 %335
  %v338 = vsub.f32 %v203, %v336
  %v339 = vsub.f32 %v206, %v336
  %v340 = vsub.f32 %v211, %v336
  %v341 = vsub.f32 %v214, %v336
  %v342 = vmul.f32 %v338, %v338
  %v343 = vmul.f32 %v339, %v339
  %v344 = vmul.f32 %v340, %v340
  %v345 = vmul.f32 %v341, %v341
  %350 = vrot.lane.b32.xlu0 %v342, 112
  %v351 = vpop.permute.xlu0 %350
  %352 = vrot.lane.b32.xlu0 %v343, 112
  %v353 = vpop.permute.xlu0 %352
  %354 = vrot.lane.b32.xlu0 %v344, 112
  %v355 = vpop.permute.xlu0 %354
  %356 = vrot.lane.b32.xlu0 %v345, 112
  %v357 = vpop.permute.xlu0 %356
  %v362 = vsel %vm218, %v351, 0.0
  %363 = vadd.xlane.f32.xlu0 %v362
  %v364 = vpop.xlane.xlu0 %363
  %v365 = vsel %vm218, %v353, 0.0
  %366 = vadd.xlane.f32.xlu0 %v365
  %v367 = vpop.xlane.xlu0 %366
  %v368 = vsel %vm218, %v355, 0.0
  %369 = vadd.xlane.f32.xlu0 %v368
  %v370 = vpop.xlane.xlu0 %369
  %v371 = vsel %vm218, %v357, 0.0
  %372 = vadd.xlane.f32.xlu0 %v371
  %v373 = vpop.xlane.xlu0 %372
  %v374 = vmul.f32 %v364, %v231
  %v375 = vmul.f32 %v367, %v231
  %v376 = vmul.f32 %v370, %v231
  %v377 = vmul.f32 %v373, %v231
  %v378 = vadd.f32 %v374, %v375
  %v379 = vadd.f32 %v378, %v376
  %v380 = vadd.f32 %v379, %v377
  %v381 = vmul.f32 %v380, 0.25
  %v382 = vadd.f32 %v381, 1e-05
  %v383 = vrsqrt.pop %v382
  %385 = vset.pattern.permute.xlu0 0
  %386 = vperm.xlu0 %385, %v383
  %v387 = vpop.permute.xlu0 %386
  %v389 = vmul.f32 %v338, %v387
  %v390 = vmul.f32 %v339, %v387
  %v391 = vmul.f32 %v340, %v387
  %v392 = vmul.f32 %v341, %v387
  %vm393 = vcmp.gt.f32.partialorder %v389, 0.0
  %vm394 = vcmp.gt.f32.partialorder %v390, 0.0
  %vm395 = vcmp.gt.f32.partialorder %v391, 0.0
  %vm396 = vcmp.gt.f32.partialorder %v392, 0.0
  %v397 = vmul.f32 %v288, %v389
  %v398 = vmul.f32 %v288, %v390
  %v399 = vmul.f32 %v288, %v391
  %v400 = vmul.f32 %v288, %v392
  %v401 = vsel %vm393, %v389, %v397
  %v402 = vsel %vm394, %v390, %v398
  %v403 = vsel %vm395, %v391, %v399
  %v404 = vsel %vm396, %v392, %v400
  %v405 = vsel %vm218, %v293, %v401
  %v406 = vsel %vm218, %v294, %v402
  %v407 = vsel %vm218, %v295, %v403
  %v408 = vsel %vm218, %v296, %v404
  %v409 = vpack.c.bf16 %v406, %v405
  %v410 = vpack.c.bf16 %v408, %v407
  %v413 = vunpack.c.l.b16 %v409
  %v414 = vunpack.c.h.b16 %v409
  %v415 = vunpack.c.l.b16 %v410
  %v416 = vunpack.c.h.b16 %v410
  %v417 = vpack.c.b16 %v413, %v413
  %v418 = vpack.c.b16 %v414, %v414
  %v419 = vpack.c.b16 %v415, %v415
  %v420 = vpack.c.b16 %v416, %v416
  %vm425 = vcmask 257024
  %426 = vst.msk [vmem:[%s4] sm:$0xf] %vm425, %v417
  %427 = vst.msk [vmem:[%s4 + $0x4] sm:$0xf] %vm425, %v418
  %428 = vst.msk [vmem:[%s4 + $0x8] sm:$0xf] %vm425, %v419
  %429 = vst.msk [vmem:[%s4 + $0xc] sm:$0xf] %vm425, %v420
  // Predicated region
  $region18: #{unet_forward.10} parent=0 // pred_check
    _
  $region19: #{unet_forward.10} parent=0 // pred_check_branch
    %431 = sbr.rel (0) target = $region21
  $region20: #{unet_forward.10} parent=0 // pred_region
    _
  $region21: #{unet_forward.10} parent=0 // pred_fallthru
    _
  // Predicated region
  $region22: #{unet_forward.10} parent=0 // pred_check
    _
  $region23: #{unet_forward.10} parent=0 // pred_check_branch
    %433 = sbr.rel (0) target = $region25
  $region24: #{unet_forward.10} parent=0 // pred_region
    _
  $region25: #{unet_forward.10} parent=0 // pred_fallthru
    _

// kernel: unet_forward.11
$region0: #{unet_forward.11}
  #allocation0 [shape = 'u32[]', space=smem, size = 0x4, offset = 0x4, fixed_abs, tag = 'smem constant byte address 0x4 - core index']
  #allocation1 [shape = 'u32[144,128]{1,0:T(1,128)}', space=vmem, size = 0x12000, scoped, tag = 'internal scratch']
  #allocation2 [shape = 'f32[1,1]{1,0:T(1,128)S(6)}', space=smem, size = 0x200, scoped, tag = 'scoped memory for unet_forward.11']
  %s0 = inlined_call_operand.vmem [shape: bf16[1,72,128], index: 0, kind: input, shape index: {}]
  %s1 = inlined_call_operand.vmem [shape: bf16[16,72], index: 1, kind: input, shape index: {}]
  %s2 = inlined_call_operand.vmem [shape: f32[16,1], index: 2, kind: input, shape index: {}]
  %s3 = inlined_call_operand.<no memory space> [shape: f32[1,1], index: 3, kind: input, shape index: {}]
  %s4 = inlined_call_operand.vmem [shape: bf16[1,8,128], index: 4, kind: output, shape index: {}]
  %s5 = sld [smem:[#allocation0]]
  $region26: #{unet_forward.11} parent=0
    _
  %s7 = ssub.s32 1, %s5
  %s8 = scalar_select 0, %s7, %s5
  %9 = sst [smem:[#allocation2]] %s3
  // Predicated region
  $region2: #{unet_forward.11} parent=0 // pred_check
    _
  $region3: #{unet_forward.11} parent=0 // pred_check_branch
    %11 = sbr.rel (0) target = $region5
  $region4: #{unet_forward.11} parent=0 // pred_region
    _
  $region5: #{unet_forward.11} parent=0 // pred_fallthru
    _
  // Predicated region
  $region6: #{unet_forward.11} parent=0 // pred_check
    _
  $region7: #{unet_forward.11} parent=0 // pred_check_branch
    %13 = sbr.rel (0) target = $region9
  $region8: #{unet_forward.11} parent=0 // pred_region
    _
  $region9: #{unet_forward.11} parent=0 // pred_fallthru
    _
  // Predicated region
  $region10: #{unet_forward.11} parent=0 // pred_check
    _
  $region11: #{unet_forward.11} parent=0 // pred_check_branch
    %15 = sbr.rel (0) target = $region13
  $region12: #{unet_forward.11} parent=0 // pred_region
    _
  $region13: #{unet_forward.11} parent=0 // pred_fallthru
    _
  // Predicated region
  $region14: #{unet_forward.11} parent=0 // pred_check
    _
  $region15: #{unet_forward.11} parent=0 // pred_check_branch
    %17 = sbr.rel (0) target = $region17
  $region16: #{unet_forward.11} parent=0 // pred_region
    _
  $region17: #{unet_forward.11} parent=0 // pred_fallthru
    _
  %v19 = vld [vmem:[%s0] sm:$0xf]
  %v20 = vld [vmem:[%s0 + $0x4] sm:$0xf]
  %v21 = vld [vmem:[%s0 + $0x8] sm:$0xf]
  %v22 = vld [vmem:[%s0 + $0xc] sm:$0xf]
  %v23 = vld [vmem:[%s0 + $0x10] sm:$0xf]
  %v24 = vld [vmem:[%s0 + $0x14] sm:$0xf]
  %v25 = vld [vmem:[%s0 + $0x18] sm:$0xf]
  %v26 = vld [vmem:[%s0 + $0x1c] sm:$0xf]
  %v27 = vld [vmem:[%s0 + $0x20] sm:$0xf]
  %v28 = vld [vmem:[%s1] sm:$0xf]
  %v29 = vld [vmem:[%s1 + $0x4] sm:$0xf]
  %v30 = vld [vmem:[%s2] sm:$0xff]
  %v31 = vld [vmem:[%s2 + $0x8] sm:$0xff]
  %33 = vset.pattern.permute.xlu0 0
  %34 = vperm.xlu0 %33, %v30
  %v35 = vpop.permute.xlu0 %34
  %38 = vset.pattern.permute.xlu0 0
  %39 = vperm.xlu0 %38, %v31
  %v40 = vpop.permute.xlu0 %39
  %v44 = vunpack.c.l.b16 %v28
  %v45 = vunpack.c.l.b16 %v29
  %v46 = vpack.c.b16 %v45, %v44
  %v56 = vunpack.c.l.b16 %v19
  %v57 = vunpack.c.l.b16 %v20
  %v58 = vunpack.c.l.b16 %v21
  %v59 = vunpack.c.l.b16 %v22
  %v60 = vunpack.c.l.b16 %v23
  %v61 = vunpack.c.l.b16 %v24
  %v62 = vunpack.c.l.b16 %v25
  %v63 = vunpack.c.l.b16 %v26
  %v64 = vunpack.c.l.b16 %v27
  %v65 = vpack.c.b16 %v57, %v56
  %v66 = vpack.c.b16 %v59, %v58
  %v67 = vpack.c.b16 %v61, %v60
  %v68 = vpack.c.b16 %v63, %v62
  %v69 = vpack.c.b16 %v64, %v64
  %vm74 = vcmask 588800
  %v76 = vsel %vm74, %v46, 0
  %vm78 = vcmask 1043456
  %v80 = vsel %vm78, %v69, 0
  %82 = vmatprep.subr.bf16.mxu0 0
  %83 = vmatpush1.bf16.msra.mxu0 %v65
  %84 = vmatprep.subr.bf16.mxu0 0
  %85 = vmatpush1.bf16.msra.mxu0 %v66
  %86 = vmatprep.subr.bf16.mxu0 0
  %87 = vmatpush1.bf16.msra.mxu0 %v67
  %88 = vmatprep.subr.bf16.mxu0 0
  %89 = vmatpush1.bf16.msra.mxu0 %v68
  %90 = vmatprep.subr.bf16.mxu0 0
  %91 = vmatpush1.bf16.msra.mxu0 %v80
  %92 = vmatprep.subr.bf16.mxu0 0
  %93 = vmatpush1.bf16.msra.mxu0 0
  %94 = vmatprep.subr.bf16.mxu0 0
  %95 = vmatpush1.bf16.msra.mxu0 0
  %96 = vmatprep.subr.bf16.mxu0 0
  %97 = vmatpush1.bf16.msra.mxu0 0
  %98 = vmatprep.subr.bf16.mxu0 0
  %99 = vmatpush1.bf16.msra.mxu0 0
  %100 = vmatprep.subr.bf16.mxu0 0
  %101 = vmatpush1.bf16.msra.mxu0 0
  %102 = vmatprep.subr.bf16.mxu0 0
  %103 = vmatpush1.bf16.msra.mxu0 0
  %104 = vmatprep.subr.bf16.mxu0 0
  %105 = vmatpush1.bf16.msra.mxu0 0
  %106 = vmatprep.subr.bf16.mxu0 0
  %107 = vmatpush1.bf16.msra.mxu0 0
  %108 = vmatprep.subr.bf16.mxu0 0
  %109 = vmatpush1.bf16.msra.mxu0 0
  %110 = vmatprep.subr.bf16.mxu0 0
  %111 = vmatpush1.bf16.msra.mxu0 0
  %112 = vmatprep.subr.bf16.mxu0 0
  %113 = vmatpush1.bf16.msra.mxu0 0
  %114 = vmatprep.mubr.bf16.mxu0 0
  %115 = vmatmul.mubr.bf16.gmra.mrb[0].mxu0 %v76
  %v116 = vpop.f32.mrb[0].mxu0
  %v117 = vadd.f32 %v35, %v116
  %v118 = vpop.f32.mrb[0].mxu0
  %v119 = vpop.f32.mrb[0].mxu0
  %v120 = vadd.f32 %v40, %v119
  %v121 = vpop.f32.mrb[0].mxu0
  %122 = vdwg.mxu0
  %s123 = sld [smem:[#allocation2]]
  %vm124 = vcmask 523264
  %v125 = vsel %vm124, %v117, 0.0
  %126 = vadd.xlane.f32.xlu0 %v125
  %v127 = vpop.xlane.xlu0 %126
  %v128 = vrcp.pop 64.0
  %v129 = vmul.f32 %v127, %v128
  %v130 = vsub.f32 %v117, %v129
  %v131 = vmul.f32 %v130, %v130
  %v132 = vsel %vm124, %v131, 0.0
  %133 = vadd.xlane.f32.xlu0 %v132
  %v134 = vpop.xlane.xlu0 %133
  %v135 = vmul.f32 %v134, %v128
  %v136 = vadd.f32 %v135, 1e-05
  %v137 = vrsqrt.pop %v136
  %v138 = vmul.f32 %v130, %v137
  %vm139 = vcmp.gt.f32.partialorder %v138, 0.0
  %v140 = vstv %s123
  %v141 = vmul.f32 %v140, %v138
  %v142 = vsel %vm139, %v138, %v141
  %144 = vrot.lane.b32.xlu0 %v117, 64
  %v145 = vpop.permute.xlu0 %144
  %v147 = vsel %vm124, %v145, 0.0
  %148 = vadd.xlane.f32.xlu0 %v147
  %v149 = vpop.xlane.xlu0 %148
  %v150 = vmul.f32 %v149, %v128
  %v151 = vsub.f32 %v117, %v150
  %v152 = vmul.f32 %v151, %v151
  %154 = vrot.lane.b32.xlu0 %v152, 64
  %v155 = vpop.permute.xlu0 %154
  %v157 = vsel %vm124, %v155, 0.0
  %158 = vadd.xlane.f32.xlu0 %v157
  %v159 = vpop.xlane.xlu0 %158
  %v160 = vmul.f32 %v159, %v128
  %v161 = vadd.f32 %v160, 1e-05
  %v162 = vrsqrt.pop %v161
  %v163 = vmul.f32 %v151, %v162
  %vm164 = vcmp.gt.f32.partialorder %v163, 0.0
  %v165 = vmul.f32 %v140, %v163
  %v166 = vsel %vm164, %v163, %v165
  %v167 = vsel %vm124, %v142, %v166
  %v168 = vadd.f32 %v167, %v120
  %v169 = vpack.c.bf16 %v168, %v168
  %170 = vst [vmem:[%s4] sm:$0xf] %v169
  // Predicated region
  $region18: #{unet_forward.11} parent=0 // pred_check
    _
  $region19: #{unet_forward.11} parent=0 // pred_check_branch
    %172 = sbr.rel (0) target = $region21
  $region20: #{unet_forward.11} parent=0 // pred_region
    _
  $region21: #{unet_forward.11} parent=0 // pred_fallthru
    _
  // Predicated region
  $region22: #{unet_forward.11} parent=0 // pred_check
    _
  $region23: #{unet_forward.11} parent=0 // pred_check_branch
    %174 = sbr.rel (0) target = $region25
  $region24: #{unet_forward.11} parent=0 // pred_region
    _
  $region25: #{unet_forward.11} parent=0 // pred_fallthru
    _

// kernel: unet_forward.12
$region0: #{unet_forward.12}
  #allocation0 [shape = 'u32[]', space=smem, size = 0x4, offset = 0x4, fixed_abs, tag = 'smem constant byte address 0x4 - core index']
  #allocation1 [shape = 'u32[144,128]{1,0:T(1,128)}', space=vmem, size = 0x12000, scoped, tag = 'internal scratch']
  #allocation2 [shape = 'f32[1,1]{1,0:T(1,128)S(6)}', space=smem, size = 0x200, scoped, tag = 'scoped memory for unet_forward.12']
  %s0 = inlined_call_operand.vmem [shape: bf16[1,64,128], index: 0, kind: input, shape index: {}]
  %s1 = inlined_call_operand.vmem [shape: bf16[8,64], index: 1, kind: input, shape index: {}]
  %s2 = inlined_call_operand.vmem [shape: f32[8,1], index: 2, kind: input, shape index: {}]
  %s3 = inlined_call_operand.<no memory space> [shape: f32[1,1], index: 3, kind: input, shape index: {}]
  %s4 = inlined_call_operand.vmem [shape: bf16[1,8,128], index: 4, kind: output, shape index: {}]
  %s5 = sld [smem:[#allocation0]]
  $region26: #{unet_forward.12} parent=0
    _
  %s7 = ssub.s32 1, %s5
  %s8 = scalar_select 0, %s7, %s5
  %9 = sst [smem:[#allocation2]] %s3
  // Predicated region
  $region2: #{unet_forward.12} parent=0 // pred_check
    _
  $region3: #{unet_forward.12} parent=0 // pred_check_branch
    %11 = sbr.rel (0) target = $region5
  $region4: #{unet_forward.12} parent=0 // pred_region
    _
  $region5: #{unet_forward.12} parent=0 // pred_fallthru
    _
  // Predicated region
  $region6: #{unet_forward.12} parent=0 // pred_check
    _
  $region7: #{unet_forward.12} parent=0 // pred_check_branch
    %13 = sbr.rel (0) target = $region9
  $region8: #{unet_forward.12} parent=0 // pred_region
    _
  $region9: #{unet_forward.12} parent=0 // pred_fallthru
    _
  // Predicated region
  $region10: #{unet_forward.12} parent=0 // pred_check
    _
  $region11: #{unet_forward.12} parent=0 // pred_check_branch
    %15 = sbr.rel (0) target = $region13
  $region12: #{unet_forward.12} parent=0 // pred_region
    _
  $region13: #{unet_forward.12} parent=0 // pred_fallthru
    _
  // Predicated region
  $region14: #{unet_forward.12} parent=0 // pred_check
    _
  $region15: #{unet_forward.12} parent=0 // pred_check_branch
    %17 = sbr.rel (0) target = $region17
  $region16: #{unet_forward.12} parent=0 // pred_region
    _
  $region17: #{unet_forward.12} parent=0 // pred_fallthru
    _
  %v19 = vld [vmem:[%s0] sm:$0xf]
  %v20 = vld [vmem:[%s0 + $0x4] sm:$0xf]
  %v21 = vld [vmem:[%s0 + $0x8] sm:$0xf]
  %v22 = vld [vmem:[%s0 + $0xc] sm:$0xf]
  %v23 = vld [vmem:[%s0 + $0x10] sm:$0xf]
  %v24 = vld [vmem:[%s0 + $0x14] sm:$0xf]
  %v25 = vld [vmem:[%s0 + $0x18] sm:$0xf]
  %v26 = vld [vmem:[%s0 + $0x1c] sm:$0xf]
  %v27 = vld [vmem:[%s1] sm:$0xf]
  %v28 = vld [vmem:[%s2] sm:$0xff]
  %30 = vset.pattern.permute.xlu0 0
  %31 = vperm.xlu0 %30, %v28
  %v32 = vpop.permute.xlu0 %31
  %v42 = vunpack.c.l.b16 %v19
  %v43 = vunpack.c.l.b16 %v20
  %v44 = vunpack.c.l.b16 %v21
  %v45 = vunpack.c.l.b16 %v22
  %v46 = vunpack.c.l.b16 %v23
  %v47 = vunpack.c.l.b16 %v24
  %v48 = vunpack.c.l.b16 %v25
  %v49 = vunpack.c.l.b16 %v26
  %v50 = vpack.c.b16 %v43, %v42
  %v51 = vpack.c.b16 %v45, %v44
  %v52 = vpack.c.b16 %v47, %v46
  %v53 = vpack.c.b16 %v49, %v48
  %vm58 = vcmask 523264
  %v60 = vsel %vm58, %v27, 0
  %62 = vmatprep.subr.bf16.mxu0 0
  %63 = vmatpush1.bf16.msra.mxu0 %v50
  %64 = vmatprep.subr.bf16.mxu0 0
  %65 = vmatpush1.bf16.msra.mxu0 %v51
  %66 = vmatprep.subr.bf16.mxu0 0
  %67 = vmatpush1.bf16.msra.mxu0 %v52
  %68 = vmatprep.subr.bf16.mxu0 0
  %69 = vmatpush1.bf16.msra.mxu0 %v53
  %70 = vmatprep.subr.bf16.mxu0 0
  %71 = vmatpush1.bf16.msra.mxu0 0
  %72 = vmatprep.subr.bf16.mxu0 0
  %73 = vmatpush1.bf16.msra.mxu0 0
  %74 = vmatprep.subr.bf16.mxu0 0
  %75 = vmatpush1.bf16.msra.mxu0 0
  %76 = vmatprep.subr.bf16.mxu0 0
  %77 = vmatpush1.bf16.msra.mxu0 0
  %78 = vmatprep.subr.bf16.mxu0 0
  %79 = vmatpush1.bf16.msra.mxu0 0
  %80 = vmatprep.subr.bf16.mxu0 0
  %81 = vmatpush1.bf16.msra.mxu0 0
  %82 = vmatprep.subr.bf16.mxu0 0
  %83 = vmatpush1.bf16.msra.mxu0 0
  %84 = vmatprep.subr.bf16.mxu0 0
  %85 = vmatpush1.bf16.msra.mxu0 0
  %86 = vmatprep.subr.bf16.mxu0 0
  %87 = vmatpush1.bf16.msra.mxu0 0
  %88 = vmatprep.subr.bf16.mxu0 0
  %89 = vmatpush1.bf16.msra.mxu0 0
  %90 = vmatprep.subr.bf16.mxu0 0
  %91 = vmatpush1.bf16.msra.mxu0 0
  %92 = vmatprep.subr.bf16.mxu0 0
  %93 = vmatpush1.bf16.msra.mxu0 0
  %94 = vmatprep.mubr.bf16.mxu0 0
  %95 = vmatmul.mubr.bf16.gmra.mrb[0].mxu0 %v60
  %v96 = vpop.f32.mrb[0].mxu0
  %v97 = vadd.f32 %v32, %v96
  %v98 = vpop.f32.mrb[0].mxu0
  %v99 = vpop.f32.mrb[0].mxu0
  %v100 = vpop.f32.mrb[0].mxu0
  %101 = vdwg.mxu0
  %s102 = sld [smem:[#allocation2]]
  %v103 = vsel %vm58, %v97, 0.0
  %104 = vadd.xlane.f32.xlu0 %v103
  %v105 = vpop.xlane.xlu0 %104
  %v106 = vrcp.pop 64.0
  %v107 = vmul.f32 %v105, %v106
  %v109 = vrot.slane %v107, 2
  %v111 = vadd.f32 %v107, %v109
  %v112 = vrot.slane %v107, 4
  %v114 = vadd.f32 %v111, %v112
  %v115 = vrot.slane %v107, 6
  %v117 = vadd.f32 %v114, %v115
  %v118 = vmul.f32 %v117, 0.25
  %v120 = vrot.slane %v118, 6
  %v122 = vrot.slane %v118, 4
  %v124 = vrot.slane %v118, 2
  %vm126 = vcmask 1041408
  %v127 = vsel %vm126, %v118, %v120
  %vm128 = vcmask 1043456
  %v129 = vsel %vm128, %v127, %v122
  %vm130 = vcmask 1045504
  %v131 = vsel %vm130, %v129, %v124
  %133 = vset.pattern.permute.xlu0 0
  %134 = vperm.xlu0 %133, %v131
  %v135 = vpop.permute.xlu0 %134
  %v137 = vsub.f32 %v97, %v135
  %v138 = vmul.f32 %v137, %v137
  %v139 = vsel %vm58, %v138, 0.0
  %140 = vadd.xlane.f32.xlu0 %v139
  %v141 = vpop.xlane.xlu0 %140
  %v142 = vmul.f32 %v141, %v106
  %v144 = vrot.slane %v142, 2
  %v146 = vadd.f32 %v142, %v144
  %v147 = vrot.slane %v142, 4
  %v149 = vadd.f32 %v146, %v147
  %v150 = vrot.slane %v142, 6
  %v152 = vadd.f32 %v149, %v150
  %v153 = vmul.f32 %v152, 0.25
  %v155 = vrot.slane %v153, 6
  %v157 = vrot.slane %v153, 4
  %v159 = vrot.slane %v153, 2
  %v161 = vsel %vm126, %v153, %v155
  %v162 = vsel %vm128, %v161, %v157
  %v163 = vsel %vm130, %v162, %v159
  %v164 = vadd.f32 %v163, 1e-05
  %v165 = vrsqrt.pop %v164
  %167 = vset.pattern.permute.xlu0 0
  %168 = vperm.xlu0 %167, %v165
  %v169 = vpop.permute.xlu0 %168
  %v171 = vmul.f32 %v137, %v169
  %vm172 = vcmp.gt.f32.partialorder %v171, 0.0
  %v173 = vstv %s102
  %v174 = vmul.f32 %v173, %v171
  %v175 = vsel %vm172, %v171, %v174
  %177 = vrot.lane.b32.xlu0 %v97, 64
  %v178 = vpop.permute.xlu0 %177
  %v180 = vsel %vm58, %v178, 0.0
  %181 = vadd.xlane.f32.xlu0 %v180
  %v182 = vpop.xlane.xlu0 %181
  %v183 = vmul.f32 %v182, %v106
  %v185 = vrot.slane %v183, 2
  %v187 = vadd.f32 %v183, %v185
  %v188 = vrot.slane %v183, 4
  %v190 = vadd.f32 %v187, %v188
  %v191 = vrot.slane %v183, 6
  %v193 = vadd.f32 %v190, %v191
  %v194 = vmul.f32 %v193, 0.25
  %v196 = vrot.slane %v194, 6
  %v198 = vrot.slane %v194, 4
  %v200 = vrot.slane %v194, 2
  %v202 = vsel %vm126, %v194, %v196
  %v203 = vsel %vm128, %v202, %v198
  %v204 = vsel %vm130, %v203, %v200
  %206 = vset.pattern.permute.xlu0 0
  %207 = vperm.xlu0 %206, %v204
  %v208 = vpop.permute.xlu0 %207
  %v210 = vsub.f32 %v97, %v208
  %v211 = vmul.f32 %v210, %v210
  %213 = vrot.lane.b32.xlu0 %v211, 64
  %v214 = vpop.permute.xlu0 %213
  %v216 = vsel %vm58, %v214, 0.0
  %217 = vadd.xlane.f32.xlu0 %v216
  %v218 = vpop.xlane.xlu0 %217
  %v219 = vmul.f32 %v218, %v106
  %v221 = vrot.slane %v219, 2
  %v223 = vadd.f32 %v219, %v221
  %v224 = vrot.slane %v219, 4
  %v226 = vadd.f32 %v223, %v224
  %v227 = vrot.slane %v219, 6
  %v229 = vadd.f32 %v226, %v227
  %v230 = vmul.f32 %v229, 0.25
  %v232 = vrot.slane %v230, 6
  %v234 = vrot.slane %v230, 4
  %v236 = vrot.slane %v230, 2
  %v238 = vsel %vm126, %v230, %v232
  %v239 = vsel %vm128, %v238, %v234
  %v240 = vsel %vm130, %v239, %v236
  %v241 = vadd.f32 %v240, 1e-05
  %v242 = vrsqrt.pop %v241
  %244 = vset.pattern.permute.xlu0 0
  %245 = vperm.xlu0 %244, %v242
  %v246 = vpop.permute.xlu0 %245
  %v248 = vmul.f32 %v210, %v246
  %vm249 = vcmp.gt.f32.partialorder %v248, 0.0
  %v250 = vmul.f32 %v173, %v248
  %v251 = vsel %vm249, %v248, %v250
  %v252 = vsel %vm58, %v175, %v251
  %v253 = vpack.c.bf16 %v252, %v252
  %254 = vst [vmem:[%s4] sm:$0xf] %v253
  // Predicated region
  $region18: #{unet_forward.12} parent=0 // pred_check
    _
  $region19: #{unet_forward.12} parent=0 // pred_check_branch
    %256 = sbr.rel (0) target = $region21
  $region20: #{unet_forward.12} parent=0 // pred_region
    _
  $region21: #{unet_forward.12} parent=0 // pred_fallthru
    _
  // Predicated region
  $region22: #{unet_forward.12} parent=0 // pred_check
    _
  $region23: #{unet_forward.12} parent=0 // pred_check_branch
    %258 = sbr.rel (0) target = $region25
  $region24: #{unet_forward.12} parent=0 // pred_region
    _
  $region25: #{unet_forward.12} parent=0 // pred_fallthru
    _

// kernel: unet_forward.13
$region0: #{unet_forward.13}
  #allocation0 [shape = 'u32[]', space=smem, size = 0x4, offset = 0x4, fixed_abs, tag = 'smem constant byte address 0x4 - core index']
  #allocation1 [shape = 'u32[144,128]{1,0:T(1,128)}', space=vmem, size = 0x12000, scoped, tag = 'internal scratch']
  %s0 = inlined_call_operand.vmem [shape: bf16[2,18,256], index: 0, kind: input, shape index: {}]
  %s1 = inlined_call_operand.vmem [shape: bf16[4,18], index: 1, kind: input, shape index: {}]
  %s2 = inlined_call_operand.vmem [shape: f32[4,1], index: 2, kind: input, shape index: {}]
  %s3 = inlined_call_operand.vmem [shape: f32[2,2,256], index: 3, kind: output, shape index: {}]
  %s4 = sld [smem:[#allocation0]]
  $region45: #{unet_forward.13} parent=0
    _
  %s6 = ssub.s32 1, %s4
  %s7 = scalar_select 0, %s6, %s4
  loop: start=0, step=1, limit=4
  $region2: #{unet_forward.13} parent=0 // loop_pre_header
    _
  $region3: #{unet_forward.13} parent=0 // loop_header
    %s9 = sphi 0, %s13
    %p10 = scmp.ge.s32.totalorder %s9, 4
    %s19 = sphi 0, %s21
    %s22 = sphi 0, %s19
    %s23 = sphi 0, %s22
    %s39 = sphi 0, %s23
    %s43 = sphi 0, %s43
    %s45 = sphi 0, %s43
    %s46 = sphi 0, %s45
    %s60 = sphi 0, %s46
    %s64 = sphi 0, %s64
    %s66 = sphi 0, %s64
    %s67 = sphi 0, %s66
    %s81 = sphi 0, %s67
    %s87 = sphi 0, %s89
    %s90 = sphi 0, %s87
    %s91 = sphi 0, %s90
    %s107 = sphi 0, %s91
  $region4: #{unet_forward.13} parent=0 // loop_header_branch
    %12 = sbr.rel (%p10) target = $region8
  $region5: #{unet_forward.13} parent=0 // loop_body
    %s14 = ssub.s32 %s9, 1
    %s15 = ssub.s32 %s9, 2
    %s16 = sadd.s32 %s9, 1
    %s17 = ssub.s32 %s9, %s16
    %p18 = scmp.eq.s32.totalorder %s17, 0
    %s20 = sadd.s32 %s19, 1
    %s21 = scalar_select %p18, %s19, %s20
    %p24 = pneg %p18
    %p25 = scmp.eq.s32.totalorder %s9, 1
    %p26 = por %p24, %p25
    %p27 = scmp.ne.s32.totalorder %s19, %s22
    %p28 = scmp.eq.s32.totalorder %s9, 0
    %p29 = por %p27, %p28
    %p30 = scmp.ne.s32.totalorder %s19, %s22
    %p31 = scmp.eq.s32.totalorder %s14, 1
    %p32 = por %p30, %p31
    %p33 = scmp.ne.s32.totalorder %s22, %s23
    %p34 = scmp.eq.s32.totalorder %s14, 0
    %p35 = por %p33, %p34
    %p36 = scmp.ne.s32.totalorder %s22, %s23
    %p37 = scmp.eq.s32.totalorder %s15, 1
    %p38 = por %p36, %p37
    %p40 = scmp.ne.s32.totalorder %s23, %s39
    %p41 = scmp.eq.s32.totalorder %s15, 0
    %p42 = por %p40, %p41
    %s44 = sadd.s32 %s43, 1
    %p47 = scmp.eq.s32.totalorder %s9, 1
    %p48 = scmp.ne.s32.totalorder %s43, %s45
    %p49 = scmp.eq.s32.totalorder %s9, 0
    %p50 = por %p48, %p49
    %p51 = scmp.ne.s32.totalorder %s43, %s45
    %p52 = scmp.eq.s32.totalorder %s14, 1
    %p53 = por %p51, %p52
    %p54 = scmp.ne.s32.totalorder %s45, %s46
    %p55 = scmp.eq.s32.totalorder %s14, 0
    %p56 = por %p54, %p55
    %p57 = scmp.ne.s32.totalorder %s45, %s46
    %p58 = scmp.eq.s32.totalorder %s15, 1
    %p59 = por %p57, %p58
    %p61 = scmp.ne.s32.totalorder %s46, %s60
    %p62 = scmp.eq.s32.totalorder %s15, 0
    %p63 = por %p61, %p62
    %s65 = sadd.s32 %s64, 1
    %p68 = scmp.eq.s32.totalorder %s9, 1
    %p69 = scmp.ne.s32.totalorder %s64, %s66
    %p70 = scmp.eq.s32.totalorder %s9, 0
    %p71 = por %p69, %p70
    %p72 = scmp.ne.s32.totalorder %s64, %s66
    %p73 = scmp.eq.s32.totalorder %s14, 1
    %p74 = por %p72, %p73
    %p75 = scmp.ne.s32.totalorder %s66, %s67
    %p76 = scmp.eq.s32.totalorder %s14, 0
    %p77 = por %p75, %p76
    %p78 = scmp.ne.s32.totalorder %s66, %s67
    %p79 = scmp.eq.s32.totalorder %s15, 1
    %p80 = por %p78, %p79
    %p82 = scmp.ne.s32.totalorder %s67, %s81
    %p83 = scmp.eq.s32.totalorder %s15, 0
    %p84 = por %p82, %p83
    %s85 = ssub.s32 %s9, %s16
    %p86 = scmp.eq.s32.totalorder %s85, 0
    %s88 = sadd.s32 %s87, 1
    %s89 = scalar_select %p86, %s87, %s88
    %p92 = pneg %p86
    %p93 = scmp.eq.s32.totalorder %s9, 1
    %p94 = por %p92, %p93
    %p95 = scmp.ne.s32.totalorder %s87, %s90
    %p96 = scmp.eq.s32.totalorder %s9, 0
    %p97 = por %p95, %p96
    %p98 = scmp.ne.s32.totalorder %s87, %s90
    %p99 = scmp.eq.s32.totalorder %s14, 1
    %p100 = por %p98, %p99
    %p101 = scmp.ne.s32.totalorder %s90, %s91
    %p102 = scmp.eq.s32.totalorder %s14, 0
    %p103 = por %p101, %p102
    %p104 = scmp.ne.s32.totalorder %s90, %s91
    %p105 = scmp.eq.s32.totalorder %s15, 1
    %p106 = por %p104, %p105
    %p108 = scmp.ne.s32.totalorder %s91, %s107
    %p109 = scmp.eq.s32.totalorder %s15, 0
    %p110 = por %p108, %p109
    %p111 = scmp.le.s32.totalorder 1, %s9
    %p112 = scmp.lt.s32.totalorder %s9, 3
    %p113 = pnand %p111, %p112
    %p114 = pneg %p113
    // Predicated region
    $region9: #{unet_forward.13} parent=5 // pred_check
      _
    $region10: #{unet_forward.13} parent=5 // pred_check_branch
      %116 = sbr.rel (%p113) target = $region12
    $region11: #{unet_forward.13} parent=5 // pred_region
      %s117 = ssub.s32 %s9, 1
      // Predicated region
      $region13: #{unet_forward.13} parent=11 // pred_check
        %p118 = pneg %p56
      $region14: #{unet_forward.13} parent=11 // pred_check_branch
        %120 = sbr.rel (%p118) target = $region16
      $region15: #{unet_forward.13} parent=11 // pred_region
        _
      $region16: #{unet_forward.13} parent=11 // pred_fallthru
        _
      // Predicated region
      $region17: #{unet_forward.13} parent=11 // pred_check
        %p121 = pneg %p77
      $region18: #{unet_forward.13} parent=11 // pred_check_branch
        %123 = sbr.rel (%p121) target = $region20
      $region19: #{unet_forward.13} parent=11 // pred_region
        _
      $region20: #{unet_forward.13} parent=11 // pred_fallthru
        _
    $region12: #{unet_forward.13} parent=5 // pred_fallthru
      _
    %p124 = scmp.lt.s32.totalorder %s9, 2
    // Predicated region
    $region21: #{unet_forward.13} parent=5 // pred_check
      %p125 = pneg %p124
    $region22: #{unet_forward.13} parent=5 // pred_check_branch
      %127 = sbr.rel (%p125) target = $region24
    $region23: #{unet_forward.13} parent=5 // pred_region
      // Predicated region
      $region25: #{unet_forward.13} parent=23 // pred_check
        %p128 = pneg %p29
      $region26: #{unet_forward.13} parent=23 // pred_check_branch
        %130 = sbr.rel (%p128) target = $region28
      $region27: #{unet_forward.13} parent=23 // pred_region
        %p131 = scmp.lt.s32.totalorder %s9, 1
        %s132 = scalar_select %p131, %s9, 1
        %s133 = smul.addr %s132, 6
        %s134 = smul.addr %s133, 4
        %s135 = scalar_lea.vmem %s0, %s134
      $region28: #{unet_forward.13} parent=23 // pred_fallthru
        _
    $region24: #{unet_forward.13} parent=5 // pred_fallthru
      _
    %p136 = scmp.le.s32.totalorder 1, %s9
    %p137 = scmp.lt.s32.totalorder %s9, 3
    %p138 = pnand %p136, %p137
    %p139 = pneg %p138
    // Predicated region
    $region29: #{unet_forward.13} parent=5 // pred_check
      _
    $region30: #{unet_forward.13} parent=5 // pred_check_branch
      %141 = sbr.rel (%p138) target = $region32
    $region31: #{unet_forward.13} parent=5 // pred_region
      %s142 = ssub.s32 %s9, 1
      %p143 = scmp.lt.s32.totalorder %s14, 1
      %s144 = scalar_select %p143, %s14, 1
      %s145 = smul.addr %s144, 6
      %s146 = smul.addr %s145, 4
      %s147 = scalar_lea.vmem %s0, %s146
      %p148 = pneg %p35
      %p149 = pneg %p32
      %p150 = pneg %p56
      %p151 = pneg %p53
      %p152 = pneg %p77
      %p153 = pneg %p74
      %p154 = pneg %p103
      %p155 = pneg %p100
      %p156 = scmp.lt.s32.totalorder %s14, 1
      %s157 = scalar_select %p156, %s14, 1
      %s158 = smul.addr %s157, 2
      %s159 = smul.addr %s158, 2
      %s160 = scalar_lea.vmem %s3, %s159
      %p161 = scmp.lt.s32.totalorder %s14, 1
      %s162 = scalar_select %p161, %s14, 1
      %s163 = smul.addr %s162, 6
      %s164 = smul.addr %s163, 4
      %s165 = scalar_lea.vmem %s0, %s164
      %p166 = scmp.lt.s32.totalorder %s14, 1
      %s167 = scalar_select %p166, %s14, 1
      %s168 = smul.addr %s167, 2
      %s169 = smul.addr %s168, 2
      %s170 = scalar_lea.vmem %s3, %s169
      %v172 = vld [vmem:[%s165] sm:$0xff]
      %v173 = vld [vmem:[%s165 + $0x8] sm:$0xff]
      %v174 = vld [vmem:[%s165 + $0x10] sm:$0x11]
      %v175 = vld [vmem:[%s1] sm:$0x3]
      %v176 = vld [vmem:[%s2] sm:$0xf]
      %178 = vset.pattern.permute.xlu0 0
      %179 = vperm.xlu0 %178, %v176
      %v180 = vpop.permute.xlu0 %179
      %v185 = vunpack.c.l.b16 %v172
      %v186 = vunpack.c.h.b16 %v172
      %v187 = vunpack.c.l.b16 %v173
      %v188 = vunpack.c.h.b16 %v173
      %v189 = vunpack.c.l.b16 %v174
      %v190 = vunpack.c.h.b16 %v174
      %v191 = vpack.c.b16 %v187, %v185
      %v192 = vpack.c.b16 %v188, %v186
      %v193 = vpack.c.b16 %v189, %v189
      %v194 = vpack.c.b16 %v190, %v190
      %vm197 = vcmask 146432
      %v199 = vsel %vm197, %v175, 0
      %vm201 = vcmask 1040384
      %v203 = vsel %vm201, %v193, 0
      %v206 = vsel %vm201, %v194, 0
      %208 = vmatprep.subr.bf16.mxu0 %v192
      %209 = vmatpush1.bf16.msra.mxu0 %v191
      %210 = vmatprep.subr.bf16.mxu0 %v206
      %211 = vmatpush1.bf16.msra.mxu0 %v203
      %212 = vmatprep.subr.bf16.mxu0 0
      %213 = vmatpush1.bf16.msra.mxu0 0
      %214 = vmatprep.subr.bf16.mxu0 0
      %215 = vmatpush1.bf16.msra.mxu0 0
      %216 = vmatprep.subr.bf16.mxu0 0
      %217 = vmatpush1.bf16.msra.mxu0 0
      %218 = vmatprep.subr.bf16.mxu0 0
      %219 = vmatpush1.bf16.msra.mxu0 0
      %220 = vmatprep.subr.bf16.mxu0 0
      %221 = vmatpush1.bf16.msra.mxu0 0
      %222 = vmatprep.subr.bf16.mxu0 0
      %223 = vmatpush1.bf16.msra.mxu0 0
      %224 = vmatprep.subr.bf16.mxu0 0
      %225 = vmatpush1.bf16.msra.mxu0 0
      %226 = vmatprep.subr.bf16.mxu0 0
      %227 = vmatpush1.bf16.msra.mxu0 0
      %228 = vmatprep.subr.bf16.mxu0 0
      %229 = vmatpush1.bf16.msra.mxu0 0
      %230 = vmatprep.subr.bf16.mxu0 0
      %231 = vmatpush1.bf16.msra.mxu0 0
      %232 = vmatprep.subr.bf16.mxu0 0
      %233 = vmatpush1.bf16.msra.mxu0 0
      %234 = vmatprep.subr.bf16.mxu0 0
      %235 = vmatpush1.bf16.msra.mxu0 0
      %236 = vmatprep.subr.bf16.mxu0 0
      %237 = vmatpush1.bf16.msra.mxu0 0
      %238 = vmatprep.subr.bf16.mxu0 0
      %239 = vmatpush1.bf16.msra.mxu0 0
      %240 = vmatprep.mubr.bf16.mxu0 0
      %241 = vmatmul.mubr.bf16.gmra.mrb[0].mxu0 %v199
      %v242 = vpop.f32.mrb[0].mxu0
      %v243 = vadd.f32 %v180, %v242
      %v244 = vpop.f32.mrb[0].mxu0
      %v245 = vadd.f32 %v180, %v244
      %v246 = vpop.f32.mrb[0].mxu0
      %v247 = vpop.f32.mrb[0].mxu0
      %248 = vdwg.mxu0
      %v251 = vrot.slane %v243, 2
      %v252 = vrot.slane %v245, 2
      %v255 = vadd.f32 %v243, %v251
      %v256 = vadd.f32 %v245, %v252
      %v259 = vcombine.low %v255, %v256
      %v261 = vunpack.c.l.s4 1983009808
      %v262 = vunpack.c.0.s8 %v261
      %v263 = vlaneseq
      %v264 = vshrl.u32 %v263, 7
      %v265 = vsub.s32 %v262, %v264
      %v266 = vrot.slane %v259, %v265
      %268 = vst [vmem:[%s170] sm:$0xf] %v266
      %p269 = scmp.lt.s32.totalorder %s14, 1
      %s270 = scalar_select %p269, %s14, 1
      %s271 = smul.addr %s270, 2
      %s272 = smul.addr %s271, 2
      %s273 = scalar_lea.vmem %s3, %s272
      // Predicated region
      $region33: #{unet_forward.13} parent=31 // pred_check
        %p274 = pneg %p100
      $region34: #{unet_forward.13} parent=31 // pred_check_branch
        %276 = sbr.rel (%p274) target = $region36
      $region35: #{unet_forward.13} parent=31 // pred_region
        _
      $region36: #{unet_forward.13} parent=31 // pred_fallthru
        _
    $region32: #{unet_forward.13} parent=5 // pred_fallthru
      _
    %p277 = scmp.le.s32.totalorder 2, %s9
    // Predicated region
    $region37: #{unet_forward.13} parent=5 // pred_check
      %p278 = pneg %p277
    $region38: #{unet_forward.13} parent=5 // pred_check_branch
      %280 = sbr.rel (%p278) target = $region40
    $region39: #{unet_forward.13} parent=5 // pred_region
      %s281 = ssub.s32 %s9, 2
      // Predicated region
      $region41: #{unet_forward.13} parent=39 // pred_check
        %p282 = pneg %p106
      $region42: #{unet_forward.13} parent=39 // pred_check_branch
        %284 = sbr.rel (%p282) target = $region44
      $region43: #{unet_forward.13} parent=39 // pred_region
        %p285 = scmp.lt.s32.totalorder %s15, 1
        %s286 = scalar_select %p285, %s15, 1
        %s287 = smul.addr %s286, 2
        %s288 = smul.addr %s287, 2
        %s289 = scalar_lea.vmem %s3, %s288
      $region44: #{unet_forward.13} parent=39 // pred_fallthru
        _
    $region40: #{unet_forward.13} parent=5 // pred_fallthru
      _
  $region6: #{unet_forward.13} parent=0 // loop_footer
    %s13 = sadd.s32 1, %s9
  $region7: #{unet_forward.13} parent=0 // loop_footer_branch
    %8 = sbr.rel target = $region3
  $region8: #{unet_forward.13} parent=0 // loop_exit
    _

</llo_original>
